<compile_context>
chip_gen: v6e
topology: v6e:2x2x1
jax: 0.10.0
libtpu: 0.0.40
codegen_flags: <defaults>
</compile_context>

<pallas_src>
import functools
import numpy as np
import jax
import jax.numpy as jnp
from jax.experimental import pallas as pl
from jax.experimental.pallas import tpu as pltpu

BN_EPS = 1e-5            # PyTorch BatchNorm2d default
LANE = 128               # TPU lane width
SUB = 16                 # bf16 sublane packing -> row tiles multiples of 16
MAX_TM = 512             # max rows per tile
ACT_DTYPE = jnp.bfloat16  # inter-layer activation storage dtype


def _round_up(x, m):
    return ((x + m - 1) // m) * m


_VMEM_LIMIT = None


def _vmem_limit_bytes():
    global _VMEM_LIMIT
    if _VMEM_LIMIT is None:
        try:
            cap = int(pltpu.get_tpu_info().vmem_capacity_bytes)
        except Exception:
            cap = 64 << 20                       # conservative (v7x physical)
        _VMEM_LIMIT = max(32 << 20, min(cap * 3 // 4, 96 << 20))
    return _VMEM_LIMIT


def _pick_tm(HWo, Kp, C4, y_bytes):
    """Row-tile size from a VMEM byte budget: double-buffered cols+y tiles on
    top of the (constant index-map) weight block; capped by MAX_TM / HWo."""
    budget = min(20 << 20, _vmem_limit_bytes() // 2)
    fixed = 2 * (Kp * C4 * 2 + C4 * 4 * 4)       # weights + bias/stats buffers
    per_row = 2 * (Kp * 2 + C4 * y_bytes)        # cols (bf16) + y, 2 buffers
    tm = (budget - fixed) // per_row if budget > fixed else SUB
    tm = max(SUB, min(MAX_TM, int(tm) // SUB * SUB))
    return min(tm, _round_up(HWo, SUB))


# ----------------------------- Pallas kernels -----------------------------

def _conv_kernel(x_ref, w_ref, b_ref, y_ref, *stats_refs, act, with_stats):
    """Fused im2col-matmul + bias (+tanh); epilogue writes per-tile partial
    BatchNorm sum / sum-of-squares (both grid axes fully parallel)."""
    y = jnp.dot(x_ref[0], w_ref[...], preferred_element_type=jnp.float32)
    y = y + b_ref[...]
    if act == "tanh":
        y = jnp.tanh(y)
    y_ref[0] = y.astype(y_ref.dtype)
    if with_stats:
        # Stats convs are bias-free, so zero-padded rows contribute exactly 0
        # to both sums -> no row masking needed.
        ssum_ref, ssq_ref = stats_refs
        ssum_ref[0] = jnp.sum(y, axis=0, keepdims=True)
        ssq_ref[0] = jnp.sum(y * y, axis=0, keepdims=True)


def _bn_act_kernel(y_ref, s_ref, t_ref, o_ref, *, act):
    v = y_ref[0].astype(jnp.float32) * s_ref[0] + t_ref[0]
    if act == "relu":
        v = jnp.maximum(v, 0.0)
    o_ref[0] = v.astype(o_ref.dtype)


def _bn_res_kernel(y_ref, s_ref, t_ref, r_ref, o_ref):
    v = (y_ref[0].astype(jnp.float32) * s_ref[0] + t_ref[0]
         + r_ref[0].astype(jnp.float32))
    o_ref[0] = v.astype(o_ref.dtype)


# ----------------------------- pallas wrappers ----------------------------

def _conv_matmul(cols, wmat, bvec, *, act, with_stats, out_dtype):
    """cols: (N, HWo, Kp) bf16, Kp multiple of 128; wmat: (Kp, C4) bf16;
    bvec: (1, C4) f32.  Returns y (N, Mp, C4) and reduced BN sums (N, C4)."""
    N, HWo, Kp = cols.shape
    C4 = wmat.shape[1]
    y_bytes = jnp.dtype(out_dtype).itemsize
    tm = _pick_tm(HWo, Kp, C4, y_bytes)
    Mp = _round_up(HWo, tm)
    if Mp != HWo:
        cols = jnp.pad(cols, ((0, 0), (0, Mp - HWo), (0, 0)))
    nrt = Mp // tm

    kernel = functools.partial(_conv_kernel, act=act, with_stats=with_stats)
    y_shape = jax.ShapeDtypeStruct((N, Mp, C4), out_dtype)
    y_spec = pl.BlockSpec((1, tm, C4), lambda n, r: (n, r, 0))
    stat_spec = pl.BlockSpec((1, 1, C4), lambda n, r: (n * nrt + r, 0, 0))

    if with_stats:
        out_shape = (y_shape,
                     jax.ShapeDtypeStruct((N * nrt, 1, C4), jnp.float32),
                     jax.ShapeDtypeStruct((N * nrt, 1, C4), jnp.float32))
        out_specs = (y_spec, stat_spec, stat_spec)
    else:
        out_shape = y_shape
        out_specs = y_spec

    cost = pl.CostEstimate(
        flops=2 * N * Mp * Kp * C4,
        transcendentals=(N * Mp * C4) if act == "tanh" else 0,
        bytes_accessed=int(cols.size * 2 + wmat.size * 2 + N * Mp * C4 * y_bytes))

    res = pl.pallas_call(
        kernel,
        out_shape=out_shape,
        grid=(N, nrt),
        in_specs=[pl.BlockSpec((1, tm, Kp), lambda n, r: (n, r, 0)),
                  pl.BlockSpec((Kp, C4), lambda n, r: (0, 0)),
                  pl.BlockSpec((1, C4), lambda n, r: (0, 0))],
        out_specs=out_specs,
        compiler_params=pltpu.CompilerParams(
            dimension_semantics=("parallel", "parallel"),
            vmem_limit_bytes=_vmem_limit_bytes()),
        cost_estimate=cost,
    )(cols, wmat, bvec)

    if with_stats:
        y, ssum, ssq = res
        ssum = jnp.sum(ssum.reshape(N, nrt, C4), axis=1)
        ssq = jnp.sum(ssq.reshape(N, nrt, C4), axis=1)
        return y, ssum, ssq, tm, Mp
    return res, None, None, tm, Mp


def _bn_affine(y, scale, shift, tm, act="none", residual=None):
    N, Mp, C4 = y.shape
    grid = (N, Mp // tm)
    spec3 = pl.BlockSpec((1, tm, C4), lambda n, r: (n, r, 0))
    spec1 = pl.BlockSpec((1, 1, C4), lambda n, r: (n, 0, 0))
    cp = pltpu.CompilerParams(dimension_semantics=("parallel", "parallel"),
                              vmem_limit_bytes=_vmem_limit_bytes())
    out_shape = jax.ShapeDtypeStruct((N, Mp, C4), ACT_DTYPE)
    if residual is None:
        return pl.pallas_call(
            functools.partial(_bn_act_kernel, act=act),
            out_shape=out_shape, grid=grid,
            in_specs=[spec3, spec1, spec1], out_specs=spec3,
            compiler_params=cp,
        )(y, scale, shift)
    return pl.pallas_call(
        _bn_res_kernel,
        out_shape=out_shape, grid=grid,
        in_specs=[spec3, spec1, spec1, spec3], out_specs=spec3,
        compiler_params=cp,
    )(y, scale, shift, residual)


# ------------------------------ im2col helpers -----------------------------

def _im2col(x, kh, kw, stride, pad_hw, pad_mode):
    """x: (N,H,W,C) bf16 with REAL channel count.  Returns cols (N, HWo, Kp),
    hout, wout; K order is (ki, kj, c) and K is zero-padded to a 128 multiple."""
    if any(p for pair in pad_hw for p in pair):
        mode = "reflect" if pad_mode == "reflect" else "constant"
        x = jnp.pad(x, ((0, 0), pad_hw[0], pad_hw[1], (0, 0)), mode=mode)
    N, Hp, Wp, C = x.shape
    hout = (Hp - kh) // stride + 1
    wout = (Wp - kw) // stride + 1
    # TODO(synk): build patches in-kernel from a halo'd VMEM-resident tile to
    # avoid this kh*kw-expanded HBM intermediate at large resolutions.
    patches = [x[:, ki:ki + stride * hout:stride, kj:kj + stride * wout:stride, :]
               for ki in range(kh) for kj in range(kw)]
    K = kh * kw * C
    cols = jnp.stack(patches, axis=3).reshape(N, hout * wout, K)
    Kp = _round_up(K, LANE)
    if Kp != K:
        cols = jnp.pad(cols, ((0, 0), (0, 0), (0, Kp - K)))
    return cols.astype(jnp.bfloat16), hout, wout


def _pack_conv_weight(w, Kp, C4):
    # w: (cout, cin, kh, kw) torch layout -> (Kp, C4), K ordered (ki, kj, ci)
    cout, cin, kh, kw = w.shape
    wm = jnp.transpose(w, (2, 3, 1, 0)).reshape(kh * kw * cin, cout)
    wm = jnp.pad(wm, ((0, Kp - kh * kw * cin), (0, C4 - cout)))
    return wm.astype(jnp.bfloat16)


def _fit_flat(flat, Mp, C4):
    """Match a residual in (N, Mp_src, C_src) layout to (N, Mp, C4) (rarely
    needed: shapes normally match exactly, so this is usually a no-op)."""
    n, m, c = flat.shape
    if m == Mp and c == C4:
        return flat
    flat = flat[:, :min(m, Mp), :min(c, C4)]
    pm, pc = Mp - flat.shape[1], C4 - flat.shape[2]
    if pm or pc:
        flat = jnp.pad(flat, ((0, 0), (0, pm), (0, pc)))
    return flat


# ------------------------------- layer glue --------------------------------

def conv_bn_layer(x, w, gamma, beta, stride, pad, pad_mode, act,
                  residual_flat=None):
    """Conv2d(no bias) + BatchNorm(batch stats per sample) + act (+residual).
    x: (N,H,W,cin) bf16.  Returns (nhwc (N,ho,wo,cout) bf16, flat (N,Mp,cpo))."""
    N = x.shape[0]
    cout, cin, kh, kw = w.shape
    cpo = _round_up(cout, LANE)
    cols, hout, wout = _im2col(x[..., :cin], kh, kw, stride,
                               ((pad, pad), (pad, pad)), pad_mode)
    HWo = hout * wout
    wmat = _pack_conv_weight(w, cols.shape[-1], cpo)
    bvec = jnp.zeros((1, cpo), jnp.float32)

    y, ssum, ssq, tm, Mp = _conv_matmul(cols, wmat, bvec, act="none",
                                        with_stats=True, out_dtype=ACT_DTYPE)
    # Per-batch-element BatchNorm stats == the reference's batch-1 BN calls.
    mean = ssum / float(HWo)
    var = jnp.maximum(ssq / float(HWo) - mean * mean, 0.0)
    g = jnp.pad(gamma, (0, cpo - cout))
    b = jnp.pad(beta, (0, cpo - cout))
    inv = jax.lax.rsqrt(var + BN_EPS)
    scale = (g * inv).reshape(N, 1, cpo)
    shift = (b - mean * g * inv).reshape(N, 1, cpo)

    res = None
    if residual_flat is not None:
        res = _fit_flat(residual_flat, Mp, cpo)
    out_flat = _bn_affine(y, scale, shift, tm, act=act, residual=res)
    out = out_flat[:, :HWo, :cout].reshape(N, hout, wout, cout)
    return out, out_flat


def conv_tanh_layer(x, w, bias):
    """Final decoder conv: ReflectionPad(3) + Conv(7x7) + Tanh fused in-kernel."""
    N = x.shape[0]
    cout, cin, kh, kw = w.shape
    cpo = _round_up(cout, LANE)
    cols, hout, wout = _im2col(x[..., :cin], kh, kw, 1, ((3, 3), (3, 3)), "reflect")
    HWo = hout * wout
    wmat = _pack_conv_weight(w, cols.shape[-1], cpo)
    bvec = jnp.pad(bias.astype(jnp.float32), (0, cpo - cout)).reshape(1, cpo)
    y, _, _, tm, Mp = _conv_matmul(cols, wmat, bvec, act="tanh",
                                   with_stats=False, out_dtype=jnp.float32)
    return y[:, :HWo, :cout].reshape(N, hout, wout, cout)


# ConvTranspose2d(k=3,s=2,p=1,op=1) 4-phase tap table:
# (output parity (py,px)) -> [((input offset di,dj), (kernel tap ky,kx)), ...]
_PHASE_TAPS = {
    (0, 0): [((0, 0), (1, 1))],
    (0, 1): [((0, 0), (1, 2)), ((0, 1), (1, 0))],
    (1, 0): [((0, 0), (2, 1)), ((1, 0), (0, 1))],
    (1, 1): [((0, 0), (2, 2)), ((0, 1), (2, 0)), ((1, 0), (0, 2)), ((1, 1), (0, 0))],
}


def conv_transpose_bn_relu(x, w, gamma, beta):
    """ConvTranspose2d(3,s=2,p=1,op=1,no bias) + BN + ReLU via the 4-phase
    sub-convolution: a single (HW x 4cin)x(4cin x 4cout) matmul on the
    un-dilated input, phases interleaved afterwards in XLA."""
    N, H, W, cin = x.shape
    cout = w.shape[1]                       # torch layout (cin, cout, kh, kw)
    cpo = _round_up(cout, LANE)
    C4 = 4 * cpo
    K = 4 * cin
    Kp = _round_up(K, LANE)

    xp = jnp.pad(x, ((0, 0), (0, 1), (0, 1), (0, 0)))          # bottom/right halo
    patches = [xp[:, di:di + H, dj:dj + W, :] for di in range(2) for dj in range(2)]
    cols = jnp.stack(patches, axis=3).reshape(N, H * W, K)
    if Kp != K:
        cols = jnp.pad(cols, ((0, 0), (0, 0), (0, Kp - K)))
    cols = cols.astype(jnp.bfloat16)

    wbig = jnp.zeros((Kp, C4), jnp.float32)
    for pi, phase in enumerate(((0, 0), (0, 1), (1, 0), (1, 1))):
        for (di, dj), (ky, kx) in _PHASE_TAPS[phase]:
            t = di * 2 + dj
            wbig = wbig.at[t * cin:(t + 1) * cin,
                           pi * cpo:pi * cpo + cout].set(w[:, :, ky, kx])
    wbig = wbig.astype(jnp.bfloat16)
    bvec = jnp.zeros((1, C4), jnp.float32)

    y, ssum, ssq, tm, Mp = _conv_matmul(cols, wbig, bvec, act="none",
                                        with_stats=True, out_dtype=ACT_DTYPE)
    HWo = H * W
    cnt = 4.0 * HWo                                   # (2H)*(2W) output pixels
    ssum = jnp.sum(ssum.reshape(N, 4, cpo), axis=1)
    ssq = jnp.sum(ssq.reshape(N, 4, cpo), axis=1)
    mean = ssum / cnt
    var = jnp.maximum(ssq / cnt - mean * mean, 0.0)
    g = jnp.pad(gamma, (0, cpo - cout))
    b = jnp.pad(beta, (0, cpo - cout))
    inv = jax.lax.rsqrt(var + BN_EPS)
    scale = jnp.tile((g * inv).reshape(N, 1, 1, cpo), (1, 1, 4, 1)).reshape(N, 1, C4)
    shift = jnp.tile((b - mean * g * inv).reshape(N, 1, 1, cpo),
                     (1, 1, 4, 1)).reshape(N, 1, C4)

    out_flat = _bn_affine(y, scale, shift, tm, act="relu")
    o = out_flat[:, :HWo].reshape(N, H, W, 2, 2, cpo)[..., :cout]
    o = jnp.transpose(o, (0, 1, 3, 2, 4, 5)).reshape(N, 2 * H, 2 * W, cout)
    return o


# --------------------------- encoder / decoder -----------------------------

def run_encoder(p, x, n_blocks):
    x = x.astype(ACT_DTYPE)
    x, xf = conv_bn_layer(x, p["c0_w"], p["c0_g"], p["c0_b"], 1, 3, "reflect", "relu")
    for i in range(2):                                   # stride-2 downsamples
        x, xf = conv_bn_layer(x, p[f"d{i}_w"], p[f"d{i}_g"], p[f"d{i}_b"],
                              2, 1, "zero", "relu")
    for i in range(n_blocks):                            # ResnetBlocks
        y, _ = conv_bn_layer(x, p[f"r{i}_w1"], p[f"r{i}_g1"], p[f"r{i}_b1"],
                             1, 1, "reflect", "relu")
        x, xf = conv_bn_layer(y, p[f"r{i}_w2"], p[f"r{i}_g2"], p[f"r{i}_b2"],
                              1, 1, "reflect", "none", residual_flat=xf)
    return x


def run_decoder(p, x):
    x = x.astype(ACT_DTYPE)
    for i in range(2):                                   # ConvTranspose upsamples
        x = conv_transpose_bn_relu(x, p[f"u{i}_w"], p[f"u{i}_g"], p[f"u{i}_b"])
    return conv_tanh_layer(x, p["f_w"], p["f_b"])


_run_encoder = jax.jit(run_encoder, static_argnums=(2,))
_run_decoder = jax.jit(run_decoder)


# -------------------------------- parameters -------------------------------

def init_encoder_params(key, input_nc, ngf, n_blocks, scale=0.05):
    p = {}
    keys = jax.random.split(key, 3 + 2 * n_blocks)
    p["c0_w"] = jax.random.normal(keys[0], (ngf, input_nc, 7, 7), jnp.float32) * scale
    p["c0_g"] = jnp.ones((ngf,), jnp.float32)
    p["c0_b"] = jnp.zeros((ngf,), jnp.float32)
    ch = ngf
    for i in range(2):
        p[f"d{i}_w"] = jax.random.normal(keys[1 + i], (2 * ch, ch, 3, 3), jnp.float32) * scale
        p[f"d{i}_g"] = jnp.ones((2 * ch,), jnp.float32)
        p[f"d{i}_b"] = jnp.zeros((2 * ch,), jnp.float32)
        ch *= 2
    for i in range(n_blocks):
        p[f"r{i}_w1"] = jax.random.normal(keys[3 + 2 * i], (ch, ch, 3, 3), jnp.float32) * scale
        p[f"r{i}_g1"] = jnp.ones((ch,), jnp.float32)
        p[f"r{i}_b1"] = jnp.zeros((ch,), jnp.float32)
        p[f"r{i}_w2"] = jax.random.normal(keys[4 + 2 * i], (ch, ch, 3, 3), jnp.float32) * scale
        p[f"r{i}_g2"] = jnp.ones((ch,), jnp.float32)
        p[f"r{i}_b2"] = jnp.zeros((ch,), jnp.float32)
    return p


def init_decoder_params(key, output_nc, G, scale=0.05):
    # mirrors get_decoder(output_nc, n_downsampling=2, ngf=G, ...)
    p = {}
    keys = jax.random.split(key, 4)
    ch = 4 * G
    for i in range(2):
        # PyTorch ConvTranspose2d weight layout: (cin, cout, kh, kw)
        p[f"u{i}_w"] = jax.random.normal(keys[i], (ch, ch // 2, 3, 3), jnp.float32) * scale
        p[f"u{i}_g"] = jnp.ones((ch // 2,), jnp.float32)
        p[f"u{i}_b"] = jnp.zeros((ch // 2,), jnp.float32)
        ch //= 2
    p["f_w"] = jax.random.normal(keys[2], (output_nc, G, 7, 7), jnp.float32) * scale
    p["f_b"] = jax.random.normal(keys[3], (output_nc,), jnp.float32) * scale
    return p


# --------------------------------- forward ---------------------------------

def resnet_set_generator_forward(params, inp, input_nc, n_blocks):
    # Like the PyTorch reference, only batch size 1 is supported (it mixes
    # batch-1 enc_segs_sum with enc_img along channels).
    inp = jnp.asarray(inp, jnp.float32)
    img = inp[:, :input_nc]
    segs = inp[:, input_nc:]

    # Data-dependent segment selection -> one host sync, issued before any
    # heavy device work is enqueued (same control flow as the reference).
    mean = np.array(jax.device_get(jnp.mean(segs + 1.0, axis=(0, 2, 3))))
    if mean.sum() == 0:
        mean[0] = 1.0
    active = [i for i in range(segs.shape[1]) if mean[i] > 0]

    out_nc = params["dec_img"]["f_w"].shape[0]

    img_nhwc = jnp.transpose(img, (0, 2, 3, 1))
    seg_batch = jnp.stack([segs[0, i] for i in active], axis=0)[..., None]

    enc_img = _run_encoder(params["enc_img"], img_nhwc, n_blocks)     # (1,h,w,4ngf)
    enc_segs = _run_encoder(params["enc_seg"], seg_batch, n_blocks)   # (n_act,h,w,4ngf)
    enc_sum = jnp.sum(enc_segs.astype(jnp.float32), axis=0,
                      keepdims=True).astype(ACT_DTYPE)

    feat_img = jnp.concatenate([enc_img, enc_sum], axis=-1)
    dec_img = _run_decoder(params["dec_img"], feat_img)               # (1,H,W,out_nc)

    n_act = len(active)
    enc_img_b = jnp.broadcast_to(enc_img, (n_act,) + enc_img.shape[1:])
    enc_sum_b = jnp.broadcast_to(enc_sum, (n_act,) + enc_sum.shape[1:])
    feat_seg = jnp.concatenate([enc_segs, enc_img_b, enc_sum_b], axis=-1)
    dec_segs = _run_decoder(params["dec_seg"], feat_seg)              # (n_act,H,W,1)

    def to_nchw(x):
        return jnp.transpose(x, (0, 3, 1, 2)).astype(jnp.float32)

    out = [to_nchw(dec_img)]
    idx = 0
    for i in range(segs.shape[1]):
        if mean[i] > 0:
            out.append(to_nchw(dec_segs[idx:idx + 1]))
            idx += 1
        else:
            out.append(segs[:, i:i + 1])
    return jnp.concatenate(out, axis=1)


if __name__ == "__main__":
    input_nc, output_nc, ngf, n_blocks = 3, 3, 8, 2
    n_seg, B, H, W = 3, 1, 16, 16

    key = jax.random.PRNGKey(0)
    k_inp, k_ei, k_es, k_di, k_ds = jax.random.split(key, 5)
    params = {
        "enc_img": init_encoder_params(k_ei, input_nc, ngf, n_blocks),
        "enc_seg": init_encoder_params(k_es, 1, ngf, n_blocks),
        "dec_img": init_decoder_params(k_di, output_nc, 2 * ngf),
        "dec_seg": init_decoder_params(k_ds, 1, 3 * ngf),
    }

    inp = jax.random.normal(k_inp, (B, input_nc + n_seg, H, W), jnp.float32)
    # make the last seg channel "empty" ((seg+1).mean()==0) to exercise the
    # skip path; the other two segments are batched through one encoder call.
    inp = inp.at[:, input_nc + 2].set(-1.0)

    out = resnet_set_generator_forward(params, inp, input_nc, n_blocks)
    out = jax.block_until_ready(out)
    assert out.shape == (B, output_nc + n_seg, H, W), out.shape
    assert bool(jnp.all(jnp.isfinite(out)))
    print("KERNEL_OK")
</pallas_src>

<mosaic_0001>
module attributes {stable_mosaic.version = 11 : i64} {
  func.func @_conv_kernel(%arg0: i32, %arg1: i32, %arg2: memref<1x256x256xbf16, #tpu.memory_space<vmem>>, %arg3: memref<256x128xbf16, #tpu.memory_space<vmem>>, %arg4: memref<1x128xf32, #tpu.memory_space<vmem>>, %arg5: memref<1x256x128xbf16, #tpu.memory_space<vmem>>, %arg6: memref<1x1x128xf32, #tpu.memory_space<vmem>>, %arg7: memref<1x1x128xf32, #tpu.memory_space<vmem>>) attributes {dimension_semantics = [#tpu.dimension_semantics<parallel>, #tpu.dimension_semantics<parallel>], iteration_bounds = array<i64: 1, 1>, scalar_prefetch = 0 : i64, scratch_operands = 0 : i64, tpu.core_type = #tpu.core_type<tc>, window_params = [{transform_indices = @transform_0, window_bounds = array<i64: 1, 256, 256>}, {pipeline_mode = #tpu.pipeline_mode<synchronous>, transform_indices = @transform_1, window_bounds = array<i64: 256, 128>}, {pipeline_mode = #tpu.pipeline_mode<synchronous>, transform_indices = @transform_2, window_bounds = array<i64: 1, 128>}, {transform_indices = @transform_3, window_bounds = array<i64: 1, 256, 128>}, {transform_indices = @transform_4, window_bounds = array<i64: 1, 1, 128>}, {transform_indices = @transform_5, window_bounds = array<i64: 1, 1, 128>}]} {
    %c0 = arith.constant 0 : index
    %c0_0 = arith.constant 0 : index
    %c0_1 = arith.constant 0 : index
    %0 = vector.load %arg2[%c0, %c0_0, %c0_1] : memref<1x256x256xbf16, #tpu.memory_space<vmem>>, vector<1x256x256xbf16>
    %1 = vector.shape_cast %0 : vector<1x256x256xbf16> to vector<256x256xbf16>
    %c0_2 = arith.constant 0 : index
    %c0_3 = arith.constant 0 : index
    %2 = vector.load %arg3[%c0_2, %c0_3] : memref<256x128xbf16, #tpu.memory_space<vmem>>, vector<256x128xbf16>
    %cst = arith.constant dense<0.000000e+00> : vector<256x128xf32>
    %3 = tpu.matmul %1, %2, %cst {dimension_numbers = #tpu.dot_dimension_numbers<[1], [0], [0], [1], [0, 0, 1, 1], [], []>} : vector<256x256xbf16>, vector<256x128xbf16>, vector<256x128xf32> -> vector<256x128xf32>
    %c0_4 = arith.constant 0 : index
    %c0_5 = arith.constant 0 : index
    %4 = vector.load %arg4[%c0_4, %c0_5] : memref<1x128xf32, #tpu.memory_space<vmem>>, vector<1x128xf32>
    %5 = vector.broadcast %4 : vector<1x128xf32> to vector<256x128xf32>
    %6 = arith.addf %3, %5 : vector<256x128xf32>
    %7 = arith.truncf %6 : vector<256x128xf32> to vector<256x128xbf16>
    %c0_6 = arith.constant 0 : index
    %c0_7 = arith.constant 0 : index
    %c0_8 = arith.constant 0 : index
    %8 = vector.load %arg5[%c0_6, %c0_7, %c0_8] : memref<1x256x128xbf16, #tpu.memory_space<vmem>>, vector<1x256x128xbf16>
    %9 = vector.shape_cast %8 : vector<1x256x128xbf16> to vector<256x128xbf16>
    %10 = vector.shape_cast %7 : vector<256x128xbf16> to vector<1x256x128xbf16>
    tpu.vector_store %arg5[%c0_6, %c0_7, %c0_8], %10 {strides = array<i32>} : memref<1x256x128xbf16, #tpu.memory_space<vmem>>, vector<1x256x128xbf16>,
    %cst_9 = arith.constant dense<0.000000e+00> : vector<128xf32>
    %11 = vector.multi_reduction <add>, %6, %cst_9 [0] : vector<256x128xf32> to vector<128xf32>
    %12 = vector.shape_cast %11 : vector<128xf32> to vector<1x128xf32>
    %c0_10 = arith.constant 0 : index
    %c0_11 = arith.constant 0 : index
    %c0_12 = arith.constant 0 : index
    %13 = vector.load %arg6[%c0_10, %c0_11, %c0_12] : memref<1x1x128xf32, #tpu.memory_space<vmem>>, vector<1x1x128xf32>
    %14 = vector.shape_cast %13 : vector<1x1x128xf32> to vector<1x128xf32>
    %15 = vector.shape_cast %12 : vector<1x128xf32> to vector<1x1x128xf32>
    tpu.vector_store %arg6[%c0_10, %c0_11, %c0_12], %15 {strides = array<i32>} : memref<1x1x128xf32, #tpu.memory_space<vmem>>, vector<1x1x128xf32>,
    %16 = arith.mulf %6, %6 : vector<256x128xf32>
    %cst_13 = arith.constant dense<0.000000e+00> : vector<128xf32>
    %17 = vector.multi_reduction <add>, %16, %cst_13 [0] : vector<256x128xf32> to vector<128xf32>
    %18 = vector.shape_cast %17 : vector<128xf32> to vector<1x128xf32>
    %c0_14 = arith.constant 0 : index
    %c0_15 = arith.constant 0 : index
    %c0_16 = arith.constant 0 : index
    %19 = vector.load %arg7[%c0_14, %c0_15, %c0_16] : memref<1x1x128xf32, #tpu.memory_space<vmem>>, vector<1x1x128xf32>
    %20 = vector.shape_cast %19 : vector<1x1x128xf32> to vector<1x128xf32>
    %21 = vector.shape_cast %18 : vector<1x128xf32> to vector<1x1x128xf32>
    tpu.vector_store %arg7[%c0_14, %c0_15, %c0_16], %21 {strides = array<i32>} : memref<1x1x128xf32, #tpu.memory_space<vmem>>, vector<1x1x128xf32>,
    return
  }
  func.func @transform_0(%arg0: i32, %arg1: i32) -> (i32, i32, i32) {
    %c0_i32 = arith.constant 0 : i32
    %c0_i32_0 = arith.constant 0 : i32
    return %arg0, %arg1, %c0_i32 : i32, i32, i32
  }
  func.func @transform_1(%arg0: i32, %arg1: i32) -> (i32, i32) {
    %c0_i32 = arith.constant 0 : i32
    %c0_i32_0 = arith.constant 0 : i32
    %c0_i32_1 = arith.constant 0 : i32
    return %c0_i32, %c0_i32_0 : i32, i32
  }
  func.func @transform_2(%arg0: i32, %arg1: i32) -> (i32, i32) {
    %c0_i32 = arith.constant 0 : i32
    %c0_i32_0 = arith.constant 0 : i32
    %c0_i32_1 = arith.constant 0 : i32
    return %c0_i32, %c0_i32_0 : i32, i32
  }
  func.func @transform_3(%arg0: i32, %arg1: i32) -> (i32, i32, i32) {
    %c0_i32 = arith.constant 0 : i32
    %c0_i32_0 = arith.constant 0 : i32
    return %arg0, %arg1, %c0_i32 : i32, i32, i32
  }
  func.func @transform_4(%arg0: i32, %arg1: i32) -> (i32, i32, i32) {
    %c1_i32 = arith.constant 1 : i32
    %0 = arith.muli %arg0, %c1_i32 : i32
    %1 = arith.addi %0, %arg1 : i32
    %c0_i32 = arith.constant 0 : i32
    %c0_i32_0 = arith.constant 0 : i32
    %c0_i32_1 = arith.constant 0 : i32
    return %1, %c0_i32, %c0_i32_0 : i32, i32, i32
  }
  func.func @transform_5(%arg0: i32, %arg1: i32) -> (i32, i32, i32) {
    %c1_i32 = arith.constant 1 : i32
    %0 = arith.muli %arg0, %c1_i32 : i32
    %1 = arith.addi %0, %arg1 : i32
    %c0_i32 = arith.constant 0 : i32
    %c0_i32_0 = arith.constant 0 : i32
    %c0_i32_1 = arith.constant 0 : i32
    return %1, %c0_i32, %c0_i32_0 : i32, i32, i32
  }
}

module attributes {stable_mosaic.version = 11 : i64} {
  func.func @_bn_act_kernel(%arg0: i32, %arg1: i32, %arg2: memref<1x256x128xbf16, #tpu.memory_space<vmem>>, %arg3: memref<1x1x128xf32, #tpu.memory_space<vmem>>, %arg4: memref<1x1x128xf32, #tpu.memory_space<vmem>>, %arg5: memref<1x256x128xbf16, #tpu.memory_space<vmem>>) attributes {dimension_semantics = [#tpu.dimension_semantics<parallel>, #tpu.dimension_semantics<parallel>], iteration_bounds = array<i64: 1, 1>, scalar_prefetch = 0 : i64, scratch_operands = 0 : i64, tpu.core_type = #tpu.core_type<tc>, window_params = [{transform_indices = @transform_0, window_bounds = array<i64: 1, 256, 128>}, {transform_indices = @transform_1, window_bounds = array<i64: 1, 1, 128>}, {transform_indices = @transform_2, window_bounds = array<i64: 1, 1, 128>}, {transform_indices = @transform_3, window_bounds = array<i64: 1, 256, 128>}]} {
    %c0 = arith.constant 0 : index
    %c0_0 = arith.constant 0 : index
    %c0_1 = arith.constant 0 : index
    %0 = vector.load %arg2[%c0, %c0_0, %c0_1] : memref<1x256x128xbf16, #tpu.memory_space<vmem>>, vector<1x256x128xbf16>
    %1 = vector.shape_cast %0 : vector<1x256x128xbf16> to vector<256x128xbf16>
    %2 = arith.extf %1 : vector<256x128xbf16> to vector<256x128xf32>
    %c0_2 = arith.constant 0 : index
    %c0_3 = arith.constant 0 : index
    %c0_4 = arith.constant 0 : index
    %3 = vector.load %arg3[%c0_2, %c0_3, %c0_4] : memref<1x1x128xf32, #tpu.memory_space<vmem>>, vector<1x1x128xf32>
    %4 = vector.shape_cast %3 : vector<1x1x128xf32> to vector<1x128xf32>
    %5 = vector.broadcast %4 : vector<1x128xf32> to vector<256x128xf32>
    %6 = arith.mulf %2, %5 : vector<256x128xf32>
    %c0_5 = arith.constant 0 : index
    %c0_6 = arith.constant 0 : index
    %c0_7 = arith.constant 0 : index
    %7 = vector.load %arg4[%c0_5, %c0_6, %c0_7] : memref<1x1x128xf32, #tpu.memory_space<vmem>>, vector<1x1x128xf32>
    %8 = vector.shape_cast %7 : vector<1x1x128xf32> to vector<1x128xf32>
    %9 = vector.broadcast %8 : vector<1x128xf32> to vector<256x128xf32>
    %10 = arith.addf %6, %9 : vector<256x128xf32>
    %cst = arith.constant 0.000000e+00 : f32
    %11 = vector.broadcast %cst : f32 to vector<256x128xf32>
    %12 = arith.maximumf %10, %11 : vector<256x128xf32>
    %13 = arith.truncf %12 : vector<256x128xf32> to vector<256x128xbf16>
    %c0_8 = arith.constant 0 : index
    %c0_9 = arith.constant 0 : index
    %c0_10 = arith.constant 0 : index
    %14 = vector.load %arg5[%c0_8, %c0_9, %c0_10] : memref<1x256x128xbf16, #tpu.memory_space<vmem>>, vector<1x256x128xbf16>
    %15 = vector.shape_cast %14 : vector<1x256x128xbf16> to vector<256x128xbf16>
    %16 = vector.shape_cast %13 : vector<256x128xbf16> to vector<1x256x128xbf16>
    tpu.vector_store %arg5[%c0_8, %c0_9, %c0_10], %16 {strides = array<i32>} : memref<1x256x128xbf16, #tpu.memory_space<vmem>>, vector<1x256x128xbf16>,
    return
  }
  func.func @transform_0(%arg0: i32, %arg1: i32) -> (i32, i32, i32) {
    %c0_i32 = arith.constant 0 : i32
    %c0_i32_0 = arith.constant 0 : i32
    return %arg0, %arg1, %c0_i32 : i32, i32, i32
  }
  func.func @transform_1(%arg0: i32, %arg1: i32) -> (i32, i32, i32) {
    %c0_i32 = arith.constant 0 : i32
    %c0_i32_0 = arith.constant 0 : i32
    %c0_i32_1 = arith.constant 0 : i32
    return %arg0, %c0_i32, %c0_i32_0 : i32, i32, i32
  }
  func.func @transform_2(%arg0: i32, %arg1: i32) -> (i32, i32, i32) {
    %c0_i32 = arith.constant 0 : i32
    %c0_i32_0 = arith.constant 0 : i32
    %c0_i32_1 = arith.constant 0 : i32
    return %arg0, %c0_i32, %c0_i32_0 : i32, i32, i32
  }
  func.func @transform_3(%arg0: i32, %arg1: i32) -> (i32, i32, i32) {
    %c0_i32 = arith.constant 0 : i32
    %c0_i32_0 = arith.constant 0 : i32
    return %arg0, %arg1, %c0_i32 : i32, i32, i32
  }
}

module attributes {stable_mosaic.version = 11 : i64} {
  func.func @_conv_kernel(%arg0: i32, %arg1: i32, %arg2: memref<1x64x128xbf16, #tpu.memory_space<vmem>>, %arg3: memref<128x128xbf16, #tpu.memory_space<vmem>>, %arg4: memref<1x128xf32, #tpu.memory_space<vmem>>, %arg5: memref<1x64x128xbf16, #tpu.memory_space<vmem>>, %arg6: memref<1x1x128xf32, #tpu.memory_space<vmem>>, %arg7: memref<1x1x128xf32, #tpu.memory_space<vmem>>) attributes {dimension_semantics = [#tpu.dimension_semantics<parallel>, #tpu.dimension_semantics<parallel>], iteration_bounds = array<i64: 1, 1>, scalar_prefetch = 0 : i64, scratch_operands = 0 : i64, tpu.core_type = #tpu.core_type<tc>, window_params = [{transform_indices = @transform_0, window_bounds = array<i64: 1, 64, 128>}, {pipeline_mode = #tpu.pipeline_mode<synchronous>, transform_indices = @transform_1, window_bounds = array<i64: 128, 128>}, {pipeline_mode = #tpu.pipeline_mode<synchronous>, transform_indices = @transform_2, window_bounds = array<i64: 1, 128>}, {transform_indices = @transform_3, window_bounds = array<i64: 1, 64, 128>}, {transform_indices = @transform_4, window_bounds = array<i64: 1, 1, 128>}, {transform_indices = @transform_5, window_bounds = array<i64: 1, 1, 128>}]} {
    %c0 = arith.constant 0 : index
    %c0_0 = arith.constant 0 : index
    %c0_1 = arith.constant 0 : index
    %0 = vector.load %arg2[%c0, %c0_0, %c0_1] : memref<1x64x128xbf16, #tpu.memory_space<vmem>>, vector<1x64x128xbf16>
    %1 = vector.shape_cast %0 : vector<1x64x128xbf16> to vector<64x128xbf16>
    %c0_2 = arith.constant 0 : index
    %c0_3 = arith.constant 0 : index
    %2 = vector.load %arg3[%c0_2, %c0_3] : memref<128x128xbf16, #tpu.memory_space<vmem>>, vector<128x128xbf16>
    %cst = arith.constant dense<0.000000e+00> : vector<64x128xf32>
    %3 = tpu.matmul %1, %2, %cst {dimension_numbers = #tpu.dot_dimension_numbers<[1], [0], [0], [1], [0, 0, 1, 1], [], []>} : vector<64x128xbf16>, vector<128x128xbf16>, vector<64x128xf32> -> vector<64x128xf32>
    %c0_4 = arith.constant 0 : index
    %c0_5 = arith.constant 0 : index
    %4 = vector.load %arg4[%c0_4, %c0_5] : memref<1x128xf32, #tpu.memory_space<vmem>>, vector<1x128xf32>
    %5 = vector.broadcast %4 : vector<1x128xf32> to vector<64x128xf32>
    %6 = arith.addf %3, %5 : vector<64x128xf32>
    %7 = arith.truncf %6 : vector<64x128xf32> to vector<64x128xbf16>
    %c0_6 = arith.constant 0 : index
    %c0_7 = arith.constant 0 : index
    %c0_8 = arith.constant 0 : index
    %8 = vector.load %arg5[%c0_6, %c0_7, %c0_8] : memref<1x64x128xbf16, #tpu.memory_space<vmem>>, vector<1x64x128xbf16>
    %9 = vector.shape_cast %8 : vector<1x64x128xbf16> to vector<64x128xbf16>
    %10 = vector.shape_cast %7 : vector<64x128xbf16> to vector<1x64x128xbf16>
    tpu.vector_store %arg5[%c0_6, %c0_7, %c0_8], %10 {strides = array<i32>} : memref<1x64x128xbf16, #tpu.memory_space<vmem>>, vector<1x64x128xbf16>,
    %cst_9 = arith.constant dense<0.000000e+00> : vector<128xf32>
    %11 = vector.multi_reduction <add>, %6, %cst_9 [0] : vector<64x128xf32> to vector<128xf32>
    %12 = vector.shape_cast %11 : vector<128xf32> to vector<1x128xf32>
    %c0_10 = arith.constant 0 : index
    %c0_11 = arith.constant 0 : index
    %c0_12 = arith.constant 0 : index
    %13 = vector.load %arg6[%c0_10, %c0_11, %c0_12] : memref<1x1x128xf32, #tpu.memory_space<vmem>>, vector<1x1x128xf32>
    %14 = vector.shape_cast %13 : vector<1x1x128xf32> to vector<1x128xf32>
    %15 = vector.shape_cast %12 : vector<1x128xf32> to vector<1x1x128xf32>
    tpu.vector_store %arg6[%c0_10, %c0_11, %c0_12], %15 {strides = array<i32>} : memref<1x1x128xf32, #tpu.memory_space<vmem>>, vector<1x1x128xf32>,
    %16 = arith.mulf %6, %6 : vector<64x128xf32>
    %cst_13 = arith.constant dense<0.000000e+00> : vector<128xf32>
    %17 = vector.multi_reduction <add>, %16, %cst_13 [0] : vector<64x128xf32> to vector<128xf32>
    %18 = vector.shape_cast %17 : vector<128xf32> to vector<1x128xf32>
    %c0_14 = arith.constant 0 : index
    %c0_15 = arith.constant 0 : index
    %c0_16 = arith.constant 0 : index
    %19 = vector.load %arg7[%c0_14, %c0_15, %c0_16] : memref<1x1x128xf32, #tpu.memory_space<vmem>>, vector<1x1x128xf32>
    %20 = vector.shape_cast %19 : vector<1x1x128xf32> to vector<1x128xf32>
    %21 = vector.shape_cast %18 : vector<1x128xf32> to vector<1x1x128xf32>
    tpu.vector_store %arg7[%c0_14, %c0_15, %c0_16], %21 {strides = array<i32>} : memref<1x1x128xf32, #tpu.memory_space<vmem>>, vector<1x1x128xf32>,
    return
  }
  func.func @transform_0(%arg0: i32, %arg1: i32) -> (i32, i32, i32) {
    %c0_i32 = arith.constant 0 : i32
    %c0_i32_0 = arith.constant 0 : i32
    return %arg0, %arg1, %c0_i32 : i32, i32, i32
  }
  func.func @transform_1(%arg0: i32, %arg1: i32) -> (i32, i32) {
    %c0_i32 = arith.constant 0 : i32
    %c0_i32_0 = arith.constant 0 : i32
    %c0_i32_1 = arith.constant 0 : i32
    return %c0_i32, %c0_i32_0 : i32, i32
  }
  func.func @transform_2(%arg0: i32, %arg1: i32) -> (i32, i32) {
    %c0_i32 = arith.constant 0 : i32
    %c0_i32_0 = arith.constant 0 : i32
    %c0_i32_1 = arith.constant 0 : i32
    return %c0_i32, %c0_i32_0 : i32, i32
  }
  func.func @transform_3(%arg0: i32, %arg1: i32) -> (i32, i32, i32) {
    %c0_i32 = arith.constant 0 : i32
    %c0_i32_0 = arith.constant 0 : i32
    return %arg0, %arg1, %c0_i32 : i32, i32, i32
  }
  func.func @transform_4(%arg0: i32, %arg1: i32) -> (i32, i32, i32) {
    %c1_i32 = arith.constant 1 : i32
    %0 = arith.muli %arg0, %c1_i32 : i32
    %1 = arith.addi %0, %arg1 : i32
    %c0_i32 = arith.constant 0 : i32
    %c0_i32_0 = arith.constant 0 : i32
    %c0_i32_1 = arith.constant 0 : i32
    return %1, %c0_i32, %c0_i32_0 : i32, i32, i32
  }
  func.func @transform_5(%arg0: i32, %arg1: i32) -> (i32, i32, i32) {
    %c1_i32 = arith.constant 1 : i32
    %0 = arith.muli %arg0, %c1_i32 : i32
    %1 = arith.addi %0, %arg1 : i32
    %c0_i32 = arith.constant 0 : i32
    %c0_i32_0 = arith.constant 0 : i32
    %c0_i32_1 = arith.constant 0 : i32
    return %1, %c0_i32, %c0_i32_0 : i32, i32, i32
  }
}

module attributes {stable_mosaic.version = 11 : i64} {
  func.func @_bn_act_kernel(%arg0: i32, %arg1: i32, %arg2: memref<1x64x128xbf16, #tpu.memory_space<vmem>>, %arg3: memref<1x1x128xf32, #tpu.memory_space<vmem>>, %arg4: memref<1x1x128xf32, #tpu.memory_space<vmem>>, %arg5: memref<1x64x128xbf16, #tpu.memory_space<vmem>>) attributes {dimension_semantics = [#tpu.dimension_semantics<parallel>, #tpu.dimension_semantics<parallel>], iteration_bounds = array<i64: 1, 1>, scalar_prefetch = 0 : i64, scratch_operands = 0 : i64, tpu.core_type = #tpu.core_type<tc>, window_params = [{transform_indices = @transform_0, window_bounds = array<i64: 1, 64, 128>}, {transform_indices = @transform_1, window_bounds = array<i64: 1, 1, 128>}, {transform_indices = @transform_2, window_bounds = array<i64: 1, 1, 128>}, {transform_indices = @transform_3, window_bounds = array<i64: 1, 64, 128>}]} {
    %c0 = arith.constant 0 : index
    %c0_0 = arith.constant 0 : index
    %c0_1 = arith.constant 0 : index
    %0 = vector.load %arg2[%c0, %c0_0, %c0_1] : memref<1x64x128xbf16, #tpu.memory_space<vmem>>, vector<1x64x128xbf16>
    %1 = vector.shape_cast %0 : vector<1x64x128xbf16> to vector<64x128xbf16>
    %2 = arith.extf %1 : vector<64x128xbf16> to vector<64x128xf32>
    %c0_2 = arith.constant 0 : index
    %c0_3 = arith.constant 0 : index
    %c0_4 = arith.constant 0 : index
    %3 = vector.load %arg3[%c0_2, %c0_3, %c0_4] : memref<1x1x128xf32, #tpu.memory_space<vmem>>, vector<1x1x128xf32>
    %4 = vector.shape_cast %3 : vector<1x1x128xf32> to vector<1x128xf32>
    %5 = vector.broadcast %4 : vector<1x128xf32> to vector<64x128xf32>
    %6 = arith.mulf %2, %5 : vector<64x128xf32>
    %c0_5 = arith.constant 0 : index
    %c0_6 = arith.constant 0 : index
    %c0_7 = arith.constant 0 : index
    %7 = vector.load %arg4[%c0_5, %c0_6, %c0_7] : memref<1x1x128xf32, #tpu.memory_space<vmem>>, vector<1x1x128xf32>
    %8 = vector.shape_cast %7 : vector<1x1x128xf32> to vector<1x128xf32>
    %9 = vector.broadcast %8 : vector<1x128xf32> to vector<64x128xf32>
    %10 = arith.addf %6, %9 : vector<64x128xf32>
    %cst = arith.constant 0.000000e+00 : f32
    %11 = vector.broadcast %cst : f32 to vector<64x128xf32>
    %12 = arith.maximumf %10, %11 : vector<64x128xf32>
    %13 = arith.truncf %12 : vector<64x128xf32> to vector<64x128xbf16>
    %c0_8 = arith.constant 0 : index
    %c0_9 = arith.constant 0 : index
    %c0_10 = arith.constant 0 : index
    %14 = vector.load %arg5[%c0_8, %c0_9, %c0_10] : memref<1x64x128xbf16, #tpu.memory_space<vmem>>, vector<1x64x128xbf16>
    %15 = vector.shape_cast %14 : vector<1x64x128xbf16> to vector<64x128xbf16>
    %16 = vector.shape_cast %13 : vector<64x128xbf16> to vector<1x64x128xbf16>
    tpu.vector_store %arg5[%c0_8, %c0_9, %c0_10], %16 {strides = array<i32>} : memref<1x64x128xbf16, #tpu.memory_space<vmem>>, vector<1x64x128xbf16>,
    return
  }
  func.func @transform_0(%arg0: i32, %arg1: i32) -> (i32, i32, i32) {
    %c0_i32 = arith.constant 0 : i32
    %c0_i32_0 = arith.constant 0 : i32
    return %arg0, %arg1, %c0_i32 : i32, i32, i32
  }
  func.func @transform_1(%arg0: i32, %arg1: i32) -> (i32, i32, i32) {
    %c0_i32 = arith.constant 0 : i32
    %c0_i32_0 = arith.constant 0 : i32
    %c0_i32_1 = arith.constant 0 : i32
    return %arg0, %c0_i32, %c0_i32_0 : i32, i32, i32
  }
  func.func @transform_2(%arg0: i32, %arg1: i32) -> (i32, i32, i32) {
    %c0_i32 = arith.constant 0 : i32
    %c0_i32_0 = arith.constant 0 : i32
    %c0_i32_1 = arith.constant 0 : i32
    return %arg0, %c0_i32, %c0_i32_0 : i32, i32, i32
  }
  func.func @transform_3(%arg0: i32, %arg1: i32) -> (i32, i32, i32) {
    %c0_i32 = arith.constant 0 : i32
    %c0_i32_0 = arith.constant 0 : i32
    return %arg0, %arg1, %c0_i32 : i32, i32, i32
  }
}

module attributes {stable_mosaic.version = 11 : i64} {
  func.func @_conv_kernel(%arg0: i32, %arg1: i32, %arg2: memref<1x16x256xbf16, #tpu.memory_space<vmem>>, %arg3: memref<256x128xbf16, #tpu.memory_space<vmem>>, %arg4: memref<1x128xf32, #tpu.memory_space<vmem>>, %arg5: memref<1x16x128xbf16, #tpu.memory_space<vmem>>, %arg6: memref<1x1x128xf32, #tpu.memory_space<vmem>>, %arg7: memref<1x1x128xf32, #tpu.memory_space<vmem>>) attributes {dimension_semantics = [#tpu.dimension_semantics<parallel>, #tpu.dimension_semantics<parallel>], iteration_bounds = array<i64: 1, 1>, scalar_prefetch = 0 : i64, scratch_operands = 0 : i64, tpu.core_type = #tpu.core_type<tc>, window_params = [{transform_indices = @transform_0, window_bounds = array<i64: 1, 16, 256>}, {pipeline_mode = #tpu.pipeline_mode<synchronous>, transform_indices = @transform_1, window_bounds = array<i64: 256, 128>}, {pipeline_mode = #tpu.pipeline_mode<synchronous>, transform_indices = @transform_2, window_bounds = array<i64: 1, 128>}, {transform_indices = @transform_3, window_bounds = array<i64: 1, 16, 128>}, {transform_indices = @transform_4, window_bounds = array<i64: 1, 1, 128>}, {transform_indices = @transform_5, window_bounds = array<i64: 1, 1, 128>}]} {
    %c0 = arith.constant 0 : index
    %c0_0 = arith.constant 0 : index
    %c0_1 = arith.constant 0 : index
    %0 = vector.load %arg2[%c0, %c0_0, %c0_1] : memref<1x16x256xbf16, #tpu.memory_space<vmem>>, vector<1x16x256xbf16>
    %1 = vector.shape_cast %0 : vector<1x16x256xbf16> to vector<16x256xbf16>
    %c0_2 = arith.constant 0 : index
    %c0_3 = arith.constant 0 : index
    %2 = vector.load %arg3[%c0_2, %c0_3] : memref<256x128xbf16, #tpu.memory_space<vmem>>, vector<256x128xbf16>
    %cst = arith.constant dense<0.000000e+00> : vector<16x128xf32>
    %3 = tpu.matmul %1, %2, %cst {dimension_numbers = #tpu.dot_dimension_numbers<[1], [0], [0], [1], [0, 0, 1, 1], [], []>} : vector<16x256xbf16>, vector<256x128xbf16>, vector<16x128xf32> -> vector<16x128xf32>
    %c0_4 = arith.constant 0 : index
    %c0_5 = arith.constant 0 : index
    %4 = vector.load %arg4[%c0_4, %c0_5] : memref<1x128xf32, #tpu.memory_space<vmem>>, vector<1x128xf32>
    %5 = vector.broadcast %4 : vector<1x128xf32> to vector<16x128xf32>
    %6 = arith.addf %3, %5 : vector<16x128xf32>
    %7 = arith.truncf %6 : vector<16x128xf32> to vector<16x128xbf16>
    %c0_6 = arith.constant 0 : index
    %c0_7 = arith.constant 0 : index
    %c0_8 = arith.constant 0 : index
    %8 = vector.load %arg5[%c0_6, %c0_7, %c0_8] : memref<1x16x128xbf16, #tpu.memory_space<vmem>>, vector<1x16x128xbf16>
    %9 = vector.shape_cast %8 : vector<1x16x128xbf16> to vector<16x128xbf16>
    %10 = vector.shape_cast %7 : vector<16x128xbf16> to vector<1x16x128xbf16>
    tpu.vector_store %arg5[%c0_6, %c0_7, %c0_8], %10 {strides = array<i32>} : memref<1x16x128xbf16, #tpu.memory_space<vmem>>, vector<1x16x128xbf16>,
    %cst_9 = arith.constant dense<0.000000e+00> : vector<128xf32>
    %11 = vector.multi_reduction <add>, %6, %cst_9 [0] : vector<16x128xf32> to vector<128xf32>
    %12 = vector.shape_cast %11 : vector<128xf32> to vector<1x128xf32>
    %c0_10 = arith.constant 0 : index
    %c0_11 = arith.constant 0 : index
    %c0_12 = arith.constant 0 : index
    %13 = vector.load %arg6[%c0_10, %c0_11, %c0_12] : memref<1x1x128xf32, #tpu.memory_space<vmem>>, vector<1x1x128xf32>
    %14 = vector.shape_cast %13 : vector<1x1x128xf32> to vector<1x128xf32>
    %15 = vector.shape_cast %12 : vector<1x128xf32> to vector<1x1x128xf32>
    tpu.vector_store %arg6[%c0_10, %c0_11, %c0_12], %15 {strides = array<i32>} : memref<1x1x128xf32, #tpu.memory_space<vmem>>, vector<1x1x128xf32>,
    %16 = arith.mulf %6, %6 : vector<16x128xf32>
    %cst_13 = arith.constant dense<0.000000e+00> : vector<128xf32>
    %17 = vector.multi_reduction <add>, %16, %cst_13 [0] : vector<16x128xf32> to vector<128xf32>
    %18 = vector.shape_cast %17 : vector<128xf32> to vector<1x128xf32>
    %c0_14 = arith.constant 0 : index
    %c0_15 = arith.constant 0 : index
    %c0_16 = arith.constant 0 : index
    %19 = vector.load %arg7[%c0_14, %c0_15, %c0_16] : memref<1x1x128xf32, #tpu.memory_space<vmem>>, vector<1x1x128xf32>
    %20 = vector.shape_cast %19 : vector<1x1x128xf32> to vector<1x128xf32>
    %21 = vector.shape_cast %18 : vector<1x128xf32> to vector<1x1x128xf32>
    tpu.vector_store %arg7[%c0_14, %c0_15, %c0_16], %21 {strides = array<i32>} : memref<1x1x128xf32, #tpu.memory_space<vmem>>, vector<1x1x128xf32>,
    return
  }
  func.func @transform_0(%arg0: i32, %arg1: i32) -> (i32, i32, i32) {
    %c0_i32 = arith.constant 0 : i32
    %c0_i32_0 = arith.constant 0 : i32
    return %arg0, %arg1, %c0_i32 : i32, i32, i32
  }
  func.func @transform_1(%arg0: i32, %arg1: i32) -> (i32, i32) {
    %c0_i32 = arith.constant 0 : i32
    %c0_i32_0 = arith.constant 0 : i32
    %c0_i32_1 = arith.constant 0 : i32
    return %c0_i32, %c0_i32_0 : i32, i32
  }
  func.func @transform_2(%arg0: i32, %arg1: i32) -> (i32, i32) {
    %c0_i32 = arith.constant 0 : i32
    %c0_i32_0 = arith.constant 0 : i32
    %c0_i32_1 = arith.constant 0 : i32
    return %c0_i32, %c0_i32_0 : i32, i32
  }
  func.func @transform_3(%arg0: i32, %arg1: i32) -> (i32, i32, i32) {
    %c0_i32 = arith.constant 0 : i32
    %c0_i32_0 = arith.constant 0 : i32
    return %arg0, %arg1, %c0_i32 : i32, i32, i32
  }
  func.func @transform_4(%arg0: i32, %arg1: i32) -> (i32, i32, i32) {
    %c1_i32 = arith.constant 1 : i32
    %0 = arith.muli %arg0, %c1_i32 : i32
    %1 = arith.addi %0, %arg1 : i32
    %c0_i32 = arith.constant 0 : i32
    %c0_i32_0 = arith.constant 0 : i32
    %c0_i32_1 = arith.constant 0 : i32
    return %1, %c0_i32, %c0_i32_0 : i32, i32, i32
  }
  func.func @transform_5(%arg0: i32, %arg1: i32) -> (i32, i32, i32) {
    %c1_i32 = arith.constant 1 : i32
    %0 = arith.muli %arg0, %c1_i32 : i32
    %1 = arith.addi %0, %arg1 : i32
    %c0_i32 = arith.constant 0 : i32
    %c0_i32_0 = arith.constant 0 : i32
    %c0_i32_1 = arith.constant 0 : i32
    return %1, %c0_i32, %c0_i32_0 : i32, i32, i32
  }
}

module attributes {stable_mosaic.version = 11 : i64} {
  func.func @_bn_act_kernel(%arg0: i32, %arg1: i32, %arg2: memref<1x16x128xbf16, #tpu.memory_space<vmem>>, %arg3: memref<1x1x128xf32, #tpu.memory_space<vmem>>, %arg4: memref<1x1x128xf32, #tpu.memory_space<vmem>>, %arg5: memref<1x16x128xbf16, #tpu.memory_space<vmem>>) attributes {dimension_semantics = [#tpu.dimension_semantics<parallel>, #tpu.dimension_semantics<parallel>], iteration_bounds = array<i64: 1, 1>, scalar_prefetch = 0 : i64, scratch_operands = 0 : i64, tpu.core_type = #tpu.core_type<tc>, window_params = [{transform_indices = @transform_0, window_bounds = array<i64: 1, 16, 128>}, {transform_indices = @transform_1, window_bounds = array<i64: 1, 1, 128>}, {transform_indices = @transform_2, window_bounds = array<i64: 1, 1, 128>}, {transform_indices = @transform_3, window_bounds = array<i64: 1, 16, 128>}]} {
    %c0 = arith.constant 0 : index
    %c0_0 = arith.constant 0 : index
    %c0_1 = arith.constant 0 : index
    %0 = vector.load %arg2[%c0, %c0_0, %c0_1] : memref<1x16x128xbf16, #tpu.memory_space<vmem>>, vector<1x16x128xbf16>
    %1 = vector.shape_cast %0 : vector<1x16x128xbf16> to vector<16x128xbf16>
    %2 = arith.extf %1 : vector<16x128xbf16> to vector<16x128xf32>
    %c0_2 = arith.constant 0 : index
    %c0_3 = arith.constant 0 : index
    %c0_4 = arith.constant 0 : index
    %3 = vector.load %arg3[%c0_2, %c0_3, %c0_4] : memref<1x1x128xf32, #tpu.memory_space<vmem>>, vector<1x1x128xf32>
    %4 = vector.shape_cast %3 : vector<1x1x128xf32> to vector<1x128xf32>
    %5 = vector.broadcast %4 : vector<1x128xf32> to vector<16x128xf32>
    %6 = arith.mulf %2, %5 : vector<16x128xf32>
    %c0_5 = arith.constant 0 : index
    %c0_6 = arith.constant 0 : index
    %c0_7 = arith.constant 0 : index
    %7 = vector.load %arg4[%c0_5, %c0_6, %c0_7] : memref<1x1x128xf32, #tpu.memory_space<vmem>>, vector<1x1x128xf32>
    %8 = vector.shape_cast %7 : vector<1x1x128xf32> to vector<1x128xf32>
    %9 = vector.broadcast %8 : vector<1x128xf32> to vector<16x128xf32>
    %10 = arith.addf %6, %9 : vector<16x128xf32>
    %cst = arith.constant 0.000000e+00 : f32
    %11 = vector.broadcast %cst : f32 to vector<16x128xf32>
    %12 = arith.maximumf %10, %11 : vector<16x128xf32>
    %13 = arith.truncf %12 : vector<16x128xf32> to vector<16x128xbf16>
    %c0_8 = arith.constant 0 : index
    %c0_9 = arith.constant 0 : index
    %c0_10 = arith.constant 0 : index
    %14 = vector.load %arg5[%c0_8, %c0_9, %c0_10] : memref<1x16x128xbf16, #tpu.memory_space<vmem>>, vector<1x16x128xbf16>
    %15 = vector.shape_cast %14 : vector<1x16x128xbf16> to vector<16x128xbf16>
    %16 = vector.shape_cast %13 : vector<16x128xbf16> to vector<1x16x128xbf16>
    tpu.vector_store %arg5[%c0_8, %c0_9, %c0_10], %16 {strides = array<i32>} : memref<1x16x128xbf16, #tpu.memory_space<vmem>>, vector<1x16x128xbf16>,
    return
  }
  func.func @transform_0(%arg0: i32, %arg1: i32) -> (i32, i32, i32) {
    %c0_i32 = arith.constant 0 : i32
    %c0_i32_0 = arith.constant 0 : i32
    return %arg0, %arg1, %c0_i32 : i32, i32, i32
  }
  func.func @transform_1(%arg0: i32, %arg1: i32) -> (i32, i32, i32) {
    %c0_i32 = arith.constant 0 : i32
    %c0_i32_0 = arith.constant 0 : i32
    %c0_i32_1 = arith.constant 0 : i32
    return %arg0, %c0_i32, %c0_i32_0 : i32, i32, i32
  }
  func.func @transform_2(%arg0: i32, %arg1: i32) -> (i32, i32, i32) {
    %c0_i32 = arith.constant 0 : i32
    %c0_i32_0 = arith.constant 0 : i32
    %c0_i32_1 = arith.constant 0 : i32
    return %arg0, %c0_i32, %c0_i32_0 : i32, i32, i32
  }
  func.func @transform_3(%arg0: i32, %arg1: i32) -> (i32, i32, i32) {
    %c0_i32 = arith.constant 0 : i32
    %c0_i32_0 = arith.constant 0 : i32
    return %arg0, %arg1, %c0_i32 : i32, i32, i32
  }
}

module attributes {stable_mosaic.version = 11 : i64} {
  func.func @_bn_res_kernel(%arg0: i32, %arg1: i32, %arg2: memref<1x16x128xbf16, #tpu.memory_space<vmem>>, %arg3: memref<1x1x128xf32, #tpu.memory_space<vmem>>, %arg4: memref<1x1x128xf32, #tpu.memory_space<vmem>>, %arg5: memref<1x16x128xbf16, #tpu.memory_space<vmem>>, %arg6: memref<1x16x128xbf16, #tpu.memory_space<vmem>>) attributes {dimension_semantics = [#tpu.dimension_semantics<parallel>, #tpu.dimension_semantics<parallel>], iteration_bounds = array<i64: 1, 1>, scalar_prefetch = 0 : i64, scratch_operands = 0 : i64, tpu.core_type = #tpu.core_type<tc>, window_params = [{transform_indices = @transform_0, window_bounds = array<i64: 1, 16, 128>}, {transform_indices = @transform_1, window_bounds = array<i64: 1, 1, 128>}, {transform_indices = @transform_2, window_bounds = array<i64: 1, 1, 128>}, {transform_indices = @transform_3, window_bounds = array<i64: 1, 16, 128>}, {transform_indices = @transform_4, window_bounds = array<i64: 1, 16, 128>}]} {
    %c0 = arith.constant 0 : index
    %c0_0 = arith.constant 0 : index
    %c0_1 = arith.constant 0 : index
    %0 = vector.load %arg2[%c0, %c0_0, %c0_1] : memref<1x16x128xbf16, #tpu.memory_space<vmem>>, vector<1x16x128xbf16>
    %1 = vector.shape_cast %0 : vector<1x16x128xbf16> to vector<16x128xbf16>
    %2 = arith.extf %1 : vector<16x128xbf16> to vector<16x128xf32>
    %c0_2 = arith.constant 0 : index
    %c0_3 = arith.constant 0 : index
    %c0_4 = arith.constant 0 : index
    %3 = vector.load %arg3[%c0_2, %c0_3, %c0_4] : memref<1x1x128xf32, #tpu.memory_space<vmem>>, vector<1x1x128xf32>
    %4 = vector.shape_cast %3 : vector<1x1x128xf32> to vector<1x128xf32>
    %5 = vector.broadcast %4 : vector<1x128xf32> to vector<16x128xf32>
    %6 = arith.mulf %2, %5 : vector<16x128xf32>
    %c0_5 = arith.constant 0 : index
    %c0_6 = arith.constant 0 : index
    %c0_7 = arith.constant 0 : index
    %7 = vector.load %arg4[%c0_5, %c0_6, %c0_7] : memref<1x1x128xf32, #tpu.memory_space<vmem>>, vector<1x1x128xf32>
    %8 = vector.shape_cast %7 : vector<1x1x128xf32> to vector<1x128xf32>
    %9 = vector.broadcast %8 : vector<1x128xf32> to vector<16x128xf32>
    %10 = arith.addf %6, %9 : vector<16x128xf32>
    %c0_8 = arith.constant 0 : index
    %c0_9 = arith.constant 0 : index
    %c0_10 = arith.constant 0 : index
    %11 = vector.load %arg5[%c0_8, %c0_9, %c0_10] : memref<1x16x128xbf16, #tpu.memory_space<vmem>>, vector<1x16x128xbf16>
    %12 = vector.shape_cast %11 : vector<1x16x128xbf16> to vector<16x128xbf16>
    %13 = arith.extf %12 : vector<16x128xbf16> to vector<16x128xf32>
    %14 = arith.addf %10, %13 : vector<16x128xf32>
    %15 = arith.truncf %14 : vector<16x128xf32> to vector<16x128xbf16>
    %c0_11 = arith.constant 0 : index
    %c0_12 = arith.constant 0 : index
    %c0_13 = arith.constant 0 : index
    %16 = vector.load %arg6[%c0_11, %c0_12, %c0_13] : memref<1x16x128xbf16, #tpu.memory_space<vmem>>, vector<1x16x128xbf16>
    %17 = vector.shape_cast %16 : vector<1x16x128xbf16> to vector<16x128xbf16>
    %18 = vector.shape_cast %15 : vector<16x128xbf16> to vector<1x16x128xbf16>
    tpu.vector_store %arg6[%c0_11, %c0_12, %c0_13], %18 {strides = array<i32>} : memref<1x16x128xbf16, #tpu.memory_space<vmem>>, vector<1x16x128xbf16>,
    return
  }
  func.func @transform_0(%arg0: i32, %arg1: i32) -> (i32, i32, i32) {
    %c0_i32 = arith.constant 0 : i32
    %c0_i32_0 = arith.constant 0 : i32
    return %arg0, %arg1, %c0_i32 : i32, i32, i32
  }
  func.func @transform_1(%arg0: i32, %arg1: i32) -> (i32, i32, i32) {
    %c0_i32 = arith.constant 0 : i32
    %c0_i32_0 = arith.constant 0 : i32
    %c0_i32_1 = arith.constant 0 : i32
    return %arg0, %c0_i32, %c0_i32_0 : i32, i32, i32
  }
  func.func @transform_2(%arg0: i32, %arg1: i32) -> (i32, i32, i32) {
    %c0_i32 = arith.constant 0 : i32
    %c0_i32_0 = arith.constant 0 : i32
    %c0_i32_1 = arith.constant 0 : i32
    return %arg0, %c0_i32, %c0_i32_0 : i32, i32, i32
  }
  func.func @transform_3(%arg0: i32, %arg1: i32) -> (i32, i32, i32) {
    %c0_i32 = arith.constant 0 : i32
    %c0_i32_0 = arith.constant 0 : i32
    return %arg0, %arg1, %c0_i32 : i32, i32, i32
  }
  func.func @transform_4(%arg0: i32, %arg1: i32) -> (i32, i32, i32) {
    %c0_i32 = arith.constant 0 : i32
    %c0_i32_0 = arith.constant 0 : i32
    return %arg0, %arg1, %c0_i32 : i32, i32, i32
  }
}

module attributes {stable_mosaic.version = 11 : i64} {
  func.func @_conv_kernel(%arg0: i32, %arg1: i32, %arg2: memref<1x16x384xbf16, #tpu.memory_space<vmem>>, %arg3: memref<384x128xbf16, #tpu.memory_space<vmem>>, %arg4: memref<1x128xf32, #tpu.memory_space<vmem>>, %arg5: memref<1x16x128xbf16, #tpu.memory_space<vmem>>, %arg6: memref<1x1x128xf32, #tpu.memory_space<vmem>>, %arg7: memref<1x1x128xf32, #tpu.memory_space<vmem>>) attributes {dimension_semantics = [#tpu.dimension_semantics<parallel>, #tpu.dimension_semantics<parallel>], iteration_bounds = array<i64: 1, 1>, scalar_prefetch = 0 : i64, scratch_operands = 0 : i64, tpu.core_type = #tpu.core_type<tc>, window_params = [{transform_indices = @transform_0, window_bounds = array<i64: 1, 16, 384>}, {pipeline_mode = #tpu.pipeline_mode<synchronous>, transform_indices = @transform_1, window_bounds = array<i64: 384, 128>}, {pipeline_mode = #tpu.pipeline_mode<synchronous>, transform_indices = @transform_2, window_bounds = array<i64: 1, 128>}, {transform_indices = @transform_3, window_bounds = array<i64: 1, 16, 128>}, {transform_indices = @transform_4, window_bounds = array<i64: 1, 1, 128>}, {transform_indices = @transform_5, window_bounds = array<i64: 1, 1, 128>}]} {
    %c0 = arith.constant 0 : index
    %c0_0 = arith.constant 0 : index
    %c0_1 = arith.constant 0 : index
    %0 = vector.load %arg2[%c0, %c0_0, %c0_1] : memref<1x16x384xbf16, #tpu.memory_space<vmem>>, vector<1x16x384xbf16>
    %1 = vector.shape_cast %0 : vector<1x16x384xbf16> to vector<16x384xbf16>
    %c0_2 = arith.constant 0 : index
    %c0_3 = arith.constant 0 : index
    %2 = vector.load %arg3[%c0_2, %c0_3] : memref<384x128xbf16, #tpu.memory_space<vmem>>, vector<384x128xbf16>
    %cst = arith.constant dense<0.000000e+00> : vector<16x128xf32>
    %3 = tpu.matmul %1, %2, %cst {dimension_numbers = #tpu.dot_dimension_numbers<[1], [0], [0], [1], [0, 0, 1, 1], [], []>} : vector<16x384xbf16>, vector<384x128xbf16>, vector<16x128xf32> -> vector<16x128xf32>
    %c0_4 = arith.constant 0 : index
    %c0_5 = arith.constant 0 : index
    %4 = vector.load %arg4[%c0_4, %c0_5] : memref<1x128xf32, #tpu.memory_space<vmem>>, vector<1x128xf32>
    %5 = vector.broadcast %4 : vector<1x128xf32> to vector<16x128xf32>
    %6 = arith.addf %3, %5 : vector<16x128xf32>
    %7 = arith.truncf %6 : vector<16x128xf32> to vector<16x128xbf16>
    %c0_6 = arith.constant 0 : index
    %c0_7 = arith.constant 0 : index
    %c0_8 = arith.constant 0 : index
    %8 = vector.load %arg5[%c0_6, %c0_7, %c0_8] : memref<1x16x128xbf16, #tpu.memory_space<vmem>>, vector<1x16x128xbf16>
    %9 = vector.shape_cast %8 : vector<1x16x128xbf16> to vector<16x128xbf16>
    %10 = vector.shape_cast %7 : vector<16x128xbf16> to vector<1x16x128xbf16>
    tpu.vector_store %arg5[%c0_6, %c0_7, %c0_8], %10 {strides = array<i32>} : memref<1x16x128xbf16, #tpu.memory_space<vmem>>, vector<1x16x128xbf16>,
    %cst_9 = arith.constant dense<0.000000e+00> : vector<128xf32>
    %11 = vector.multi_reduction <add>, %6, %cst_9 [0] : vector<16x128xf32> to vector<128xf32>
    %12 = vector.shape_cast %11 : vector<128xf32> to vector<1x128xf32>
    %c0_10 = arith.constant 0 : index
    %c0_11 = arith.constant 0 : index
    %c0_12 = arith.constant 0 : index
    %13 = vector.load %arg6[%c0_10, %c0_11, %c0_12] : memref<1x1x128xf32, #tpu.memory_space<vmem>>, vector<1x1x128xf32>
    %14 = vector.shape_cast %13 : vector<1x1x128xf32> to vector<1x128xf32>
    %15 = vector.shape_cast %12 : vector<1x128xf32> to vector<1x1x128xf32>
    tpu.vector_store %arg6[%c0_10, %c0_11, %c0_12], %15 {strides = array<i32>} : memref<1x1x128xf32, #tpu.memory_space<vmem>>, vector<1x1x128xf32>,
    %16 = arith.mulf %6, %6 : vector<16x128xf32>
    %cst_13 = arith.constant dense<0.000000e+00> : vector<128xf32>
    %17 = vector.multi_reduction <add>, %16, %cst_13 [0] : vector<16x128xf32> to vector<128xf32>
    %18 = vector.shape_cast %17 : vector<128xf32> to vector<1x128xf32>
    %c0_14 = arith.constant 0 : index
    %c0_15 = arith.constant 0 : index
    %c0_16 = arith.constant 0 : index
    %19 = vector.load %arg7[%c0_14, %c0_15, %c0_16] : memref<1x1x128xf32, #tpu.memory_space<vmem>>, vector<1x1x128xf32>
    %20 = vector.shape_cast %19 : vector<1x1x128xf32> to vector<1x128xf32>
    %21 = vector.shape_cast %18 : vector<1x128xf32> to vector<1x1x128xf32>
    tpu.vector_store %arg7[%c0_14, %c0_15, %c0_16], %21 {strides = array<i32>} : memref<1x1x128xf32, #tpu.memory_space<vmem>>, vector<1x1x128xf32>,
    return
  }
  func.func @transform_0(%arg0: i32, %arg1: i32) -> (i32, i32, i32) {
    %c0_i32 = arith.constant 0 : i32
    %c0_i32_0 = arith.constant 0 : i32
    return %arg0, %arg1, %c0_i32 : i32, i32, i32
  }
  func.func @transform_1(%arg0: i32, %arg1: i32) -> (i32, i32) {
    %c0_i32 = arith.constant 0 : i32
    %c0_i32_0 = arith.constant 0 : i32
    %c0_i32_1 = arith.constant 0 : i32
    return %c0_i32, %c0_i32_0 : i32, i32
  }
  func.func @transform_2(%arg0: i32, %arg1: i32) -> (i32, i32) {
    %c0_i32 = arith.constant 0 : i32
    %c0_i32_0 = arith.constant 0 : i32
    %c0_i32_1 = arith.constant 0 : i32
    return %c0_i32, %c0_i32_0 : i32, i32
  }
  func.func @transform_3(%arg0: i32, %arg1: i32) -> (i32, i32, i32) {
    %c0_i32 = arith.constant 0 : i32
    %c0_i32_0 = arith.constant 0 : i32
    return %arg0, %arg1, %c0_i32 : i32, i32, i32
  }
  func.func @transform_4(%arg0: i32, %arg1: i32) -> (i32, i32, i32) {
    %c1_i32 = arith.constant 1 : i32
    %0 = arith.muli %arg0, %c1_i32 : i32
    %1 = arith.addi %0, %arg1 : i32
    %c0_i32 = arith.constant 0 : i32
    %c0_i32_0 = arith.constant 0 : i32
    %c0_i32_1 = arith.constant 0 : i32
    return %1, %c0_i32, %c0_i32_0 : i32, i32, i32
  }
  func.func @transform_5(%arg0: i32, %arg1: i32) -> (i32, i32, i32) {
    %c1_i32 = arith.constant 1 : i32
    %0 = arith.muli %arg0, %c1_i32 : i32
    %1 = arith.addi %0, %arg1 : i32
    %c0_i32 = arith.constant 0 : i32
    %c0_i32_0 = arith.constant 0 : i32
    %c0_i32_1 = arith.constant 0 : i32
    return %1, %c0_i32, %c0_i32_0 : i32, i32, i32
  }
}

module attributes {stable_mosaic.version = 11 : i64} {
  func.func @_bn_res_kernel(%arg0: i32, %arg1: i32, %arg2: memref<1x16x128xbf16, #tpu.memory_space<vmem>>, %arg3: memref<1x1x128xf32, #tpu.memory_space<vmem>>, %arg4: memref<1x1x128xf32, #tpu.memory_space<vmem>>, %arg5: memref<1x16x128xbf16, #tpu.memory_space<vmem>>, %arg6: memref<1x16x128xbf16, #tpu.memory_space<vmem>>) attributes {dimension_semantics = [#tpu.dimension_semantics<parallel>, #tpu.dimension_semantics<parallel>], iteration_bounds = array<i64: 1, 1>, scalar_prefetch = 0 : i64, scratch_operands = 0 : i64, tpu.core_type = #tpu.core_type<tc>, window_params = [{transform_indices = @transform_0, window_bounds = array<i64: 1, 16, 128>}, {transform_indices = @transform_1, window_bounds = array<i64: 1, 1, 128>}, {transform_indices = @transform_2, window_bounds = array<i64: 1, 1, 128>}, {transform_indices = @transform_3, window_bounds = array<i64: 1, 16, 128>}, {transform_indices = @transform_4, window_bounds = array<i64: 1, 16, 128>}]} {
    %c0 = arith.constant 0 : index
    %c0_0 = arith.constant 0 : index
    %c0_1 = arith.constant 0 : index
    %0 = vector.load %arg2[%c0, %c0_0, %c0_1] : memref<1x16x128xbf16, #tpu.memory_space<vmem>>, vector<1x16x128xbf16>
    %1 = vector.shape_cast %0 : vector<1x16x128xbf16> to vector<16x128xbf16>
    %2 = arith.extf %1 : vector<16x128xbf16> to vector<16x128xf32>
    %c0_2 = arith.constant 0 : index
    %c0_3 = arith.constant 0 : index
    %c0_4 = arith.constant 0 : index
    %3 = vector.load %arg3[%c0_2, %c0_3, %c0_4] : memref<1x1x128xf32, #tpu.memory_space<vmem>>, vector<1x1x128xf32>
    %4 = vector.shape_cast %3 : vector<1x1x128xf32> to vector<1x128xf32>
    %5 = vector.broadcast %4 : vector<1x128xf32> to vector<16x128xf32>
    %6 = arith.mulf %2, %5 : vector<16x128xf32>
    %c0_5 = arith.constant 0 : index
    %c0_6 = arith.constant 0 : index
    %c0_7 = arith.constant 0 : index
    %7 = vector.load %arg4[%c0_5, %c0_6, %c0_7] : memref<1x1x128xf32, #tpu.memory_space<vmem>>, vector<1x1x128xf32>
    %8 = vector.shape_cast %7 : vector<1x1x128xf32> to vector<1x128xf32>
    %9 = vector.broadcast %8 : vector<1x128xf32> to vector<16x128xf32>
    %10 = arith.addf %6, %9 : vector<16x128xf32>
    %c0_8 = arith.constant 0 : index
    %c0_9 = arith.constant 0 : index
    %c0_10 = arith.constant 0 : index
    %11 = vector.load %arg5[%c0_8, %c0_9, %c0_10] : memref<1x16x128xbf16, #tpu.memory_space<vmem>>, vector<1x16x128xbf16>
    %12 = vector.shape_cast %11 : vector<1x16x128xbf16> to vector<16x128xbf16>
    %13 = arith.extf %12 : vector<16x128xbf16> to vector<16x128xf32>
    %14 = arith.addf %10, %13 : vector<16x128xf32>
    %15 = arith.truncf %14 : vector<16x128xf32> to vector<16x128xbf16>
    %c0_11 = arith.constant 0 : index
    %c0_12 = arith.constant 0 : index
    %c0_13 = arith.constant 0 : index
    %16 = vector.load %arg6[%c0_11, %c0_12, %c0_13] : memref<1x16x128xbf16, #tpu.memory_space<vmem>>, vector<1x16x128xbf16>
    %17 = vector.shape_cast %16 : vector<1x16x128xbf16> to vector<16x128xbf16>
    %18 = vector.shape_cast %15 : vector<16x128xbf16> to vector<1x16x128xbf16>
    tpu.vector_store %arg6[%c0_11, %c0_12, %c0_13], %18 {strides = array<i32>} : memref<1x16x128xbf16, #tpu.memory_space<vmem>>, vector<1x16x128xbf16>,
    return
  }
  func.func @transform_0(%arg0: i32, %arg1: i32) -> (i32, i32, i32) {
    %c0_i32 = arith.constant 0 : i32
    %c0_i32_0 = arith.constant 0 : i32
    return %arg0, %arg1, %c0_i32 : i32, i32, i32
  }
  func.func @transform_1(%arg0: i32, %arg1: i32) -> (i32, i32, i32) {
    %c0_i32 = arith.constant 0 : i32
    %c0_i32_0 = arith.constant 0 : i32
    %c0_i32_1 = arith.constant 0 : i32
    return %arg0, %c0_i32, %c0_i32_0 : i32, i32, i32
  }
  func.func @transform_2(%arg0: i32, %arg1: i32) -> (i32, i32, i32) {
    %c0_i32 = arith.constant 0 : i32
    %c0_i32_0 = arith.constant 0 : i32
    %c0_i32_1 = arith.constant 0 : i32
    return %arg0, %c0_i32, %c0_i32_0 : i32, i32, i32
  }
  func.func @transform_3(%arg0: i32, %arg1: i32) -> (i32, i32, i32) {
    %c0_i32 = arith.constant 0 : i32
    %c0_i32_0 = arith.constant 0 : i32
    return %arg0, %arg1, %c0_i32 : i32, i32, i32
  }
  func.func @transform_4(%arg0: i32, %arg1: i32) -> (i32, i32, i32) {
    %c0_i32 = arith.constant 0 : i32
    %c0_i32_0 = arith.constant 0 : i32
    return %arg0, %arg1, %c0_i32 : i32, i32, i32
  }
}

</mosaic_0001>

<llo_original>
// kernel: run_encoder.15
$region0: #{run_encoder.15}
  #allocation0 [shape = 'u32[]', space=smem, size = 0x4, offset = 0x4, fixed_abs, tag = 'smem constant byte address 0x4 - core index']
  #allocation1 [shape = 'u32[144,128]{1,0:T(1,128)}', space=vmem, size = 0x12000, scoped, tag = 'internal scratch']
  %s0 = inlined_call_operand.vmem [shape: bf16[1,256,128], index: 0, kind: input, shape index: {}]
  %s1 = inlined_call_operand.vmem [shape: f32[1,1,128], index: 1, kind: input, shape index: {}]
  %s2 = inlined_call_operand.vmem [shape: f32[1,1,128], index: 2, kind: input, shape index: {}]
  %s3 = inlined_call_operand.vmem [shape: bf16[1,256,128], index: 3, kind: output, shape index: {}]
  %s4 = sld [smem:[#allocation0]]
  $region22: #{run_encoder.15} parent=0
    _
  %s6 = ssub.s32 1, %s4
  %s7 = scalar_select 0, %s6, %s4
  // Predicated region
  $region2: #{run_encoder.15} parent=0 // pred_check
    _
  $region3: #{run_encoder.15} parent=0 // pred_check_branch
    %9 = sbr.rel (0) target = $region5
  $region4: #{run_encoder.15} parent=0 // pred_region
    _
  $region5: #{run_encoder.15} parent=0 // pred_fallthru
    _
  // Predicated region
  $region6: #{run_encoder.15} parent=0 // pred_check
    _
  $region7: #{run_encoder.15} parent=0 // pred_check_branch
    %11 = sbr.rel (0) target = $region9
  $region8: #{run_encoder.15} parent=0 // pred_region
    _
  $region9: #{run_encoder.15} parent=0 // pred_fallthru
    _
  // Predicated region
  $region10: #{run_encoder.15} parent=0 // pred_check
    _
  $region11: #{run_encoder.15} parent=0 // pred_check_branch
    %13 = sbr.rel (0) target = $region13
  $region12: #{run_encoder.15} parent=0 // pred_region
    _
  $region13: #{run_encoder.15} parent=0 // pred_fallthru
    _
  %v14 = vld [vmem:[%s0] sm:$0xf]
  %v15 = vld [vmem:[%s0 + $0x4] sm:$0xf]
  %v16 = vld [vmem:[%s0 + $0x8] sm:$0xf]
  %v17 = vld [vmem:[%s0 + $0xc] sm:$0xf]
  %v18 = vld [vmem:[%s0 + $0x10] sm:$0xf]
  %v19 = vld [vmem:[%s0 + $0x14] sm:$0xf]
  %v20 = vld [vmem:[%s0 + $0x18] sm:$0xf]
  %v21 = vld [vmem:[%s0 + $0x1c] sm:$0xf]
  %v22 = vld [vmem:[%s0 + $0x20] sm:$0xf]
  %v23 = vld [vmem:[%s0 + $0x24] sm:$0xf]
  %v24 = vld [vmem:[%s0 + $0x28] sm:$0xf]
  %v25 = vld [vmem:[%s0 + $0x2c] sm:$0xf]
  %v26 = vld [vmem:[%s0 + $0x30] sm:$0xf]
  %v27 = vld [vmem:[%s0 + $0x34] sm:$0xf]
  %v28 = vld [vmem:[%s0 + $0x38] sm:$0xf]
  %v29 = vld [vmem:[%s0 + $0x3c] sm:$0xf]
  %v30 = vld [vmem:[%s0 + $0x40] sm:$0xf]
  %v31 = vld [vmem:[%s0 + $0x44] sm:$0xf]
  %v32 = vld [vmem:[%s0 + $0x48] sm:$0xf]
  %v33 = vld [vmem:[%s0 + $0x4c] sm:$0xf]
  %v34 = vld [vmem:[%s0 + $0x50] sm:$0xf]
  %v35 = vld [vmem:[%s0 + $0x54] sm:$0xf]
  %v36 = vld [vmem:[%s0 + $0x58] sm:$0xf]
  %v37 = vld [vmem:[%s0 + $0x5c] sm:$0xf]
  %v38 = vld [vmem:[%s0 + $0x60] sm:$0xf]
  %v39 = vld [vmem:[%s0 + $0x64] sm:$0xf]
  %v40 = vld [vmem:[%s0 + $0x68] sm:$0xf]
  %v41 = vld [vmem:[%s0 + $0x6c] sm:$0xf]
  %v42 = vld [vmem:[%s0 + $0x70] sm:$0xf]
  %v43 = vld [vmem:[%s0 + $0x74] sm:$0xf]
  %v44 = vld [vmem:[%s0 + $0x78] sm:$0xf]
  %v45 = vld [vmem:[%s0 + $0x7c] sm:$0xf]
  %v46 = vunpack.c.l.bf16 %v14
  %v47 = vunpack.c.l.bf16 %v15
  %v48 = vunpack.c.l.bf16 %v16
  %v49 = vunpack.c.l.bf16 %v17
  %v50 = vunpack.c.l.bf16 %v18
  %v51 = vunpack.c.l.bf16 %v19
  %v52 = vunpack.c.l.bf16 %v20
  %v53 = vunpack.c.l.bf16 %v21
  %v54 = vunpack.c.l.bf16 %v22
  %v55 = vunpack.c.l.bf16 %v23
  %v56 = vunpack.c.l.bf16 %v24
  %v57 = vunpack.c.l.bf16 %v25
  %v58 = vunpack.c.l.bf16 %v26
  %v59 = vunpack.c.l.bf16 %v27
  %v60 = vunpack.c.l.bf16 %v28
  %v61 = vunpack.c.l.bf16 %v29
  %v62 = vunpack.c.l.bf16 %v30
  %v63 = vunpack.c.l.bf16 %v31
  %v64 = vunpack.c.l.bf16 %v32
  %v65 = vunpack.c.l.bf16 %v33
  %v66 = vunpack.c.l.bf16 %v34
  %v67 = vunpack.c.l.bf16 %v35
  %v68 = vunpack.c.l.bf16 %v36
  %v69 = vunpack.c.l.bf16 %v37
  %v70 = vunpack.c.l.bf16 %v38
  %v71 = vunpack.c.l.bf16 %v39
  %v72 = vunpack.c.l.bf16 %v40
  %v73 = vunpack.c.l.bf16 %v41
  %v74 = vunpack.c.l.bf16 %v42
  %v75 = vunpack.c.l.bf16 %v43
  %v76 = vunpack.c.l.bf16 %v44
  %v77 = vunpack.c.l.bf16 %v45
  %v78 = vld [vmem:[%s1] sm:$0x1]
  %v80 = vlaneseq
  %v81 = vshrl.u32 %v80, 7
  %v82 = vsub.s32 0, %v81
  %v83 = vrot.slane %v78, %v82
  %v85 = vmul.f32 %v46, %v83
  %v86 = vmul.f32 %v47, %v83
  %v87 = vmul.f32 %v48, %v83
  %v88 = vmul.f32 %v49, %v83
  %v89 = vmul.f32 %v50, %v83
  %v90 = vmul.f32 %v51, %v83
  %v91 = vmul.f32 %v52, %v83
  %v92 = vmul.f32 %v53, %v83
  %v93 = vmul.f32 %v54, %v83
  %v94 = vmul.f32 %v55, %v83
  %v95 = vmul.f32 %v56, %v83
  %v96 = vmul.f32 %v57, %v83
  %v97 = vmul.f32 %v58, %v83
  %v98 = vmul.f32 %v59, %v83
  %v99 = vmul.f32 %v60, %v83
  %v100 = vmul.f32 %v61, %v83
  %v101 = vmul.f32 %v62, %v83
  %v102 = vmul.f32 %v63, %v83
  %v103 = vmul.f32 %v64, %v83
  %v104 = vmul.f32 %v65, %v83
  %v105 = vmul.f32 %v66, %v83
  %v106 = vmul.f32 %v67, %v83
  %v107 = vmul.f32 %v68, %v83
  %v108 = vmul.f32 %v69, %v83
  %v109 = vmul.f32 %v70, %v83
  %v110 = vmul.f32 %v71, %v83
  %v111 = vmul.f32 %v72, %v83
  %v112 = vmul.f32 %v73, %v83
  %v113 = vmul.f32 %v74, %v83
  %v114 = vmul.f32 %v75, %v83
  %v115 = vmul.f32 %v76, %v83
  %v116 = vmul.f32 %v77, %v83
  %v117 = vld [vmem:[%s2] sm:$0x1]
  %v119 = vlaneseq
  %v120 = vshrl.u32 %v119, 7
  %v121 = vsub.s32 0, %v120
  %v122 = vrot.slane %v117, %v121
  %v124 = vadd.f32 %v85, %v122
  %v125 = vadd.f32 %v86, %v122
  %v126 = vadd.f32 %v87, %v122
  %v127 = vadd.f32 %v88, %v122
  %v128 = vadd.f32 %v89, %v122
  %v129 = vadd.f32 %v90, %v122
  %v130 = vadd.f32 %v91, %v122
  %v131 = vadd.f32 %v92, %v122
  %v132 = vadd.f32 %v93, %v122
  %v133 = vadd.f32 %v94, %v122
  %v134 = vadd.f32 %v95, %v122
  %v135 = vadd.f32 %v96, %v122
  %v136 = vadd.f32 %v97, %v122
  %v137 = vadd.f32 %v98, %v122
  %v138 = vadd.f32 %v99, %v122
  %v139 = vadd.f32 %v100, %v122
  %v140 = vadd.f32 %v101, %v122
  %v141 = vadd.f32 %v102, %v122
  %v142 = vadd.f32 %v103, %v122
  %v143 = vadd.f32 %v104, %v122
  %v144 = vadd.f32 %v105, %v122
  %v145 = vadd.f32 %v106, %v122
  %v146 = vadd.f32 %v107, %v122
  %v147 = vadd.f32 %v108, %v122
  %v148 = vadd.f32 %v109, %v122
  %v149 = vadd.f32 %v110, %v122
  %v150 = vadd.f32 %v111, %v122
  %v151 = vadd.f32 %v112, %v122
  %v152 = vadd.f32 %v113, %v122
  %v153 = vadd.f32 %v114, %v122
  %v154 = vadd.f32 %v115, %v122
  %v155 = vadd.f32 %v116, %v122
  %v156 = vmax.f32 %v124, 0.0
  %v157 = vmax.f32 %v125, 0.0
  %v158 = vmax.f32 %v126, 0.0
  %v159 = vmax.f32 %v127, 0.0
  %v160 = vmax.f32 %v128, 0.0
  %v161 = vmax.f32 %v129, 0.0
  %v162 = vmax.f32 %v130, 0.0
  %v163 = vmax.f32 %v131, 0.0
  %v164 = vmax.f32 %v132, 0.0
  %v165 = vmax.f32 %v133, 0.0
  %v166 = vmax.f32 %v134, 0.0
  %v167 = vmax.f32 %v135, 0.0
  %v168 = vmax.f32 %v136, 0.0
  %v169 = vmax.f32 %v137, 0.0
  %v170 = vmax.f32 %v138, 0.0
  %v171 = vmax.f32 %v139, 0.0
  %v172 = vmax.f32 %v140, 0.0
  %v173 = vmax.f32 %v141, 0.0
  %v174 = vmax.f32 %v142, 0.0
  %v175 = vmax.f32 %v143, 0.0
  %v176 = vmax.f32 %v144, 0.0
  %v177 = vmax.f32 %v145, 0.0
  %v178 = vmax.f32 %v146, 0.0
  %v179 = vmax.f32 %v147, 0.0
  %v180 = vmax.f32 %v148, 0.0
  %v181 = vmax.f32 %v149, 0.0
  %v182 = vmax.f32 %v150, 0.0
  %v183 = vmax.f32 %v151, 0.0
  %v184 = vmax.f32 %v152, 0.0
  %v185 = vmax.f32 %v153, 0.0
  %v186 = vmax.f32 %v154, 0.0
  %v187 = vmax.f32 %v155, 0.0
  %v188 = vpack.c.bf16 %v157, %v156
  %v189 = vpack.c.bf16 %v159, %v158
  %v190 = vpack.c.bf16 %v161, %v160
  %v191 = vpack.c.bf16 %v163, %v162
  %v192 = vpack.c.bf16 %v165, %v164
  %v193 = vpack.c.bf16 %v167, %v166
  %v194 = vpack.c.bf16 %v169, %v168
  %v195 = vpack.c.bf16 %v171, %v170
  %v196 = vpack.c.bf16 %v173, %v172
  %v197 = vpack.c.bf16 %v175, %v174
  %v198 = vpack.c.bf16 %v177, %v176
  %v199 = vpack.c.bf16 %v179, %v178
  %v200 = vpack.c.bf16 %v181, %v180
  %v201 = vpack.c.bf16 %v183, %v182
  %v202 = vpack.c.bf16 %v185, %v184
  %v203 = vpack.c.bf16 %v187, %v186
  %v220 = vunpack.c.l.b16 %v188
  %v221 = vunpack.c.h.b16 %v188
  %v222 = vunpack.c.l.b16 %v189
  %v223 = vunpack.c.h.b16 %v189
  %v224 = vunpack.c.l.b16 %v190
  %v225 = vunpack.c.h.b16 %v190
  %v226 = vunpack.c.l.b16 %v191
  %v227 = vunpack.c.h.b16 %v191
  %v228 = vunpack.c.l.b16 %v192
  %v229 = vunpack.c.h.b16 %v192
  %v230 = vunpack.c.l.b16 %v193
  %v231 = vunpack.c.h.b16 %v193
  %v232 = vunpack.c.l.b16 %v194
  %v233 = vunpack.c.h.b16 %v194
  %v234 = vunpack.c.l.b16 %v195
  %v235 = vunpack.c.h.b16 %v195
  %v236 = vunpack.c.l.b16 %v196
  %v237 = vunpack.c.h.b16 %v196
  %v238 = vunpack.c.l.b16 %v197
  %v239 = vunpack.c.h.b16 %v197
  %v240 = vunpack.c.l.b16 %v198
  %v241 = vunpack.c.h.b16 %v198
  %v242 = vunpack.c.l.b16 %v199
  %v243 = vunpack.c.h.b16 %v199
  %v244 = vunpack.c.l.b16 %v200
  %v245 = vunpack.c.h.b16 %v200
  %v246 = vunpack.c.l.b16 %v201
  %v247 = vunpack.c.h.b16 %v201
  %v248 = vunpack.c.l.b16 %v202
  %v249 = vunpack.c.h.b16 %v202
  %v250 = vunpack.c.l.b16 %v203
  %v251 = vunpack.c.h.b16 %v203
  %v252 = vpack.c.b16 %v220, %v220
  %v253 = vpack.c.b16 %v221, %v221
  %v254 = vpack.c.b16 %v222, %v222
  %v255 = vpack.c.b16 %v223, %v223
  %v256 = vpack.c.b16 %v224, %v224
  %v257 = vpack.c.b16 %v225, %v225
  %v258 = vpack.c.b16 %v226, %v226
  %v259 = vpack.c.b16 %v227, %v227
  %v260 = vpack.c.b16 %v228, %v228
  %v261 = vpack.c.b16 %v229, %v229
  %v262 = vpack.c.b16 %v230, %v230
  %v263 = vpack.c.b16 %v231, %v231
  %v264 = vpack.c.b16 %v232, %v232
  %v265 = vpack.c.b16 %v233, %v233
  %v266 = vpack.c.b16 %v234, %v234
  %v267 = vpack.c.b16 %v235, %v235
  %v268 = vpack.c.b16 %v236, %v236
  %v269 = vpack.c.b16 %v237, %v237
  %v270 = vpack.c.b16 %v238, %v238
  %v271 = vpack.c.b16 %v239, %v239
  %v272 = vpack.c.b16 %v240, %v240
  %v273 = vpack.c.b16 %v241, %v241
  %v274 = vpack.c.b16 %v242, %v242
  %v275 = vpack.c.b16 %v243, %v243
  %v276 = vpack.c.b16 %v244, %v244
  %v277 = vpack.c.b16 %v245, %v245
  %v278 = vpack.c.b16 %v246, %v246
  %v279 = vpack.c.b16 %v247, %v247
  %v280 = vpack.c.b16 %v248, %v248
  %v281 = vpack.c.b16 %v249, %v249
  %v282 = vpack.c.b16 %v250, %v250
  %v283 = vpack.c.b16 %v251, %v251
  %316 = vst [vmem:[%s3] sm:$0xf] %v252
  %317 = vst [vmem:[%s3 + $0x4] sm:$0xf] %v253
  %318 = vst [vmem:[%s3 + $0x8] sm:$0xf] %v254
  %319 = vst [vmem:[%s3 + $0xc] sm:$0xf] %v255
  %320 = vst [vmem:[%s3 + $0x10] sm:$0xf] %v256
  %321 = vst [vmem:[%s3 + $0x14] sm:$0xf] %v257
  %322 = vst [vmem:[%s3 + $0x18] sm:$0xf] %v258
  %323 = vst [vmem:[%s3 + $0x1c] sm:$0xf] %v259
  %324 = vst [vmem:[%s3 + $0x20] sm:$0xf] %v260
  %325 = vst [vmem:[%s3 + $0x24] sm:$0xf] %v261
  %326 = vst [vmem:[%s3 + $0x28] sm:$0xf] %v262
  %327 = vst [vmem:[%s3 + $0x2c] sm:$0xf] %v263
  %328 = vst [vmem:[%s3 + $0x30] sm:$0xf] %v264
  %329 = vst [vmem:[%s3 + $0x34] sm:$0xf] %v265
  %330 = vst [vmem:[%s3 + $0x38] sm:$0xf] %v266
  %331 = vst [vmem:[%s3 + $0x3c] sm:$0xf] %v267
  %332 = vst [vmem:[%s3 + $0x40] sm:$0xf] %v268
  %333 = vst [vmem:[%s3 + $0x44] sm:$0xf] %v269
  %334 = vst [vmem:[%s3 + $0x48] sm:$0xf] %v270
  %335 = vst [vmem:[%s3 + $0x4c] sm:$0xf] %v271
  %336 = vst [vmem:[%s3 + $0x50] sm:$0xf] %v272
  %337 = vst [vmem:[%s3 + $0x54] sm:$0xf] %v273
  %338 = vst [vmem:[%s3 + $0x58] sm:$0xf] %v274
  %339 = vst [vmem:[%s3 + $0x5c] sm:$0xf] %v275
  %340 = vst [vmem:[%s3 + $0x60] sm:$0xf] %v276
  %341 = vst [vmem:[%s3 + $0x64] sm:$0xf] %v277
  %342 = vst [vmem:[%s3 + $0x68] sm:$0xf] %v278
  %343 = vst [vmem:[%s3 + $0x6c] sm:$0xf] %v279
  %344 = vst [vmem:[%s3 + $0x70] sm:$0xf] %v280
  %345 = vst [vmem:[%s3 + $0x74] sm:$0xf] %v281
  %346 = vst [vmem:[%s3 + $0x78] sm:$0xf] %v282
  %347 = vst [vmem:[%s3 + $0x7c] sm:$0xf] %v283
  // Predicated region
  $region14: #{run_encoder.15} parent=0 // pred_check
    _
  $region15: #{run_encoder.15} parent=0 // pred_check_branch
    %349 = sbr.rel (0) target = $region17
  $region16: #{run_encoder.15} parent=0 // pred_region
    _
  $region17: #{run_encoder.15} parent=0 // pred_fallthru
    _
  // Predicated region
  $region18: #{run_encoder.15} parent=0 // pred_check
    _
  $region19: #{run_encoder.15} parent=0 // pred_check_branch
    %351 = sbr.rel (0) target = $region21
  $region20: #{run_encoder.15} parent=0 // pred_region
    _
  $region21: #{run_encoder.15} parent=0 // pred_fallthru
    _

// kernel: run_encoder.14
$region0: #{run_encoder.14}
  #allocation0 [shape = 'u32[]', space=smem, size = 0x4, offset = 0x4, fixed_abs, tag = 'smem constant byte address 0x4 - core index']
  #allocation1 [shape = 'u32[144,128]{1,0:T(1,128)}', space=vmem, size = 0x12000, scoped, tag = 'internal scratch']
  %s0 = inlined_call_operand.vmem [shape: bf16[1,256,256], index: 0, kind: input, shape index: {}]
  %s1 = inlined_call_operand.vmem [shape: bf16[256,128], index: 1, kind: input, shape index: {}]
  %s2 = inlined_call_operand.vmem [shape: f32[1,128], index: 2, kind: input, shape index: {}]
  %s3 = inlined_call_operand.vmem [shape: bf16[1,256,128], index: 3, kind: output, shape index: {0}]
  %s4 = inlined_call_operand.vmem [shape: f32[1,1,128], index: 4, kind: output, shape index: {1}]
  %s5 = inlined_call_operand.vmem [shape: f32[1,1,128], index: 5, kind: output, shape index: {2}]
  %6 = xla_tuple %s3, %s4, %s5
  %s7 = sld [smem:[#allocation0]]
  $region38: #{run_encoder.14} parent=0
    _
  %s9 = ssub.s32 1, %s7
  %s10 = scalar_select 0, %s9, %s7
  // Predicated region
  $region2: #{run_encoder.14} parent=0 // pred_check
    _
  $region3: #{run_encoder.14} parent=0 // pred_check_branch
    %12 = sbr.rel (0) target = $region5
  $region4: #{run_encoder.14} parent=0 // pred_region
    _
  $region5: #{run_encoder.14} parent=0 // pred_fallthru
    _
  // Predicated region
  $region6: #{run_encoder.14} parent=0 // pred_check
    _
  $region7: #{run_encoder.14} parent=0 // pred_check_branch
    %14 = sbr.rel (0) target = $region9
  $region8: #{run_encoder.14} parent=0 // pred_region
    _
  $region9: #{run_encoder.14} parent=0 // pred_fallthru
    _
  // Predicated region
  $region10: #{run_encoder.14} parent=0 // pred_check
    _
  $region11: #{run_encoder.14} parent=0 // pred_check_branch
    %16 = sbr.rel (0) target = $region13
  $region12: #{run_encoder.14} parent=0 // pred_region
    _
  $region13: #{run_encoder.14} parent=0 // pred_fallthru
    _
  %s17 = sadd.s32 0, 0
  %p18 = scmp.lt.s32.totalorder %s17, 0
  %s19 = scalar_select %p18, %s17, 0
  %s20 = scalar_lea.vmem %s4, %s19
  %s21 = sadd.s32 0, 0
  %p22 = scmp.lt.s32.totalorder %s21, 0
  %s23 = scalar_select %p22, %s21, 0
  %s24 = scalar_lea.vmem %s5, %s23
  %s25 = sadd.s32 0, 0
  %p26 = scmp.lt.s32.totalorder %s25, 0
  %s27 = scalar_select %p26, %s25, 0
  %s28 = scalar_lea.vmem %s4, %s27
  %s29 = sadd.s32 0, 0
  %s30 = sadd.s32 0, 0
  %p31 = scmp.lt.s32.totalorder %s30, 0
  %s32 = scalar_select %p31, %s30, 0
  %s33 = scalar_lea.vmem %s5, %s32
  %s34 = sadd.s32 0, 0
  %v36 = vld [vmem:[%s0] sm:$0xff]
  %v37 = vld [vmem:[%s0 + $0x8] sm:$0xff]
  %v38 = vld [vmem:[%s0 + $0x10] sm:$0xff]
  %v39 = vld [vmem:[%s0 + $0x18] sm:$0xff]
  %v40 = vld [vmem:[%s0 + $0x20] sm:$0xff]
  %v41 = vld [vmem:[%s0 + $0x28] sm:$0xff]
  %v42 = vld [vmem:[%s0 + $0x30] sm:$0xff]
  %v43 = vld [vmem:[%s0 + $0x38] sm:$0xff]
  %v44 = vld [vmem:[%s0 + $0x40] sm:$0xff]
  %v45 = vld [vmem:[%s0 + $0x48] sm:$0xff]
  %v46 = vld [vmem:[%s0 + $0x50] sm:$0xff]
  %v47 = vld [vmem:[%s0 + $0x58] sm:$0xff]
  %v48 = vld [vmem:[%s0 + $0x60] sm:$0xff]
  %v49 = vld [vmem:[%s0 + $0x68] sm:$0xff]
  %v50 = vld [vmem:[%s0 + $0x70] sm:$0xff]
  %v51 = vld [vmem:[%s0 + $0x78] sm:$0xff]
  %v52 = vld [vmem:[%s0 + $0x80] sm:$0xff]
  %v53 = vld [vmem:[%s0 + $0x88] sm:$0xff]
  %v54 = vld [vmem:[%s0 + $0x90] sm:$0xff]
  %v55 = vld [vmem:[%s0 + $0x98] sm:$0xff]
  %v56 = vld [vmem:[%s0 + $0xa0] sm:$0xff]
  %v57 = vld [vmem:[%s0 + $0xa8] sm:$0xff]
  %v58 = vld [vmem:[%s0 + $0xb0] sm:$0xff]
  %v59 = vld [vmem:[%s0 + $0xb8] sm:$0xff]
  %v60 = vld [vmem:[%s0 + $0xc0] sm:$0xff]
  %v61 = vld [vmem:[%s0 + $0xc8] sm:$0xff]
  %v62 = vld [vmem:[%s0 + $0xd0] sm:$0xff]
  %v63 = vld [vmem:[%s0 + $0xd8] sm:$0xff]
  %v64 = vld [vmem:[%s0 + $0xe0] sm:$0xff]
  %v65 = vld [vmem:[%s0 + $0xe8] sm:$0xff]
  %v66 = vld [vmem:[%s0 + $0xf0] sm:$0xff]
  %v67 = vld [vmem:[%s0 + $0xf8] sm:$0xff]
  %v68 = vld [vmem:[%s1] sm:$0xf]
  %v69 = vld [vmem:[%s1 + $0x4] sm:$0xf]
  %v70 = vld [vmem:[%s1 + $0x8] sm:$0xf]
  %v71 = vld [vmem:[%s1 + $0xc] sm:$0xf]
  %v72 = vld [vmem:[%s1 + $0x10] sm:$0xf]
  %v73 = vld [vmem:[%s1 + $0x14] sm:$0xf]
  %v74 = vld [vmem:[%s1 + $0x18] sm:$0xf]
  %v75 = vld [vmem:[%s1 + $0x1c] sm:$0xf]
  %v76 = vld [vmem:[%s1 + $0x20] sm:$0xf]
  %v77 = vld [vmem:[%s1 + $0x24] sm:$0xf]
  %v78 = vld [vmem:[%s1 + $0x28] sm:$0xf]
  %v79 = vld [vmem:[%s1 + $0x2c] sm:$0xf]
  %v80 = vld [vmem:[%s1 + $0x30] sm:$0xf]
  %v81 = vld [vmem:[%s1 + $0x34] sm:$0xf]
  %v82 = vld [vmem:[%s1 + $0x38] sm:$0xf]
  %v83 = vld [vmem:[%s1 + $0x3c] sm:$0xf]
  %v84 = vld [vmem:[%s1 + $0x40] sm:$0xf]
  %v85 = vld [vmem:[%s1 + $0x44] sm:$0xf]
  %v86 = vld [vmem:[%s1 + $0x48] sm:$0xf]
  %v87 = vld [vmem:[%s1 + $0x4c] sm:$0xf]
  %v88 = vld [vmem:[%s1 + $0x50] sm:$0xf]
  %v89 = vld [vmem:[%s1 + $0x54] sm:$0xf]
  %v90 = vld [vmem:[%s1 + $0x58] sm:$0xf]
  %v91 = vld [vmem:[%s1 + $0x5c] sm:$0xf]
  %v92 = vld [vmem:[%s1 + $0x60] sm:$0xf]
  %v93 = vld [vmem:[%s1 + $0x64] sm:$0xf]
  %v94 = vld [vmem:[%s1 + $0x68] sm:$0xf]
  %v95 = vld [vmem:[%s1 + $0x6c] sm:$0xf]
  %v96 = vld [vmem:[%s1 + $0x70] sm:$0xf]
  %v97 = vld [vmem:[%s1 + $0x74] sm:$0xf]
  %v98 = vld [vmem:[%s1 + $0x78] sm:$0xf]
  %v99 = vld [vmem:[%s1 + $0x7c] sm:$0xf]
  %v100 = vld [vmem:[%s2] sm:$0x1]
  %v102 = vlaneseq
  %v103 = vshrl.u32 %v102, 7
  %v104 = vsub.s32 0, %v103
  %v105 = vrot.slane %v100, %v104
  %v139 = vunpack.c.l.b16 %v36
  %v140 = vunpack.c.h.b16 %v36
  %v141 = vunpack.c.l.b16 %v37
  %v142 = vunpack.c.h.b16 %v37
  %v143 = vunpack.c.l.b16 %v38
  %v144 = vunpack.c.h.b16 %v38
  %v145 = vunpack.c.l.b16 %v39
  %v146 = vunpack.c.h.b16 %v39
  %v147 = vunpack.c.l.b16 %v40
  %v148 = vunpack.c.h.b16 %v40
  %v149 = vunpack.c.l.b16 %v41
  %v150 = vunpack.c.h.b16 %v41
  %v151 = vunpack.c.l.b16 %v42
  %v152 = vunpack.c.h.b16 %v42
  %v153 = vunpack.c.l.b16 %v43
  %v154 = vunpack.c.h.b16 %v43
  %v155 = vunpack.c.l.b16 %v44
  %v156 = vunpack.c.h.b16 %v44
  %v157 = vunpack.c.l.b16 %v45
  %v158 = vunpack.c.h.b16 %v45
  %v159 = vunpack.c.l.b16 %v46
  %v160 = vunpack.c.h.b16 %v46
  %v161 = vunpack.c.l.b16 %v47
  %v162 = vunpack.c.h.b16 %v47
  %v163 = vunpack.c.l.b16 %v48
  %v164 = vunpack.c.h.b16 %v48
  %v165 = vunpack.c.l.b16 %v49
  %v166 = vunpack.c.h.b16 %v49
  %v167 = vunpack.c.l.b16 %v50
  %v168 = vunpack.c.h.b16 %v50
  %v169 = vunpack.c.l.b16 %v51
  %v170 = vunpack.c.h.b16 %v51
  %v171 = vunpack.c.l.b16 %v52
  %v172 = vunpack.c.h.b16 %v52
  %v173 = vunpack.c.l.b16 %v53
  %v174 = vunpack.c.h.b16 %v53
  %v175 = vunpack.c.l.b16 %v54
  %v176 = vunpack.c.h.b16 %v54
  %v177 = vunpack.c.l.b16 %v55
  %v178 = vunpack.c.h.b16 %v55
  %v179 = vunpack.c.l.b16 %v56
  %v180 = vunpack.c.h.b16 %v56
  %v181 = vunpack.c.l.b16 %v57
  %v182 = vunpack.c.h.b16 %v57
  %v183 = vunpack.c.l.b16 %v58
  %v184 = vunpack.c.h.b16 %v58
  %v185 = vunpack.c.l.b16 %v59
  %v186 = vunpack.c.h.b16 %v59
  %v187 = vunpack.c.l.b16 %v60
  %v188 = vunpack.c.h.b16 %v60
  %v189 = vunpack.c.l.b16 %v61
  %v190 = vunpack.c.h.b16 %v61
  %v191 = vunpack.c.l.b16 %v62
  %v192 = vunpack.c.h.b16 %v62
  %v193 = vunpack.c.l.b16 %v63
  %v194 = vunpack.c.h.b16 %v63
  %v195 = vunpack.c.l.b16 %v64
  %v196 = vunpack.c.h.b16 %v64
  %v197 = vunpack.c.l.b16 %v65
  %v198 = vunpack.c.h.b16 %v65
  %v199 = vunpack.c.l.b16 %v66
  %v200 = vunpack.c.h.b16 %v66
  %v201 = vunpack.c.l.b16 %v67
  %v202 = vunpack.c.h.b16 %v67
  %v203 = vpack.c.b16 %v141, %v139
  %v204 = vpack.c.b16 %v142, %v140
  %v205 = vpack.c.b16 %v145, %v143
  %v206 = vpack.c.b16 %v146, %v144
  %v207 = vpack.c.b16 %v149, %v147
  %v208 = vpack.c.b16 %v150, %v148
  %v209 = vpack.c.b16 %v153, %v151
  %v210 = vpack.c.b16 %v154, %v152
  %v211 = vpack.c.b16 %v157, %v155
  %v212 = vpack.c.b16 %v158, %v156
  %v213 = vpack.c.b16 %v161, %v159
  %v214 = vpack.c.b16 %v162, %v160
  %v215 = vpack.c.b16 %v165, %v163
  %v216 = vpack.c.b16 %v166, %v164
  %v217 = vpack.c.b16 %v169, %v167
  %v218 = vpack.c.b16 %v170, %v168
  %v219 = vpack.c.b16 %v173, %v171
  %v220 = vpack.c.b16 %v174, %v172
  %v221 = vpack.c.b16 %v177, %v175
  %v222 = vpack.c.b16 %v178, %v176
  %v223 = vpack.c.b16 %v181, %v179
  %v224 = vpack.c.b16 %v182, %v180
  %v225 = vpack.c.b16 %v185, %v183
  %v226 = vpack.c.b16 %v186, %v184
  %v227 = vpack.c.b16 %v189, %v187
  %v228 = vpack.c.b16 %v190, %v188
  %v229 = vpack.c.b16 %v193, %v191
  %v230 = vpack.c.b16 %v194, %v192
  %v231 = vpack.c.b16 %v197, %v195
  %v232 = vpack.c.b16 %v198, %v196
  %v233 = vpack.c.b16 %v201, %v199
  %v234 = vpack.c.b16 %v202, %v200
  %v299 = vunpack.c.l.b16 %v68
  %v300 = vunpack.c.l.b16 %v69
  %v301 = vunpack.c.l.b16 %v70
  %v302 = vunpack.c.l.b16 %v71
  %v303 = vunpack.c.l.b16 %v72
  %v304 = vunpack.c.l.b16 %v73
  %v305 = vunpack.c.l.b16 %v74
  %v306 = vunpack.c.l.b16 %v75
  %v307 = vunpack.c.l.b16 %v76
  %v308 = vunpack.c.l.b16 %v77
  %v309 = vunpack.c.l.b16 %v78
  %v310 = vunpack.c.l.b16 %v79
  %v311 = vunpack.c.l.b16 %v80
  %v312 = vunpack.c.l.b16 %v81
  %v313 = vunpack.c.l.b16 %v82
  %v314 = vunpack.c.l.b16 %v83
  %v315 = vunpack.c.l.b16 %v84
  %v316 = vunpack.c.l.b16 %v85
  %v317 = vunpack.c.l.b16 %v86
  %v318 = vunpack.c.l.b16 %v87
  %v319 = vunpack.c.l.b16 %v88
  %v320 = vunpack.c.l.b16 %v89
  %v321 = vunpack.c.l.b16 %v90
  %v322 = vunpack.c.l.b16 %v91
  %v323 = vunpack.c.l.b16 %v92
  %v324 = vunpack.c.l.b16 %v93
  %v325 = vunpack.c.l.b16 %v94
  %v326 = vunpack.c.l.b16 %v95
  %v327 = vunpack.c.l.b16 %v96
  %v328 = vunpack.c.l.b16 %v97
  %v329 = vunpack.c.l.b16 %v98
  %v330 = vunpack.c.l.b16 %v99
  %v331 = vpack.c.b16 %v300, %v299
  %v332 = vpack.c.b16 %v302, %v301
  %v333 = vpack.c.b16 %v304, %v303
  %v334 = vpack.c.b16 %v306, %v305
  %v335 = vpack.c.b16 %v308, %v307
  %v336 = vpack.c.b16 %v310, %v309
  %v337 = vpack.c.b16 %v312, %v311
  %v338 = vpack.c.b16 %v314, %v313
  %v339 = vpack.c.b16 %v316, %v315
  %v340 = vpack.c.b16 %v318, %v317
  %v341 = vpack.c.b16 %v320, %v319
  %v342 = vpack.c.b16 %v322, %v321
  %v343 = vpack.c.b16 %v324, %v323
  %v344 = vpack.c.b16 %v326, %v325
  %v345 = vpack.c.b16 %v328, %v327
  %v346 = vpack.c.b16 %v330, %v329
  %363 = vmatprep.subr.bf16.mxu0 0
  %364 = vmatpush1.bf16.msra.mxu0 %v338
  %365 = vmatprep.subr.bf16.mxu0 0
  %366 = vmatpush1.bf16.msra.mxu0 %v337
  %367 = vmatprep.subr.bf16.mxu0 0
  %368 = vmatpush1.bf16.msra.mxu0 %v336
  %369 = vmatprep.subr.bf16.mxu0 0
  %370 = vmatpush1.bf16.msra.mxu0 %v335
  %371 = vmatprep.subr.bf16.mxu0 0
  %372 = vmatpush1.bf16.msra.mxu0 %v334
  %373 = vmatprep.subr.bf16.mxu0 0
  %374 = vmatpush1.bf16.msra.mxu0 %v333
  %375 = vmatprep.subr.bf16.mxu0 0
  %376 = vmatpush1.bf16.msra.mxu0 %v332
  %377 = vmatprep.subr.bf16.mxu0 0
  %378 = vmatpush1.bf16.msra.mxu0 %v331
  %379 = vmatprep.subr.bf16.mxu0 0
  %380 = vmatpush2.bf16.msra.mxu0 %v346
  %381 = vmatprep.subr.bf16.mxu0 0
  %382 = vmatpush2.bf16.msra.mxu0 %v345
  %383 = vmatprep.subr.bf16.mxu0 0
  %384 = vmatpush2.bf16.msra.mxu0 %v344
  %385 = vmatprep.subr.bf16.mxu0 0
  %386 = vmatpush2.bf16.msra.mxu0 %v343
  %387 = vmatprep.subr.bf16.mxu0 0
  %388 = vmatpush2.bf16.msra.mxu0 %v342
  %389 = vmatprep.subr.bf16.mxu0 0
  %390 = vmatpush2.bf16.msra.mxu0 %v341
  %391 = vmatprep.subr.bf16.mxu0 0
  %392 = vmatpush2.bf16.msra.mxu0 %v340
  %393 = vmatprep.subr.bf16.mxu0 0
  %394 = vmatpush2.bf16.msra.mxu0 %v339
  %395 = vmatprep.mubr.bf16.mxu0 %v204
  %396 = vmatmul.mubr.bf16.gmra.mxu0 %v203
  %v397 = vpop.f32.mrf.mxu0
  %v398 = vadd.f32 %v105, %v397
  %v399 = vpop.f32.mrf.mxu0
  %v400 = vpop.f32.mrf.mxu0
  %v401 = vadd.f32 %v105, %v400
  %v402 = vpop.f32.mrf.mxu0
  %403 = vmatprep.mubr.bf16.mxu0 %v206
  %404 = vmatmul.mubr.bf16.gmra.mxu0 %v205
  %v405 = vpop.f32.mrf.mxu0
  %v406 = vadd.f32 %v105, %v405
  %v407 = vpop.f32.mrf.mxu0
  %v408 = vpop.f32.mrf.mxu0
  %v409 = vadd.f32 %v105, %v408
  %v410 = vpop.f32.mrf.mxu0
  %411 = vmatprep.mubr.bf16.mxu0 %v208
  %412 = vmatmul.mubr.bf16.gmra.mxu0 %v207
  %v413 = vpop.f32.mrf.mxu0
  %v414 = vadd.f32 %v105, %v413
  %v415 = vpop.f32.mrf.mxu0
  %v416 = vpop.f32.mrf.mxu0
  %v417 = vadd.f32 %v105, %v416
  %v418 = vpop.f32.mrf.mxu0
  %419 = vmatprep.mubr.bf16.mxu0 %v210
  %420 = vmatmul.mubr.bf16.gmra.mxu0 %v209
  %v421 = vpop.f32.mrf.mxu0
  %v422 = vadd.f32 %v105, %v421
  %v423 = vpop.f32.mrf.mxu0
  %v424 = vpop.f32.mrf.mxu0
  %v425 = vadd.f32 %v105, %v424
  %v426 = vpop.f32.mrf.mxu0
  %427 = vmatprep.mubr.bf16.mxu0 %v212
  %428 = vmatmul.mubr.bf16.gmra.mxu0 %v211
  %v429 = vpop.f32.mrf.mxu0
  %v430 = vadd.f32 %v105, %v429
  %v431 = vpop.f32.mrf.mxu0
  %v432 = vpop.f32.mrf.mxu0
  %v433 = vadd.f32 %v105, %v432
  %v434 = vpop.f32.mrf.mxu0
  %435 = vmatprep.mubr.bf16.mxu0 %v214
  %436 = vmatmul.mubr.bf16.gmra.mxu0 %v213
  %v437 = vpop.f32.mrf.mxu0
  %v438 = vadd.f32 %v105, %v437
  %v439 = vpop.f32.mrf.mxu0
  %v440 = vpop.f32.mrf.mxu0
  %v441 = vadd.f32 %v105, %v440
  %v442 = vpop.f32.mrf.mxu0
  %443 = vmatprep.mubr.bf16.mxu0 %v216
  %444 = vmatmul.mubr.bf16.gmra.mxu0 %v215
  %v445 = vpop.f32.mrf.mxu0
  %v446 = vadd.f32 %v105, %v445
  %v447 = vpop.f32.mrf.mxu0
  %v448 = vpop.f32.mrf.mxu0
  %v449 = vadd.f32 %v105, %v448
  %v450 = vpop.f32.mrf.mxu0
  %451 = vmatprep.mubr.bf16.mxu0 %v218
  %452 = vmatmul.mubr.bf16.gmra.mxu0 %v217
  %v453 = vpop.f32.mrf.mxu0
  %v454 = vadd.f32 %v105, %v453
  %v455 = vpop.f32.mrf.mxu0
  %v456 = vpop.f32.mrf.mxu0
  %v457 = vadd.f32 %v105, %v456
  %v458 = vpop.f32.mrf.mxu0
  %459 = vmatprep.mubr.bf16.mxu0 %v220
  %460 = vmatmul.mubr.bf16.gmra.mxu0 %v219
  %v461 = vpop.f32.mrf.mxu0
  %v462 = vadd.f32 %v105, %v461
  %v463 = vpop.f32.mrf.mxu0
  %v464 = vpop.f32.mrf.mxu0
  %v465 = vadd.f32 %v105, %v464
  %v466 = vpop.f32.mrf.mxu0
  %467 = vmatprep.mubr.bf16.mxu0 %v222
  %468 = vmatmul.mubr.bf16.gmra.mxu0 %v221
  %v469 = vpop.f32.mrf.mxu0
  %v470 = vadd.f32 %v105, %v469
  %v471 = vpop.f32.mrf.mxu0
  %v472 = vpop.f32.mrf.mxu0
  %v473 = vadd.f32 %v105, %v472
  %v474 = vpop.f32.mrf.mxu0
  %475 = vmatprep.mubr.bf16.mxu0 %v224
  %476 = vmatmul.mubr.bf16.gmra.mxu0 %v223
  %v477 = vpop.f32.mrf.mxu0
  %v478 = vadd.f32 %v105, %v477
  %v479 = vpop.f32.mrf.mxu0
  %v480 = vpop.f32.mrf.mxu0
  %v481 = vadd.f32 %v105, %v480
  %v482 = vpop.f32.mrf.mxu0
  %483 = vmatprep.mubr.bf16.mxu0 %v226
  %484 = vmatmul.mubr.bf16.gmra.mxu0 %v225
  %v485 = vpop.f32.mrf.mxu0
  %v486 = vadd.f32 %v105, %v485
  %v487 = vpop.f32.mrf.mxu0
  %v488 = vpop.f32.mrf.mxu0
  %v489 = vadd.f32 %v105, %v488
  %v490 = vpop.f32.mrf.mxu0
  %491 = vmatprep.mubr.bf16.mxu0 %v228
  %492 = vmatmul.mubr.bf16.gmra.mxu0 %v227
  %v493 = vpop.f32.mrf.mxu0
  %v494 = vadd.f32 %v105, %v493
  %v495 = vpop.f32.mrf.mxu0
  %v496 = vpop.f32.mrf.mxu0
  %v497 = vadd.f32 %v105, %v496
  %v498 = vpop.f32.mrf.mxu0
  %499 = vmatprep.mubr.bf16.mxu0 %v230
  %500 = vmatmul.mubr.bf16.gmra.mxu0 %v229
  %v501 = vpop.f32.mrf.mxu0
  %v502 = vadd.f32 %v105, %v501
  %v503 = vpop.f32.mrf.mxu0
  %v504 = vpop.f32.mrf.mxu0
  %v505 = vadd.f32 %v105, %v504
  %v506 = vpop.f32.mrf.mxu0
  %507 = vmatprep.mubr.bf16.mxu0 %v232
  %508 = vmatmul.mubr.bf16.gmra.mxu0 %v231
  %v509 = vpop.f32.mrf.mxu0
  %v510 = vadd.f32 %v105, %v509
  %v511 = vpop.f32.mrf.mxu0
  %v512 = vpop.f32.mrf.mxu0
  %v513 = vadd.f32 %v105, %v512
  %v514 = vpop.f32.mrf.mxu0
  %515 = vmatprep.mubr.bf16.mxu0 %v234
  %516 = vmatmul.mubr.bf16.gmra.mxu0 %v233
  %v517 = vpop.f32.mrf.mxu0
  %v518 = vadd.f32 %v105, %v517
  %v519 = vpop.f32.mrf.mxu0
  %v520 = vpop.f32.mrf.mxu0
  %v521 = vadd.f32 %v105, %v520
  %v522 = vpop.f32.mrf.mxu0
  %523 = vdwg.mxu0
  %v524 = vpack.c.bf16 %v401, %v398
  %v525 = vpack.c.bf16 %v409, %v406
  %v526 = vpack.c.bf16 %v417, %v414
  %v527 = vpack.c.bf16 %v425, %v422
  %v528 = vpack.c.bf16 %v433, %v430
  %v529 = vpack.c.bf16 %v441, %v438
  %v530 = vpack.c.bf16 %v449, %v446
  %v531 = vpack.c.bf16 %v457, %v454
  %v532 = vpack.c.bf16 %v465, %v462
  %v533 = vpack.c.bf16 %v473, %v470
  %v534 = vpack.c.bf16 %v481, %v478
  %v535 = vpack.c.bf16 %v489, %v486
  %v536 = vpack.c.bf16 %v497, %v494
  %v537 = vpack.c.bf16 %v505, %v502
  %v538 = vpack.c.bf16 %v513, %v510
  %v539 = vpack.c.bf16 %v521, %v518
  %v556 = vunpack.c.l.b16 %v524
  %v557 = vunpack.c.h.b16 %v524
  %v558 = vunpack.c.l.b16 %v525
  %v559 = vunpack.c.h.b16 %v525
  %v560 = vunpack.c.l.b16 %v526
  %v561 = vunpack.c.h.b16 %v526
  %v562 = vunpack.c.l.b16 %v527
  %v563 = vunpack.c.h.b16 %v527
  %v564 = vunpack.c.l.b16 %v528
  %v565 = vunpack.c.h.b16 %v528
  %v566 = vunpack.c.l.b16 %v529
  %v567 = vunpack.c.h.b16 %v529
  %v568 = vunpack.c.l.b16 %v530
  %v569 = vunpack.c.h.b16 %v530
  %v570 = vunpack.c.l.b16 %v531
  %v571 = vunpack.c.h.b16 %v531
  %v572 = vunpack.c.l.b16 %v532
  %v573 = vunpack.c.h.b16 %v532
  %v574 = vunpack.c.l.b16 %v533
  %v575 = vunpack.c.h.b16 %v533
  %v576 = vunpack.c.l.b16 %v534
  %v577 = vunpack.c.h.b16 %v534
  %v578 = vunpack.c.l.b16 %v535
  %v579 = vunpack.c.h.b16 %v535
  %v580 = vunpack.c.l.b16 %v536
  %v581 = vunpack.c.h.b16 %v536
  %v582 = vunpack.c.l.b16 %v537
  %v583 = vunpack.c.h.b16 %v537
  %v584 = vunpack.c.l.b16 %v538
  %v585 = vunpack.c.h.b16 %v538
  %v586 = vunpack.c.l.b16 %v539
  %v587 = vunpack.c.h.b16 %v539
  %v588 = vpack.c.b16 %v556, %v556
  %v589 = vpack.c.b16 %v557, %v557
  %v590 = vpack.c.b16 %v558, %v558
  %v591 = vpack.c.b16 %v559, %v559
  %v592 = vpack.c.b16 %v560, %v560
  %v593 = vpack.c.b16 %v561, %v561
  %v594 = vpack.c.b16 %v562, %v562
  %v595 = vpack.c.b16 %v563, %v563
  %v596 = vpack.c.b16 %v564, %v564
  %v597 = vpack.c.b16 %v565, %v565
  %v598 = vpack.c.b16 %v566, %v566
  %v599 = vpack.c.b16 %v567, %v567
  %v600 = vpack.c.b16 %v568, %v568
  %v601 = vpack.c.b16 %v569, %v569
  %v602 = vpack.c.b16 %v570, %v570
  %v603 = vpack.c.b16 %v571, %v571
  %v604 = vpack.c.b16 %v572, %v572
  %v605 = vpack.c.b16 %v573, %v573
  %v606 = vpack.c.b16 %v574, %v574
  %v607 = vpack.c.b16 %v575, %v575
  %v608 = vpack.c.b16 %v576, %v576
  %v609 = vpack.c.b16 %v577, %v577
  %v610 = vpack.c.b16 %v578, %v578
  %v611 = vpack.c.b16 %v579, %v579
  %v612 = vpack.c.b16 %v580, %v580
  %v613 = vpack.c.b16 %v581, %v581
  %v614 = vpack.c.b16 %v582, %v582
  %v615 = vpack.c.b16 %v583, %v583
  %v616 = vpack.c.b16 %v584, %v584
  %v617 = vpack.c.b16 %v585, %v585
  %v618 = vpack.c.b16 %v586, %v586
  %v619 = vpack.c.b16 %v587, %v587
  %652 = vst [vmem:[%s3] sm:$0xf] %v588
  %653 = vst [vmem:[%s3 + $0x4] sm:$0xf] %v589
  %654 = vst [vmem:[%s3 + $0x8] sm:$0xf] %v590
  %655 = vst [vmem:[%s3 + $0xc] sm:$0xf] %v591
  %656 = vst [vmem:[%s3 + $0x10] sm:$0xf] %v592
  %657 = vst [vmem:[%s3 + $0x14] sm:$0xf] %v593
  %658 = vst [vmem:[%s3 + $0x18] sm:$0xf] %v594
  %659 = vst [vmem:[%s3 + $0x1c] sm:$0xf] %v595
  %660 = vst [vmem:[%s3 + $0x20] sm:$0xf] %v596
  %661 = vst [vmem:[%s3 + $0x24] sm:$0xf] %v597
  %662 = vst [vmem:[%s3 + $0x28] sm:$0xf] %v598
  %663 = vst [vmem:[%s3 + $0x2c] sm:$0xf] %v599
  %664 = vst [vmem:[%s3 + $0x30] sm:$0xf] %v600
  %665 = vst [vmem:[%s3 + $0x34] sm:$0xf] %v601
  %666 = vst [vmem:[%s3 + $0x38] sm:$0xf] %v602
  %667 = vst [vmem:[%s3 + $0x3c] sm:$0xf] %v603
  %668 = vst [vmem:[%s3 + $0x40] sm:$0xf] %v604
  %669 = vst [vmem:[%s3 + $0x44] sm:$0xf] %v605
  %670 = vst [vmem:[%s3 + $0x48] sm:$0xf] %v606
  %671 = vst [vmem:[%s3 + $0x4c] sm:$0xf] %v607
  %672 = vst [vmem:[%s3 + $0x50] sm:$0xf] %v608
  %673 = vst [vmem:[%s3 + $0x54] sm:$0xf] %v609
  %674 = vst [vmem:[%s3 + $0x58] sm:$0xf] %v610
  %675 = vst [vmem:[%s3 + $0x5c] sm:$0xf] %v611
  %676 = vst [vmem:[%s3 + $0x60] sm:$0xf] %v612
  %677 = vst [vmem:[%s3 + $0x64] sm:$0xf] %v613
  %678 = vst [vmem:[%s3 + $0x68] sm:$0xf] %v614
  %679 = vst [vmem:[%s3 + $0x6c] sm:$0xf] %v615
  %680 = vst [vmem:[%s3 + $0x70] sm:$0xf] %v616
  %681 = vst [vmem:[%s3 + $0x74] sm:$0xf] %v617
  %682 = vst [vmem:[%s3 + $0x78] sm:$0xf] %v618
  %683 = vst [vmem:[%s3 + $0x7c] sm:$0xf] %v619
  %v684 = vadd.f32 %v398, %v401
  %v685 = vadd.f32 %v684, %v406
  %v686 = vadd.f32 %v685, %v409
  %v687 = vadd.f32 %v686, %v414
  %v688 = vadd.f32 %v687, %v417
  %v689 = vadd.f32 %v688, %v422
  %v690 = vadd.f32 %v689, %v425
  %v691 = vadd.f32 %v690, %v430
  %v692 = vadd.f32 %v691, %v433
  %v693 = vadd.f32 %v692, %v438
  %v694 = vadd.f32 %v693, %v441
  %v695 = vadd.f32 %v694, %v446
  %v696 = vadd.f32 %v695, %v449
  %v697 = vadd.f32 %v696, %v454
  %v698 = vadd.f32 %v697, %v457
  %v699 = vadd.f32 %v698, %v462
  %v700 = vadd.f32 %v699, %v465
  %v701 = vadd.f32 %v700, %v470
  %v702 = vadd.f32 %v701, %v473
  %v703 = vadd.f32 %v702, %v478
  %v704 = vadd.f32 %v703, %v481
  %v705 = vadd.f32 %v704, %v486
  %v706 = vadd.f32 %v705, %v489
  %v707 = vadd.f32 %v706, %v494
  %v708 = vadd.f32 %v707, %v497
  %v709 = vadd.f32 %v708, %v502
  %v710 = vadd.f32 %v709, %v505
  %v711 = vadd.f32 %v710, %v510
  %v712 = vadd.f32 %v711, %v513
  %v713 = vadd.f32 %v712, %v518
  %v714 = vadd.f32 %v713, %v521
  %v715 = vrot.slane %v714, 4
  %v716 = vadd.f32 %v714, %v715
  %v717 = vrot.slane %v716, 2
  %v718 = vadd.f32 %v716, %v717
  %v719 = vrot.slane %v718, 1
  %v720 = vadd.f32 %v718, %v719
  %721 = vst [vmem:[%s28] sm:$0x1] %v720
  %v722 = vmul.f32 %v398, %v398
  %v723 = vmul.f32 %v401, %v401
  %v724 = vmul.f32 %v406, %v406
  %v725 = vmul.f32 %v409, %v409
  %v726 = vmul.f32 %v414, %v414
  %v727 = vmul.f32 %v417, %v417
  %v728 = vmul.f32 %v422, %v422
  %v729 = vmul.f32 %v425, %v425
  %v730 = vmul.f32 %v430, %v430
  %v731 = vmul.f32 %v433, %v433
  %v732 = vmul.f32 %v438, %v438
  %v733 = vmul.f32 %v441, %v441
  %v734 = vmul.f32 %v446, %v446
  %v735 = vmul.f32 %v449, %v449
  %v736 = vmul.f32 %v454, %v454
  %v737 = vmul.f32 %v457, %v457
  %v738 = vmul.f32 %v462, %v462
  %v739 = vmul.f32 %v465, %v465
  %v740 = vmul.f32 %v470, %v470
  %v741 = vmul.f32 %v473, %v473
  %v742 = vmul.f32 %v478, %v478
  %v743 = vmul.f32 %v481, %v481
  %v744 = vmul.f32 %v486, %v486
  %v745 = vmul.f32 %v489, %v489
  %v746 = vmul.f32 %v494, %v494
  %v747 = vmul.f32 %v497, %v497
  %v748 = vmul.f32 %v502, %v502
  %v749 = vmul.f32 %v505, %v505
  %v750 = vmul.f32 %v510, %v510
  %v751 = vmul.f32 %v513, %v513
  %v752 = vmul.f32 %v518, %v518
  %v753 = vmul.f32 %v521, %v521
  %v754 = vadd.f32 %v722, %v723
  %v755 = vadd.f32 %v754, %v724
  %v756 = vadd.f32 %v755, %v725
  %v757 = vadd.f32 %v756, %v726
  %v758 = vadd.f32 %v757, %v727
  %v759 = vadd.f32 %v758, %v728
  %v760 = vadd.f32 %v759, %v729
  %v761 = vadd.f32 %v760, %v730
  %v762 = vadd.f32 %v761, %v731
  %v763 = vadd.f32 %v762, %v732
  %v764 = vadd.f32 %v763, %v733
  %v765 = vadd.f32 %v764, %v734
  %v766 = vadd.f32 %v765, %v735
  %v767 = vadd.f32 %v766, %v736
  %v768 = vadd.f32 %v767, %v737
  %v769 = vadd.f32 %v768, %v738
  %v770 = vadd.f32 %v769, %v739
  %v771 = vadd.f32 %v770, %v740
  %v772 = vadd.f32 %v771, %v741
  %v773 = vadd.f32 %v772, %v742
  %v774 = vadd.f32 %v773, %v743
  %v775 = vadd.f32 %v774, %v744
  %v776 = vadd.f32 %v775, %v745
  %v777 = vadd.f32 %v776, %v746
  %v778 = vadd.f32 %v777, %v747
  %v779 = vadd.f32 %v778, %v748
  %v780 = vadd.f32 %v779, %v749
  %v781 = vadd.f32 %v780, %v750
  %v782 = vadd.f32 %v781, %v751
  %v783 = vadd.f32 %v782, %v752
  %v784 = vadd.f32 %v783, %v753
  %v785 = vrot.slane %v784, 4
  %v786 = vadd.f32 %v784, %v785
  %v787 = vrot.slane %v786, 2
  %v788 = vadd.f32 %v786, %v787
  %v789 = vrot.slane %v788, 1
  %v790 = vadd.f32 %v788, %v789
  %791 = vst [vmem:[%s33] sm:$0x1] %v790
  %s792 = sadd.s32 0, 0
  %p793 = scmp.lt.s32.totalorder %s792, 0
  %s794 = scalar_select %p793, %s792, 0
  %s795 = scalar_lea.vmem %s4, %s794
  %s796 = sadd.s32 0, 0
  %p797 = scmp.lt.s32.totalorder %s796, 0
  %s798 = scalar_select %p797, %s796, 0
  %s799 = scalar_lea.vmem %s5, %s798
  // Predicated region
  $region14: #{run_encoder.14} parent=0 // pred_check
    _
  $region15: #{run_encoder.14} parent=0 // pred_check_branch
    %801 = sbr.rel (0) target = $region17
  $region16: #{run_encoder.14} parent=0 // pred_region
    _
  $region17: #{run_encoder.14} parent=0 // pred_fallthru
    _
  // Predicated region
  $region18: #{run_encoder.14} parent=0 // pred_check
    _
  $region19: #{run_encoder.14} parent=0 // pred_check_branch
    %803 = sbr.rel (0) target = $region21
  $region20: #{run_encoder.14} parent=0 // pred_region
    %s804 = sadd.s32 0, 0
  $region21: #{run_encoder.14} parent=0 // pred_fallthru
    _
  // Predicated region
  $region22: #{run_encoder.14} parent=0 // pred_check
    _
  $region23: #{run_encoder.14} parent=0 // pred_check_branch
    %806 = sbr.rel (0) target = $region25
  $region24: #{run_encoder.14} parent=0 // pred_region
    %s807 = sadd.s32 0, 0
  $region25: #{run_encoder.14} parent=0 // pred_fallthru
    _
  // Predicated region
  $region26: #{run_encoder.14} parent=0 // pred_check
    _
  $region27: #{run_encoder.14} parent=0 // pred_check_branch
    %809 = sbr.rel (0) target = $region29
  $region28: #{run_encoder.14} parent=0 // pred_region
    _
  $region29: #{run_encoder.14} parent=0 // pred_fallthru
    _
  // Predicated region
  $region30: #{run_encoder.14} parent=0 // pred_check
    _
  $region31: #{run_encoder.14} parent=0 // pred_check_branch
    %811 = sbr.rel (0) target = $region33
  $region32: #{run_encoder.14} parent=0 // pred_region
    %s812 = sadd.s32 0, 0
    %p813 = scmp.lt.s32.totalorder %s812, 0
    %s814 = scalar_select %p813, %s812, 0
    %s815 = scalar_lea.vmem %s4, %s814
  $region33: #{run_encoder.14} parent=0 // pred_fallthru
    _
  // Predicated region
  $region34: #{run_encoder.14} parent=0 // pred_check
    _
  $region35: #{run_encoder.14} parent=0 // pred_check_branch
    %817 = sbr.rel (0) target = $region37
  $region36: #{run_encoder.14} parent=0 // pred_region
    %s818 = sadd.s32 0, 0
    %p819 = scmp.lt.s32.totalorder %s818, 0
    %s820 = scalar_select %p819, %s818, 0
    %s821 = scalar_lea.vmem %s5, %s820
  $region37: #{run_encoder.14} parent=0 // pred_fallthru
    _

// kernel: run_encoder.16
$region0: #{run_encoder.16}
  #allocation0 [shape = 'u32[]', space=smem, size = 0x4, offset = 0x4, fixed_abs, tag = 'smem constant byte address 0x4 - core index']
  #allocation1 [shape = 'u32[144,128]{1,0:T(1,128)}', space=vmem, size = 0x12000, scoped, tag = 'internal scratch']
  %s0 = inlined_call_operand.vmem [shape: bf16[1,64,128], index: 0, kind: input, shape index: {}]
  %s1 = inlined_call_operand.vmem [shape: bf16[128,128], index: 1, kind: input, shape index: {}]
  %s2 = inlined_call_operand.vmem [shape: f32[1,128], index: 2, kind: input, shape index: {}]
  %s3 = inlined_call_operand.vmem [shape: bf16[1,64,128], index: 3, kind: output, shape index: {0}]
  %s4 = inlined_call_operand.vmem [shape: f32[1,1,128], index: 4, kind: output, shape index: {1}]
  %s5 = inlined_call_operand.vmem [shape: f32[1,1,128], index: 5, kind: output, shape index: {2}]
  %6 = xla_tuple %s3, %s4, %s5
  %s7 = sld [smem:[#allocation0]]
  $region38: #{run_encoder.16} parent=0
    _
  %s9 = ssub.s32 1, %s7
  %s10 = scalar_select 0, %s9, %s7
  // Predicated region
  $region2: #{run_encoder.16} parent=0 // pred_check
    _
  $region3: #{run_encoder.16} parent=0 // pred_check_branch
    %12 = sbr.rel (0) target = $region5
  $region4: #{run_encoder.16} parent=0 // pred_region
    _
  $region5: #{run_encoder.16} parent=0 // pred_fallthru
    _
  // Predicated region
  $region6: #{run_encoder.16} parent=0 // pred_check
    _
  $region7: #{run_encoder.16} parent=0 // pred_check_branch
    %14 = sbr.rel (0) target = $region9
  $region8: #{run_encoder.16} parent=0 // pred_region
    _
  $region9: #{run_encoder.16} parent=0 // pred_fallthru
    _
  // Predicated region
  $region10: #{run_encoder.16} parent=0 // pred_check
    _
  $region11: #{run_encoder.16} parent=0 // pred_check_branch
    %16 = sbr.rel (0) target = $region13
  $region12: #{run_encoder.16} parent=0 // pred_region
    _
  $region13: #{run_encoder.16} parent=0 // pred_fallthru
    _
  %s17 = sadd.s32 0, 0
  %p18 = scmp.lt.s32.totalorder %s17, 0
  %s19 = scalar_select %p18, %s17, 0
  %s20 = scalar_lea.vmem %s4, %s19
  %s21 = sadd.s32 0, 0
  %p22 = scmp.lt.s32.totalorder %s21, 0
  %s23 = scalar_select %p22, %s21, 0
  %s24 = scalar_lea.vmem %s5, %s23
  %s25 = sadd.s32 0, 0
  %p26 = scmp.lt.s32.totalorder %s25, 0
  %s27 = scalar_select %p26, %s25, 0
  %s28 = scalar_lea.vmem %s4, %s27
  %s29 = sadd.s32 0, 0
  %s30 = sadd.s32 0, 0
  %p31 = scmp.lt.s32.totalorder %s30, 0
  %s32 = scalar_select %p31, %s30, 0
  %s33 = scalar_lea.vmem %s5, %s32
  %s34 = sadd.s32 0, 0
  %v36 = vld [vmem:[%s0] sm:$0xf]
  %v37 = vld [vmem:[%s0 + $0x4] sm:$0xf]
  %v38 = vld [vmem:[%s0 + $0x8] sm:$0xf]
  %v39 = vld [vmem:[%s0 + $0xc] sm:$0xf]
  %v40 = vld [vmem:[%s0 + $0x10] sm:$0xf]
  %v41 = vld [vmem:[%s0 + $0x14] sm:$0xf]
  %v42 = vld [vmem:[%s0 + $0x18] sm:$0xf]
  %v43 = vld [vmem:[%s0 + $0x1c] sm:$0xf]
  %v44 = vld [vmem:[%s1] sm:$0xf]
  %v45 = vld [vmem:[%s1 + $0x4] sm:$0xf]
  %v46 = vld [vmem:[%s1 + $0x8] sm:$0xf]
  %v47 = vld [vmem:[%s1 + $0xc] sm:$0xf]
  %v48 = vld [vmem:[%s1 + $0x10] sm:$0xf]
  %v49 = vld [vmem:[%s1 + $0x14] sm:$0xf]
  %v50 = vld [vmem:[%s1 + $0x18] sm:$0xf]
  %v51 = vld [vmem:[%s1 + $0x1c] sm:$0xf]
  %v52 = vld [vmem:[%s1 + $0x20] sm:$0xf]
  %v53 = vld [vmem:[%s1 + $0x24] sm:$0xf]
  %v54 = vld [vmem:[%s1 + $0x28] sm:$0xf]
  %v55 = vld [vmem:[%s1 + $0x2c] sm:$0xf]
  %v56 = vld [vmem:[%s1 + $0x30] sm:$0xf]
  %v57 = vld [vmem:[%s1 + $0x34] sm:$0xf]
  %v58 = vld [vmem:[%s1 + $0x38] sm:$0xf]
  %v59 = vld [vmem:[%s1 + $0x3c] sm:$0xf]
  %v60 = vld [vmem:[%s2] sm:$0x1]
  %v62 = vlaneseq
  %v63 = vshrl.u32 %v62, 7
  %v64 = vsub.s32 0, %v63
  %v65 = vrot.slane %v60, %v64
  %v75 = vunpack.c.l.b16 %v36
  %v76 = vunpack.c.l.b16 %v37
  %v77 = vunpack.c.l.b16 %v38
  %v78 = vunpack.c.l.b16 %v39
  %v79 = vunpack.c.l.b16 %v40
  %v80 = vunpack.c.l.b16 %v41
  %v81 = vunpack.c.l.b16 %v42
  %v82 = vunpack.c.l.b16 %v43
  %v83 = vpack.c.b16 %v76, %v75
  %v84 = vpack.c.b16 %v78, %v77
  %v85 = vpack.c.b16 %v80, %v79
  %v86 = vpack.c.b16 %v82, %v81
  %v107 = vunpack.c.l.b16 %v44
  %v108 = vunpack.c.l.b16 %v45
  %v109 = vunpack.c.l.b16 %v46
  %v110 = vunpack.c.l.b16 %v47
  %v111 = vunpack.c.l.b16 %v48
  %v112 = vunpack.c.l.b16 %v49
  %v113 = vunpack.c.l.b16 %v50
  %v114 = vunpack.c.l.b16 %v51
  %v115 = vunpack.c.l.b16 %v52
  %v116 = vunpack.c.l.b16 %v53
  %v117 = vunpack.c.l.b16 %v54
  %v118 = vunpack.c.l.b16 %v55
  %v119 = vunpack.c.l.b16 %v56
  %v120 = vunpack.c.l.b16 %v57
  %v121 = vunpack.c.l.b16 %v58
  %v122 = vunpack.c.l.b16 %v59
  %v123 = vpack.c.b16 %v108, %v107
  %v124 = vpack.c.b16 %v110, %v109
  %v125 = vpack.c.b16 %v112, %v111
  %v126 = vpack.c.b16 %v114, %v113
  %v127 = vpack.c.b16 %v116, %v115
  %v128 = vpack.c.b16 %v118, %v117
  %v129 = vpack.c.b16 %v120, %v119
  %v130 = vpack.c.b16 %v122, %v121
  %139 = vmatprep.subr.bf16.mxu0 0
  %140 = vmatpush1.bf16.msra.mxu0 %v130
  %141 = vmatprep.subr.bf16.mxu0 0
  %142 = vmatpush1.bf16.msra.mxu0 %v129
  %143 = vmatprep.subr.bf16.mxu0 0
  %144 = vmatpush1.bf16.msra.mxu0 %v128
  %145 = vmatprep.subr.bf16.mxu0 0
  %146 = vmatpush1.bf16.msra.mxu0 %v127
  %147 = vmatprep.subr.bf16.mxu0 0
  %148 = vmatpush1.bf16.msra.mxu0 %v126
  %149 = vmatprep.subr.bf16.mxu0 0
  %150 = vmatpush1.bf16.msra.mxu0 %v125
  %151 = vmatprep.subr.bf16.mxu0 0
  %152 = vmatpush1.bf16.msra.mxu0 %v124
  %153 = vmatprep.subr.bf16.mxu0 0
  %154 = vmatpush1.bf16.msra.mxu0 %v123
  %155 = vmatprep.subr.bf16.mxu0 0
  %156 = vmatpush2.bf16.msra.mxu0 0
  %157 = vmatprep.subr.bf16.mxu0 0
  %158 = vmatpush2.bf16.msra.mxu0 0
  %159 = vmatprep.subr.bf16.mxu0 0
  %160 = vmatpush2.bf16.msra.mxu0 0
  %161 = vmatprep.subr.bf16.mxu0 0
  %162 = vmatpush2.bf16.msra.mxu0 0
  %163 = vmatprep.subr.bf16.mxu0 0
  %164 = vmatpush2.bf16.msra.mxu0 0
  %165 = vmatprep.subr.bf16.mxu0 0
  %166 = vmatpush2.bf16.msra.mxu0 0
  %167 = vmatprep.subr.bf16.mxu0 0
  %168 = vmatpush2.bf16.msra.mxu0 0
  %169 = vmatprep.subr.bf16.mxu0 0
  %170 = vmatpush2.bf16.msra.mxu0 0
  %171 = vmatprep.mubr.bf16.mxu0 0
  %172 = vmatmul.mubr.bf16.gmra.mxu0 %v83
  %v173 = vpop.f32.mrf.mxu0
  %v174 = vadd.f32 %v65, %v173
  %v175 = vpop.f32.mrf.mxu0
  %v176 = vpop.f32.mrf.mxu0
  %v177 = vadd.f32 %v65, %v176
  %v178 = vpop.f32.mrf.mxu0
  %179 = vmatprep.mubr.bf16.mxu0 0
  %180 = vmatmul.mubr.bf16.gmra.mxu0 %v84
  %v181 = vpop.f32.mrf.mxu0
  %v182 = vadd.f32 %v65, %v181
  %v183 = vpop.f32.mrf.mxu0
  %v184 = vpop.f32.mrf.mxu0
  %v185 = vadd.f32 %v65, %v184
  %v186 = vpop.f32.mrf.mxu0
  %187 = vmatprep.mubr.bf16.mxu0 0
  %188 = vmatmul.mubr.bf16.gmra.mxu0 %v85
  %v189 = vpop.f32.mrf.mxu0
  %v190 = vadd.f32 %v65, %v189
  %v191 = vpop.f32.mrf.mxu0
  %v192 = vpop.f32.mrf.mxu0
  %v193 = vadd.f32 %v65, %v192
  %v194 = vpop.f32.mrf.mxu0
  %195 = vmatprep.mubr.bf16.mxu0 0
  %196 = vmatmul.mubr.bf16.gmra.mxu0 %v86
  %v197 = vpop.f32.mrf.mxu0
  %v198 = vadd.f32 %v65, %v197
  %v199 = vpop.f32.mrf.mxu0
  %v200 = vpop.f32.mrf.mxu0
  %v201 = vadd.f32 %v65, %v200
  %v202 = vpop.f32.mrf.mxu0
  %203 = vdwg.mxu0
  %v204 = vpack.c.bf16 %v177, %v174
  %v205 = vpack.c.bf16 %v185, %v182
  %v206 = vpack.c.bf16 %v193, %v190
  %v207 = vpack.c.bf16 %v201, %v198
  %v212 = vunpack.c.l.b16 %v204
  %v213 = vunpack.c.h.b16 %v204
  %v214 = vunpack.c.l.b16 %v205
  %v215 = vunpack.c.h.b16 %v205
  %v216 = vunpack.c.l.b16 %v206
  %v217 = vunpack.c.h.b16 %v206
  %v218 = vunpack.c.l.b16 %v207
  %v219 = vunpack.c.h.b16 %v207
  %v220 = vpack.c.b16 %v212, %v212
  %v221 = vpack.c.b16 %v213, %v213
  %v222 = vpack.c.b16 %v214, %v214
  %v223 = vpack.c.b16 %v215, %v215
  %v224 = vpack.c.b16 %v216, %v216
  %v225 = vpack.c.b16 %v217, %v217
  %v226 = vpack.c.b16 %v218, %v218
  %v227 = vpack.c.b16 %v219, %v219
  %236 = vst [vmem:[%s3] sm:$0xf] %v220
  %237 = vst [vmem:[%s3 + $0x4] sm:$0xf] %v221
  %238 = vst [vmem:[%s3 + $0x8] sm:$0xf] %v222
  %239 = vst [vmem:[%s3 + $0xc] sm:$0xf] %v223
  %240 = vst [vmem:[%s3 + $0x10] sm:$0xf] %v224
  %241 = vst [vmem:[%s3 + $0x14] sm:$0xf] %v225
  %242 = vst [vmem:[%s3 + $0x18] sm:$0xf] %v226
  %243 = vst [vmem:[%s3 + $0x1c] sm:$0xf] %v227
  %v244 = vadd.f32 %v174, %v177
  %v245 = vadd.f32 %v244, %v182
  %v246 = vadd.f32 %v245, %v185
  %v247 = vadd.f32 %v246, %v190
  %v248 = vadd.f32 %v247, %v193
  %v249 = vadd.f32 %v248, %v198
  %v250 = vadd.f32 %v249, %v201
  %v251 = vrot.slane %v250, 4
  %v252 = vadd.f32 %v250, %v251
  %v253 = vrot.slane %v252, 2
  %v254 = vadd.f32 %v252, %v253
  %v255 = vrot.slane %v254, 1
  %v256 = vadd.f32 %v254, %v255
  %257 = vst [vmem:[%s28] sm:$0x1] %v256
  %v258 = vmul.f32 %v174, %v174
  %v259 = vmul.f32 %v177, %v177
  %v260 = vmul.f32 %v182, %v182
  %v261 = vmul.f32 %v185, %v185
  %v262 = vmul.f32 %v190, %v190
  %v263 = vmul.f32 %v193, %v193
  %v264 = vmul.f32 %v198, %v198
  %v265 = vmul.f32 %v201, %v201
  %v266 = vadd.f32 %v258, %v259
  %v267 = vadd.f32 %v266, %v260
  %v268 = vadd.f32 %v267, %v261
  %v269 = vadd.f32 %v268, %v262
  %v270 = vadd.f32 %v269, %v263
  %v271 = vadd.f32 %v270, %v264
  %v272 = vadd.f32 %v271, %v265
  %v273 = vrot.slane %v272, 4
  %v274 = vadd.f32 %v272, %v273
  %v275 = vrot.slane %v274, 2
  %v276 = vadd.f32 %v274, %v275
  %v277 = vrot.slane %v276, 1
  %v278 = vadd.f32 %v276, %v277
  %279 = vst [vmem:[%s33] sm:$0x1] %v278
  %s280 = sadd.s32 0, 0
  %p281 = scmp.lt.s32.totalorder %s280, 0
  %s282 = scalar_select %p281, %s280, 0
  %s283 = scalar_lea.vmem %s4, %s282
  %s284 = sadd.s32 0, 0
  %p285 = scmp.lt.s32.totalorder %s284, 0
  %s286 = scalar_select %p285, %s284, 0
  %s287 = scalar_lea.vmem %s5, %s286
  // Predicated region
  $region14: #{run_encoder.16} parent=0 // pred_check
    _
  $region15: #{run_encoder.16} parent=0 // pred_check_branch
    %289 = sbr.rel (0) target = $region17
  $region16: #{run_encoder.16} parent=0 // pred_region
    _
  $region17: #{run_encoder.16} parent=0 // pred_fallthru
    _
  // Predicated region
  $region18: #{run_encoder.16} parent=0 // pred_check
    _
  $region19: #{run_encoder.16} parent=0 // pred_check_branch
    %291 = sbr.rel (0) target = $region21
  $region20: #{run_encoder.16} parent=0 // pred_region
    %s292 = sadd.s32 0, 0
  $region21: #{run_encoder.16} parent=0 // pred_fallthru
    _
  // Predicated region
  $region22: #{run_encoder.16} parent=0 // pred_check
    _
  $region23: #{run_encoder.16} parent=0 // pred_check_branch
    %294 = sbr.rel (0) target = $region25
  $region24: #{run_encoder.16} parent=0 // pred_region
    %s295 = sadd.s32 0, 0
  $region25: #{run_encoder.16} parent=0 // pred_fallthru
    _
  // Predicated region
  $region26: #{run_encoder.16} parent=0 // pred_check
    _
  $region27: #{run_encoder.16} parent=0 // pred_check_branch
    %297 = sbr.rel (0) target = $region29
  $region28: #{run_encoder.16} parent=0 // pred_region
    _
  $region29: #{run_encoder.16} parent=0 // pred_fallthru
    _
  // Predicated region
  $region30: #{run_encoder.16} parent=0 // pred_check
    _
  $region31: #{run_encoder.16} parent=0 // pred_check_branch
    %299 = sbr.rel (0) target = $region33
  $region32: #{run_encoder.16} parent=0 // pred_region
    %s300 = sadd.s32 0, 0
    %p301 = scmp.lt.s32.totalorder %s300, 0
    %s302 = scalar_select %p301, %s300, 0
    %s303 = scalar_lea.vmem %s4, %s302
  $region33: #{run_encoder.16} parent=0 // pred_fallthru
    _
  // Predicated region
  $region34: #{run_encoder.16} parent=0 // pred_check
    _
  $region35: #{run_encoder.16} parent=0 // pred_check_branch
    %305 = sbr.rel (0) target = $region37
  $region36: #{run_encoder.16} parent=0 // pred_region
    %s306 = sadd.s32 0, 0
    %p307 = scmp.lt.s32.totalorder %s306, 0
    %s308 = scalar_select %p307, %s306, 0
    %s309 = scalar_lea.vmem %s5, %s308
  $region37: #{run_encoder.16} parent=0 // pred_fallthru
    _

// kernel: run_encoder.17
$region0: #{run_encoder.17}
  #allocation0 [shape = 'u32[]', space=smem, size = 0x4, offset = 0x4, fixed_abs, tag = 'smem constant byte address 0x4 - core index']
  #allocation1 [shape = 'u32[144,128]{1,0:T(1,128)}', space=vmem, size = 0x12000, scoped, tag = 'internal scratch']
  %s0 = inlined_call_operand.vmem [shape: bf16[1,64,128], index: 0, kind: input, shape index: {}]
  %s1 = inlined_call_operand.vmem [shape: f32[1,1,128], index: 1, kind: input, shape index: {}]
  %s2 = inlined_call_operand.vmem [shape: f32[1,1,128], index: 2, kind: input, shape index: {}]
  %s3 = inlined_call_operand.vmem [shape: bf16[1,64,128], index: 3, kind: output, shape index: {}]
  %s4 = sld [smem:[#allocation0]]
  $region22: #{run_encoder.17} parent=0
    _
  %s6 = ssub.s32 1, %s4
  %s7 = scalar_select 0, %s6, %s4
  // Predicated region
  $region2: #{run_encoder.17} parent=0 // pred_check
    _
  $region3: #{run_encoder.17} parent=0 // pred_check_branch
    %9 = sbr.rel (0) target = $region5
  $region4: #{run_encoder.17} parent=0 // pred_region
    _
  $region5: #{run_encoder.17} parent=0 // pred_fallthru
    _
  // Predicated region
  $region6: #{run_encoder.17} parent=0 // pred_check
    _
  $region7: #{run_encoder.17} parent=0 // pred_check_branch
    %11 = sbr.rel (0) target = $region9
  $region8: #{run_encoder.17} parent=0 // pred_region
    _
  $region9: #{run_encoder.17} parent=0 // pred_fallthru
    _
  // Predicated region
  $region10: #{run_encoder.17} parent=0 // pred_check
    _
  $region11: #{run_encoder.17} parent=0 // pred_check_branch
    %13 = sbr.rel (0) target = $region13
  $region12: #{run_encoder.17} parent=0 // pred_region
    _
  $region13: #{run_encoder.17} parent=0 // pred_fallthru
    _
  %v14 = vld [vmem:[%s0] sm:$0xf]
  %v15 = vld [vmem:[%s0 + $0x4] sm:$0xf]
  %v16 = vld [vmem:[%s0 + $0x8] sm:$0xf]
  %v17 = vld [vmem:[%s0 + $0xc] sm:$0xf]
  %v18 = vld [vmem:[%s0 + $0x10] sm:$0xf]
  %v19 = vld [vmem:[%s0 + $0x14] sm:$0xf]
  %v20 = vld [vmem:[%s0 + $0x18] sm:$0xf]
  %v21 = vld [vmem:[%s0 + $0x1c] sm:$0xf]
  %v22 = vunpack.c.l.bf16 %v14
  %v23 = vunpack.c.l.bf16 %v15
  %v24 = vunpack.c.l.bf16 %v16
  %v25 = vunpack.c.l.bf16 %v17
  %v26 = vunpack.c.l.bf16 %v18
  %v27 = vunpack.c.l.bf16 %v19
  %v28 = vunpack.c.l.bf16 %v20
  %v29 = vunpack.c.l.bf16 %v21
  %v30 = vld [vmem:[%s1] sm:$0x1]
  %v32 = vlaneseq
  %v33 = vshrl.u32 %v32, 7
  %v34 = vsub.s32 0, %v33
  %v35 = vrot.slane %v30, %v34
  %v37 = vmul.f32 %v22, %v35
  %v38 = vmul.f32 %v23, %v35
  %v39 = vmul.f32 %v24, %v35
  %v40 = vmul.f32 %v25, %v35
  %v41 = vmul.f32 %v26, %v35
  %v42 = vmul.f32 %v27, %v35
  %v43 = vmul.f32 %v28, %v35
  %v44 = vmul.f32 %v29, %v35
  %v45 = vld [vmem:[%s2] sm:$0x1]
  %v47 = vlaneseq
  %v48 = vshrl.u32 %v47, 7
  %v49 = vsub.s32 0, %v48
  %v50 = vrot.slane %v45, %v49
  %v52 = vadd.f32 %v37, %v50
  %v53 = vadd.f32 %v38, %v50
  %v54 = vadd.f32 %v39, %v50
  %v55 = vadd.f32 %v40, %v50
  %v56 = vadd.f32 %v41, %v50
  %v57 = vadd.f32 %v42, %v50
  %v58 = vadd.f32 %v43, %v50
  %v59 = vadd.f32 %v44, %v50
  %v60 = vmax.f32 %v52, 0.0
  %v61 = vmax.f32 %v53, 0.0
  %v62 = vmax.f32 %v54, 0.0
  %v63 = vmax.f32 %v55, 0.0
  %v64 = vmax.f32 %v56, 0.0
  %v65 = vmax.f32 %v57, 0.0
  %v66 = vmax.f32 %v58, 0.0
  %v67 = vmax.f32 %v59, 0.0
  %v68 = vpack.c.bf16 %v61, %v60
  %v69 = vpack.c.bf16 %v63, %v62
  %v70 = vpack.c.bf16 %v65, %v64
  %v71 = vpack.c.bf16 %v67, %v66
  %v76 = vunpack.c.l.b16 %v68
  %v77 = vunpack.c.h.b16 %v68
  %v78 = vunpack.c.l.b16 %v69
  %v79 = vunpack.c.h.b16 %v69
  %v80 = vunpack.c.l.b16 %v70
  %v81 = vunpack.c.h.b16 %v70
  %v82 = vunpack.c.l.b16 %v71
  %v83 = vunpack.c.h.b16 %v71
  %v84 = vpack.c.b16 %v76, %v76
  %v85 = vpack.c.b16 %v77, %v77
  %v86 = vpack.c.b16 %v78, %v78
  %v87 = vpack.c.b16 %v79, %v79
  %v88 = vpack.c.b16 %v80, %v80
  %v89 = vpack.c.b16 %v81, %v81
  %v90 = vpack.c.b16 %v82, %v82
  %v91 = vpack.c.b16 %v83, %v83
  %100 = vst [vmem:[%s3] sm:$0xf] %v84
  %101 = vst [vmem:[%s3 + $0x4] sm:$0xf] %v85
  %102 = vst [vmem:[%s3 + $0x8] sm:$0xf] %v86
  %103 = vst [vmem:[%s3 + $0xc] sm:$0xf] %v87
  %104 = vst [vmem:[%s3 + $0x10] sm:$0xf] %v88
  %105 = vst [vmem:[%s3 + $0x14] sm:$0xf] %v89
  %106 = vst [vmem:[%s3 + $0x18] sm:$0xf] %v90
  %107 = vst [vmem:[%s3 + $0x1c] sm:$0xf] %v91
  // Predicated region
  $region14: #{run_encoder.17} parent=0 // pred_check
    _
  $region15: #{run_encoder.17} parent=0 // pred_check_branch
    %109 = sbr.rel (0) target = $region17
  $region16: #{run_encoder.17} parent=0 // pred_region
    _
  $region17: #{run_encoder.17} parent=0 // pred_fallthru
    _
  // Predicated region
  $region18: #{run_encoder.17} parent=0 // pred_check
    _
  $region19: #{run_encoder.17} parent=0 // pred_check_branch
    %111 = sbr.rel (0) target = $region21
  $region20: #{run_encoder.17} parent=0 // pred_region
    _
  $region21: #{run_encoder.17} parent=0 // pred_fallthru
    _

// kernel: run_encoder.18
$region0: #{run_encoder.18}
  #allocation0 [shape = 'u32[]', space=smem, size = 0x4, offset = 0x4, fixed_abs, tag = 'smem constant byte address 0x4 - core index']
  #allocation1 [shape = 'u32[144,128]{1,0:T(1,128)}', space=vmem, size = 0x12000, scoped, tag = 'internal scratch']
  %s0 = inlined_call_operand.vmem [shape: bf16[1,16,256], index: 0, kind: input, shape index: {}]
  %s1 = inlined_call_operand.vmem [shape: bf16[256,128], index: 1, kind: input, shape index: {}]
  %s2 = inlined_call_operand.vmem [shape: f32[1,128], index: 2, kind: input, shape index: {}]
  %s3 = inlined_call_operand.vmem [shape: bf16[1,16,128], index: 3, kind: output, shape index: {0}]
  %s4 = inlined_call_operand.vmem [shape: f32[1,1,128], index: 4, kind: output, shape index: {1}]
  %s5 = inlined_call_operand.vmem [shape: f32[1,1,128], index: 5, kind: output, shape index: {2}]
  %6 = xla_tuple %s3, %s4, %s5
  %s7 = sld [smem:[#allocation0]]
  $region38: #{run_encoder.18} parent=0
    _
  %s9 = ssub.s32 1, %s7
  %s10 = scalar_select 0, %s9, %s7
  // Predicated region
  $region2: #{run_encoder.18} parent=0 // pred_check
    _
  $region3: #{run_encoder.18} parent=0 // pred_check_branch
    %12 = sbr.rel (0) target = $region5
  $region4: #{run_encoder.18} parent=0 // pred_region
    _
  $region5: #{run_encoder.18} parent=0 // pred_fallthru
    _
  // Predicated region
  $region6: #{run_encoder.18} parent=0 // pred_check
    _
  $region7: #{run_encoder.18} parent=0 // pred_check_branch
    %14 = sbr.rel (0) target = $region9
  $region8: #{run_encoder.18} parent=0 // pred_region
    _
  $region9: #{run_encoder.18} parent=0 // pred_fallthru
    _
  // Predicated region
  $region10: #{run_encoder.18} parent=0 // pred_check
    _
  $region11: #{run_encoder.18} parent=0 // pred_check_branch
    %16 = sbr.rel (0) target = $region13
  $region12: #{run_encoder.18} parent=0 // pred_region
    _
  $region13: #{run_encoder.18} parent=0 // pred_fallthru
    _
  %s17 = sadd.s32 0, 0
  %p18 = scmp.lt.s32.totalorder %s17, 0
  %s19 = scalar_select %p18, %s17, 0
  %s20 = scalar_lea.vmem %s4, %s19
  %s21 = sadd.s32 0, 0
  %p22 = scmp.lt.s32.totalorder %s21, 0
  %s23 = scalar_select %p22, %s21, 0
  %s24 = scalar_lea.vmem %s5, %s23
  %s25 = sadd.s32 0, 0
  %p26 = scmp.lt.s32.totalorder %s25, 0
  %s27 = scalar_select %p26, %s25, 0
  %s28 = scalar_lea.vmem %s4, %s27
  %s29 = sadd.s32 0, 0
  %s30 = sadd.s32 0, 0
  %p31 = scmp.lt.s32.totalorder %s30, 0
  %s32 = scalar_select %p31, %s30, 0
  %s33 = scalar_lea.vmem %s5, %s32
  %s34 = sadd.s32 0, 0
  %v36 = vld [vmem:[%s0] sm:$0xff]
  %v37 = vld [vmem:[%s0 + $0x8] sm:$0xff]
  %v38 = vld [vmem:[%s1] sm:$0xf]
  %v39 = vld [vmem:[%s1 + $0x4] sm:$0xf]
  %v40 = vld [vmem:[%s1 + $0x8] sm:$0xf]
  %v41 = vld [vmem:[%s1 + $0xc] sm:$0xf]
  %v42 = vld [vmem:[%s1 + $0x10] sm:$0xf]
  %v43 = vld [vmem:[%s1 + $0x14] sm:$0xf]
  %v44 = vld [vmem:[%s1 + $0x18] sm:$0xf]
  %v45 = vld [vmem:[%s1 + $0x1c] sm:$0xf]
  %v46 = vld [vmem:[%s1 + $0x20] sm:$0xf]
  %v47 = vld [vmem:[%s1 + $0x24] sm:$0xf]
  %v48 = vld [vmem:[%s1 + $0x28] sm:$0xf]
  %v49 = vld [vmem:[%s1 + $0x2c] sm:$0xf]
  %v50 = vld [vmem:[%s1 + $0x30] sm:$0xf]
  %v51 = vld [vmem:[%s1 + $0x34] sm:$0xf]
  %v52 = vld [vmem:[%s1 + $0x38] sm:$0xf]
  %v53 = vld [vmem:[%s1 + $0x3c] sm:$0xf]
  %v54 = vld [vmem:[%s1 + $0x40] sm:$0xf]
  %v55 = vld [vmem:[%s1 + $0x44] sm:$0xf]
  %v56 = vld [vmem:[%s1 + $0x48] sm:$0xf]
  %v57 = vld [vmem:[%s1 + $0x4c] sm:$0xf]
  %v58 = vld [vmem:[%s1 + $0x50] sm:$0xf]
  %v59 = vld [vmem:[%s1 + $0x54] sm:$0xf]
  %v60 = vld [vmem:[%s1 + $0x58] sm:$0xf]
  %v61 = vld [vmem:[%s1 + $0x5c] sm:$0xf]
  %v62 = vld [vmem:[%s1 + $0x60] sm:$0xf]
  %v63 = vld [vmem:[%s1 + $0x64] sm:$0xf]
  %v64 = vld [vmem:[%s1 + $0x68] sm:$0xf]
  %v65 = vld [vmem:[%s1 + $0x6c] sm:$0xf]
  %v66 = vld [vmem:[%s1 + $0x70] sm:$0xf]
  %v67 = vld [vmem:[%s1 + $0x74] sm:$0xf]
  %v68 = vld [vmem:[%s1 + $0x78] sm:$0xf]
  %v69 = vld [vmem:[%s1 + $0x7c] sm:$0xf]
  %v70 = vld [vmem:[%s2] sm:$0x1]
  %v72 = vlaneseq
  %v73 = vshrl.u32 %v72, 7
  %v74 = vsub.s32 0, %v73
  %v75 = vrot.slane %v70, %v74
  %v79 = vunpack.c.l.b16 %v36
  %v80 = vunpack.c.h.b16 %v36
  %v81 = vunpack.c.l.b16 %v37
  %v82 = vunpack.c.h.b16 %v37
  %v83 = vpack.c.b16 %v81, %v79
  %v84 = vpack.c.b16 %v82, %v80
  %v119 = vunpack.c.l.b16 %v38
  %v120 = vunpack.c.l.b16 %v39
  %v121 = vunpack.c.l.b16 %v40
  %v122 = vunpack.c.l.b16 %v41
  %v123 = vunpack.c.l.b16 %v42
  %v124 = vunpack.c.l.b16 %v43
  %v125 = vunpack.c.l.b16 %v44
  %v126 = vunpack.c.l.b16 %v45
  %v127 = vunpack.c.l.b16 %v46
  %v128 = vunpack.c.l.b16 %v47
  %v129 = vunpack.c.l.b16 %v48
  %v130 = vunpack.c.l.b16 %v49
  %v131 = vunpack.c.l.b16 %v50
  %v132 = vunpack.c.l.b16 %v51
  %v133 = vunpack.c.l.b16 %v52
  %v134 = vunpack.c.l.b16 %v53
  %v135 = vunpack.c.l.b16 %v54
  %v136 = vunpack.c.l.b16 %v55
  %v137 = vunpack.c.l.b16 %v56
  %v138 = vunpack.c.l.b16 %v57
  %v139 = vunpack.c.l.b16 %v58
  %v140 = vunpack.c.l.b16 %v59
  %v141 = vunpack.c.l.b16 %v60
  %v142 = vunpack.c.l.b16 %v61
  %v143 = vunpack.c.l.b16 %v62
  %v144 = vunpack.c.l.b16 %v63
  %v145 = vunpack.c.l.b16 %v64
  %v146 = vunpack.c.l.b16 %v65
  %v147 = vunpack.c.l.b16 %v66
  %v148 = vunpack.c.l.b16 %v67
  %v149 = vunpack.c.l.b16 %v68
  %v150 = vunpack.c.l.b16 %v69
  %v151 = vpack.c.b16 %v120, %v119
  %v152 = vpack.c.b16 %v122, %v121
  %v153 = vpack.c.b16 %v124, %v123
  %v154 = vpack.c.b16 %v126, %v125
  %v155 = vpack.c.b16 %v128, %v127
  %v156 = vpack.c.b16 %v130, %v129
  %v157 = vpack.c.b16 %v132, %v131
  %v158 = vpack.c.b16 %v134, %v133
  %v159 = vpack.c.b16 %v136, %v135
  %v160 = vpack.c.b16 %v138, %v137
  %v161 = vpack.c.b16 %v140, %v139
  %v162 = vpack.c.b16 %v142, %v141
  %v163 = vpack.c.b16 %v144, %v143
  %v164 = vpack.c.b16 %v146, %v145
  %v165 = vpack.c.b16 %v148, %v147
  %v166 = vpack.c.b16 %v150, %v149
  %183 = vmatprep.subr.bf16.mxu0 0
  %184 = vmatpush1.bf16.msra.mxu0 %v158
  %185 = vmatprep.subr.bf16.mxu0 0
  %186 = vmatpush1.bf16.msra.mxu0 %v157
  %187 = vmatprep.subr.bf16.mxu0 0
  %188 = vmatpush1.bf16.msra.mxu0 %v156
  %189 = vmatprep.subr.bf16.mxu0 0
  %190 = vmatpush1.bf16.msra.mxu0 %v155
  %191 = vmatprep.subr.bf16.mxu0 0
  %192 = vmatpush1.bf16.msra.mxu0 %v154
  %193 = vmatprep.subr.bf16.mxu0 0
  %194 = vmatpush1.bf16.msra.mxu0 %v153
  %195 = vmatprep.subr.bf16.mxu0 0
  %196 = vmatpush1.bf16.msra.mxu0 %v152
  %197 = vmatprep.subr.bf16.mxu0 0
  %198 = vmatpush1.bf16.msra.mxu0 %v151
  %199 = vmatprep.subr.bf16.mxu0 0
  %200 = vmatpush2.bf16.msra.mxu0 %v166
  %201 = vmatprep.subr.bf16.mxu0 0
  %202 = vmatpush2.bf16.msra.mxu0 %v165
  %203 = vmatprep.subr.bf16.mxu0 0
  %204 = vmatpush2.bf16.msra.mxu0 %v164
  %205 = vmatprep.subr.bf16.mxu0 0
  %206 = vmatpush2.bf16.msra.mxu0 %v163
  %207 = vmatprep.subr.bf16.mxu0 0
  %208 = vmatpush2.bf16.msra.mxu0 %v162
  %209 = vmatprep.subr.bf16.mxu0 0
  %210 = vmatpush2.bf16.msra.mxu0 %v161
  %211 = vmatprep.subr.bf16.mxu0 0
  %212 = vmatpush2.bf16.msra.mxu0 %v160
  %213 = vmatprep.subr.bf16.mxu0 0
  %214 = vmatpush2.bf16.msra.mxu0 %v159
  %215 = vmatprep.mubr.bf16.mxu0 %v84
  %216 = vmatmul.mubr.bf16.gmra.mxu0 %v83
  %v217 = vpop.f32.mrf.mxu0
  %v218 = vadd.f32 %v75, %v217
  %v219 = vpop.f32.mrf.mxu0
  %v220 = vpop.f32.mrf.mxu0
  %v221 = vadd.f32 %v75, %v220
  %v222 = vpop.f32.mrf.mxu0
  %223 = vdwg.mxu0
  %v224 = vpack.c.bf16 %v221, %v218
  %v226 = vunpack.c.l.b16 %v224
  %v227 = vunpack.c.h.b16 %v224
  %v228 = vpack.c.b16 %v226, %v226
  %v229 = vpack.c.b16 %v227, %v227
  %232 = vst [vmem:[%s3] sm:$0xf] %v228
  %233 = vst [vmem:[%s3 + $0x4] sm:$0xf] %v229
  %v234 = vadd.f32 %v218, %v221
  %v235 = vrot.slane %v234, 4
  %v236 = vadd.f32 %v234, %v235
  %v237 = vrot.slane %v236, 2
  %v238 = vadd.f32 %v236, %v237
  %v239 = vrot.slane %v238, 1
  %v240 = vadd.f32 %v238, %v239
  %241 = vst [vmem:[%s28] sm:$0x1] %v240
  %v242 = vmul.f32 %v218, %v218
  %v243 = vmul.f32 %v221, %v221
  %v244 = vadd.f32 %v242, %v243
  %v245 = vrot.slane %v244, 4
  %v246 = vadd.f32 %v244, %v245
  %v247 = vrot.slane %v246, 2
  %v248 = vadd.f32 %v246, %v247
  %v249 = vrot.slane %v248, 1
  %v250 = vadd.f32 %v248, %v249
  %251 = vst [vmem:[%s33] sm:$0x1] %v250
  %s252 = sadd.s32 0, 0
  %p253 = scmp.lt.s32.totalorder %s252, 0
  %s254 = scalar_select %p253, %s252, 0
  %s255 = scalar_lea.vmem %s4, %s254
  %s256 = sadd.s32 0, 0
  %p257 = scmp.lt.s32.totalorder %s256, 0
  %s258 = scalar_select %p257, %s256, 0
  %s259 = scalar_lea.vmem %s5, %s258
  // Predicated region
  $region14: #{run_encoder.18} parent=0 // pred_check
    _
  $region15: #{run_encoder.18} parent=0 // pred_check_branch
    %261 = sbr.rel (0) target = $region17
  $region16: #{run_encoder.18} parent=0 // pred_region
    _
  $region17: #{run_encoder.18} parent=0 // pred_fallthru
    _
  // Predicated region
  $region18: #{run_encoder.18} parent=0 // pred_check
    _
  $region19: #{run_encoder.18} parent=0 // pred_check_branch
    %263 = sbr.rel (0) target = $region21
  $region20: #{run_encoder.18} parent=0 // pred_region
    %s264 = sadd.s32 0, 0
  $region21: #{run_encoder.18} parent=0 // pred_fallthru
    _
  // Predicated region
  $region22: #{run_encoder.18} parent=0 // pred_check
    _
  $region23: #{run_encoder.18} parent=0 // pred_check_branch
    %266 = sbr.rel (0) target = $region25
  $region24: #{run_encoder.18} parent=0 // pred_region
    %s267 = sadd.s32 0, 0
  $region25: #{run_encoder.18} parent=0 // pred_fallthru
    _
  // Predicated region
  $region26: #{run_encoder.18} parent=0 // pred_check
    _
  $region27: #{run_encoder.18} parent=0 // pred_check_branch
    %269 = sbr.rel (0) target = $region29
  $region28: #{run_encoder.18} parent=0 // pred_region
    _
  $region29: #{run_encoder.18} parent=0 // pred_fallthru
    _
  // Predicated region
  $region30: #{run_encoder.18} parent=0 // pred_check
    _
  $region31: #{run_encoder.18} parent=0 // pred_check_branch
    %271 = sbr.rel (0) target = $region33
  $region32: #{run_encoder.18} parent=0 // pred_region
    %s272 = sadd.s32 0, 0
    %p273 = scmp.lt.s32.totalorder %s272, 0
    %s274 = scalar_select %p273, %s272, 0
    %s275 = scalar_lea.vmem %s4, %s274
  $region33: #{run_encoder.18} parent=0 // pred_fallthru
    _
  // Predicated region
  $region34: #{run_encoder.18} parent=0 // pred_check
    _
  $region35: #{run_encoder.18} parent=0 // pred_check_branch
    %277 = sbr.rel (0) target = $region37
  $region36: #{run_encoder.18} parent=0 // pred_region
    %s278 = sadd.s32 0, 0
    %p279 = scmp.lt.s32.totalorder %s278, 0
    %s280 = scalar_select %p279, %s278, 0
    %s281 = scalar_lea.vmem %s5, %s280
  $region37: #{run_encoder.18} parent=0 // pred_fallthru
    _

// kernel: run_encoder.19
$region0: #{run_encoder.19}
  #allocation0 [shape = 'u32[]', space=smem, size = 0x4, offset = 0x4, fixed_abs, tag = 'smem constant byte address 0x4 - core index']
  #allocation1 [shape = 'u32[144,128]{1,0:T(1,128)}', space=vmem, size = 0x12000, scoped, tag = 'internal scratch']
  %s0 = inlined_call_operand.vmem [shape: bf16[1,16,128], index: 0, kind: input, shape index: {}]
  %s1 = inlined_call_operand.vmem [shape: f32[1,1,128], index: 1, kind: input, shape index: {}]
  %s2 = inlined_call_operand.vmem [shape: f32[1,1,128], index: 2, kind: input, shape index: {}]
  %s3 = inlined_call_operand.vmem [shape: bf16[1,16,128], index: 3, kind: output, shape index: {}]
  %s4 = sld [smem:[#allocation0]]
  $region22: #{run_encoder.19} parent=0
    _
  %s6 = ssub.s32 1, %s4
  %s7 = scalar_select 0, %s6, %s4
  // Predicated region
  $region2: #{run_encoder.19} parent=0 // pred_check
    _
  $region3: #{run_encoder.19} parent=0 // pred_check_branch
    %9 = sbr.rel (0) target = $region5
  $region4: #{run_encoder.19} parent=0 // pred_region
    _
  $region5: #{run_encoder.19} parent=0 // pred_fallthru
    _
  // Predicated region
  $region6: #{run_encoder.19} parent=0 // pred_check
    _
  $region7: #{run_encoder.19} parent=0 // pred_check_branch
    %11 = sbr.rel (0) target = $region9
  $region8: #{run_encoder.19} parent=0 // pred_region
    _
  $region9: #{run_encoder.19} parent=0 // pred_fallthru
    _
  // Predicated region
  $region10: #{run_encoder.19} parent=0 // pred_check
    _
  $region11: #{run_encoder.19} parent=0 // pred_check_branch
    %13 = sbr.rel (0) target = $region13
  $region12: #{run_encoder.19} parent=0 // pred_region
    _
  $region13: #{run_encoder.19} parent=0 // pred_fallthru
    _
  %v14 = vld [vmem:[%s0] sm:$0xf]
  %v15 = vld [vmem:[%s0 + $0x4] sm:$0xf]
  %v16 = vunpack.c.l.bf16 %v14
  %v17 = vunpack.c.l.bf16 %v15
  %v18 = vld [vmem:[%s1] sm:$0x1]
  %v20 = vlaneseq
  %v21 = vshrl.u32 %v20, 7
  %v22 = vsub.s32 0, %v21
  %v23 = vrot.slane %v18, %v22
  %v25 = vmul.f32 %v16, %v23
  %v26 = vmul.f32 %v17, %v23
  %v27 = vld [vmem:[%s2] sm:$0x1]
  %v29 = vlaneseq
  %v30 = vshrl.u32 %v29, 7
  %v31 = vsub.s32 0, %v30
  %v32 = vrot.slane %v27, %v31
  %v34 = vadd.f32 %v25, %v32
  %v35 = vadd.f32 %v26, %v32
  %v36 = vmax.f32 %v34, 0.0
  %v37 = vmax.f32 %v35, 0.0
  %v38 = vpack.c.bf16 %v37, %v36
  %v40 = vunpack.c.l.b16 %v38
  %v41 = vunpack.c.h.b16 %v38
  %v42 = vpack.c.b16 %v40, %v40
  %v43 = vpack.c.b16 %v41, %v41
  %46 = vst [vmem:[%s3] sm:$0xf] %v42
  %47 = vst [vmem:[%s3 + $0x4] sm:$0xf] %v43
  // Predicated region
  $region14: #{run_encoder.19} parent=0 // pred_check
    _
  $region15: #{run_encoder.19} parent=0 // pred_check_branch
    %49 = sbr.rel (0) target = $region17
  $region16: #{run_encoder.19} parent=0 // pred_region
    _
  $region17: #{run_encoder.19} parent=0 // pred_fallthru
    _
  // Predicated region
  $region18: #{run_encoder.19} parent=0 // pred_check
    _
  $region19: #{run_encoder.19} parent=0 // pred_check_branch
    %51 = sbr.rel (0) target = $region21
  $region20: #{run_encoder.19} parent=0 // pred_region
    _
  $region21: #{run_encoder.19} parent=0 // pred_fallthru
    _

// kernel: run_encoder.27
$region0: #{run_encoder.27}
  #allocation0 [shape = 'u32[]', space=smem, size = 0x4, offset = 0x4, fixed_abs, tag = 'smem constant byte address 0x4 - core index']
  #allocation1 [shape = 'u32[144,128]{1,0:T(1,128)}', space=vmem, size = 0x12000, scoped, tag = 'internal scratch']
  %s0 = inlined_call_operand.vmem [shape: bf16[1,16,128], index: 0, kind: input, shape index: {}]
  %s1 = inlined_call_operand.vmem [shape: f32[1,1,128], index: 1, kind: input, shape index: {}]
  %s2 = inlined_call_operand.vmem [shape: f32[1,1,128], index: 2, kind: input, shape index: {}]
  %s3 = inlined_call_operand.vmem [shape: bf16[1,16,128], index: 3, kind: input, shape index: {}]
  %s4 = inlined_call_operand.hbm [shape: bf16[1,16,128], index: 4, kind: output, shape index: {}]
  %s5 = sld [smem:[#allocation0]]
  $region26: #{run_encoder.27} parent=0
    _
  %s7 = ssub.s32 1, %s5
  %s8 = scalar_select 0, %s7, %s5
  $region1: #{run_encoder.27} parent=0
    #allocation2 [shape = 'u8[4096]{0}', space=vmem, size = 0x1000, scoped, tag = 'output window, operand 0, single buffered']
    #allocation3 [shape = 's32[1]{0}', space=sflag, size = 0x4, scoped, tag = 'scoped memory for run_encoder.27']
    %9 = vsyncpa [#allocation3], 0
    // Predicated region
    $region2: #{run_encoder.27} parent=1 // pred_check
      _
    $region3: #{run_encoder.27} parent=1 // pred_check_branch
      %11 = sbr.rel (0) target = $region5
    $region4: #{run_encoder.27} parent=1 // pred_region
      _
    $region5: #{run_encoder.27} parent=1 // pred_fallthru
      _
    // Predicated region
    $region6: #{run_encoder.27} parent=1 // pred_check
      _
    $region7: #{run_encoder.27} parent=1 // pred_check_branch
      %13 = sbr.rel (0) target = $region9
    $region8: #{run_encoder.27} parent=1 // pred_region
      _
    $region9: #{run_encoder.27} parent=1 // pred_fallthru
      _
    // Predicated region
    $region10: #{run_encoder.27} parent=1 // pred_check
      _
    $region11: #{run_encoder.27} parent=1 // pred_check_branch
      %15 = sbr.rel (0) target = $region13
    $region12: #{run_encoder.27} parent=1 // pred_region
      _
    $region13: #{run_encoder.27} parent=1 // pred_fallthru
      _
    // Predicated region
    $region14: #{run_encoder.27} parent=1 // pred_check
      _
    $region15: #{run_encoder.27} parent=1 // pred_check_branch
      %17 = sbr.rel (0) target = $region17
    $region16: #{run_encoder.27} parent=1 // pred_region
      _
    $region17: #{run_encoder.27} parent=1 // pred_fallthru
      _
    %v18 = vld [vmem:[%s0] sm:$0xf]
    %v19 = vld [vmem:[%s0 + $0x4] sm:$0xf]
    %v20 = vunpack.c.l.bf16 %v18
    %v21 = vunpack.c.l.bf16 %v19
    %v22 = vld [vmem:[%s1] sm:$0x1]
    %v24 = vlaneseq
    %v25 = vshrl.u32 %v24, 7
    %v26 = vsub.s32 0, %v25
    %v27 = vrot.slane %v22, %v26
    %v29 = vmul.f32 %v20, %v27
    %v30 = vmul.f32 %v21, %v27
    %v31 = vld [vmem:[%s2] sm:$0x1]
    %v33 = vlaneseq
    %v34 = vshrl.u32 %v33, 7
    %v35 = vsub.s32 0, %v34
    %v36 = vrot.slane %v31, %v35
    %v38 = vadd.f32 %v29, %v36
    %v39 = vadd.f32 %v30, %v36
    %v40 = vld [vmem:[%s3] sm:$0xf]
    %v41 = vld [vmem:[%s3 + $0x4] sm:$0xf]
    %v42 = vunpack.c.l.bf16 %v40
    %v43 = vunpack.c.l.bf16 %v41
    %v44 = vadd.f32 %v38, %v42
    %v45 = vadd.f32 %v39, %v43
    %v46 = vpack.c.bf16 %v45, %v44
    %v48 = vunpack.c.l.b16 %v46
    %v49 = vunpack.c.h.b16 %v46
    %v50 = vpack.c.b16 %v48, %v48
    %v51 = vpack.c.b16 %v49, %v49
    %54 = vst [vmem:[#allocation2] sm:$0xf] %v50
    %55 = vst [vmem:[#allocation2 + $0x4] sm:$0xf] %v51
    // Predicated region
    $region18: #{run_encoder.27} parent=1 // pred_check
      _
    $region19: #{run_encoder.27} parent=1 // pred_check_branch
      %57 = sbr.rel (0) target = $region21
    $region20: #{run_encoder.27} parent=1 // pred_region
      %s59 = ssub.s32 128, 128
      %60 = vsyncadd [#allocation3], %s59
      %s61 = sshll.u32 [#allocation2], 4
      %s62 = int_to_ptr.vmem [resolvable:$true] %s61
      %67 = dma.vmem_to_hbm [thread:$0]  %s62, 128, %s4, [#allocation3], 64, 64, 4
    $region21: #{run_encoder.27} parent=1 // pred_fallthru
      _
    // Predicated region
    $region22: #{run_encoder.27} parent=1 // pred_check
      _
    $region23: #{run_encoder.27} parent=1 // pred_check_branch
      %69 = sbr.rel (0) target = $region25
    $region24: #{run_encoder.27} parent=1 // pred_region
      %70 = dma.done [#allocation3], 128
    $region25: #{run_encoder.27} parent=1 // pred_fallthru
      _
    %71 = vsyncpa [#allocation3], 1

// kernel: run_encoder.23
$region0: #{run_encoder.23}
  #allocation0 [shape = 'u32[]', space=smem, size = 0x4, offset = 0x4, fixed_abs, tag = 'smem constant byte address 0x4 - core index']
  #allocation1 [shape = 'u32[144,128]{1,0:T(1,128)}', space=vmem, size = 0x12000, scoped, tag = 'internal scratch']
  %s0 = inlined_call_operand.vmem [shape: bf16[1,16,128], index: 0, kind: input, shape index: {}]
  %s1 = inlined_call_operand.vmem [shape: f32[1,1,128], index: 1, kind: input, shape index: {}]
  %s2 = inlined_call_operand.vmem [shape: f32[1,1,128], index: 2, kind: input, shape index: {}]
  %s3 = inlined_call_operand.vmem [shape: bf16[1,16,128], index: 3, kind: input, shape index: {}]
  %s4 = inlined_call_operand.vmem [shape: bf16[1,16,128], index: 4, kind: output, shape index: {}]
  %s5 = sld [smem:[#allocation0]]
  $region26: #{run_encoder.23} parent=0
    _
  %s7 = ssub.s32 1, %s5
  %s8 = scalar_select 0, %s7, %s5
  // Predicated region
  $region2: #{run_encoder.23} parent=0 // pred_check
    _
  $region3: #{run_encoder.23} parent=0 // pred_check_branch
    %10 = sbr.rel (0) target = $region5
  $region4: #{run_encoder.23} parent=0 // pred_region
    _
  $region5: #{run_encoder.23} parent=0 // pred_fallthru
    _
  // Predicated region
  $region6: #{run_encoder.23} parent=0 // pred_check
    _
  $region7: #{run_encoder.23} parent=0 // pred_check_branch
    %12 = sbr.rel (0) target = $region9
  $region8: #{run_encoder.23} parent=0 // pred_region
    _
  $region9: #{run_encoder.23} parent=0 // pred_fallthru
    _
  // Predicated region
  $region10: #{run_encoder.23} parent=0 // pred_check
    _
  $region11: #{run_encoder.23} parent=0 // pred_check_branch
    %14 = sbr.rel (0) target = $region13
  $region12: #{run_encoder.23} parent=0 // pred_region
    _
  $region13: #{run_encoder.23} parent=0 // pred_fallthru
    _
  // Predicated region
  $region14: #{run_encoder.23} parent=0 // pred_check
    _
  $region15: #{run_encoder.23} parent=0 // pred_check_branch
    %16 = sbr.rel (0) target = $region17
  $region16: #{run_encoder.23} parent=0 // pred_region
    _
  $region17: #{run_encoder.23} parent=0 // pred_fallthru
    _
  %v17 = vld [vmem:[%s0] sm:$0xf]
  %v18 = vld [vmem:[%s0 + $0x4] sm:$0xf]
  %v19 = vunpack.c.l.bf16 %v17
  %v20 = vunpack.c.l.bf16 %v18
  %v21 = vld [vmem:[%s1] sm:$0x1]
  %v23 = vlaneseq
  %v24 = vshrl.u32 %v23, 7
  %v25 = vsub.s32 0, %v24
  %v26 = vrot.slane %v21, %v25
  %v28 = vmul.f32 %v19, %v26
  %v29 = vmul.f32 %v20, %v26
  %v30 = vld [vmem:[%s2] sm:$0x1]
  %v32 = vlaneseq
  %v33 = vshrl.u32 %v32, 7
  %v34 = vsub.s32 0, %v33
  %v35 = vrot.slane %v30, %v34
  %v37 = vadd.f32 %v28, %v35
  %v38 = vadd.f32 %v29, %v35
  %v39 = vld [vmem:[%s3] sm:$0xf]
  %v40 = vld [vmem:[%s3 + $0x4] sm:$0xf]
  %v41 = vunpack.c.l.bf16 %v39
  %v42 = vunpack.c.l.bf16 %v40
  %v43 = vadd.f32 %v37, %v41
  %v44 = vadd.f32 %v38, %v42
  %v45 = vpack.c.bf16 %v44, %v43
  %v47 = vunpack.c.l.b16 %v45
  %v48 = vunpack.c.h.b16 %v45
  %v49 = vpack.c.b16 %v47, %v47
  %v50 = vpack.c.b16 %v48, %v48
  %53 = vst [vmem:[%s4] sm:$0xf] %v49
  %54 = vst [vmem:[%s4 + $0x4] sm:$0xf] %v50
  // Predicated region
  $region18: #{run_encoder.23} parent=0 // pred_check
    _
  $region19: #{run_encoder.23} parent=0 // pred_check_branch
    %56 = sbr.rel (0) target = $region21
  $region20: #{run_encoder.23} parent=0 // pred_region
    _
  $region21: #{run_encoder.23} parent=0 // pred_fallthru
    _
  // Predicated region
  $region22: #{run_encoder.23} parent=0 // pred_check
    _
  $region23: #{run_encoder.23} parent=0 // pred_check_branch
    %58 = sbr.rel (0) target = $region25
  $region24: #{run_encoder.23} parent=0 // pred_region
    _
  $region25: #{run_encoder.23} parent=0 // pred_fallthru
    _

// kernel: run_encoder.20
$region0: #{run_encoder.20}
  #allocation0 [shape = 'u32[]', space=smem, size = 0x4, offset = 0x4, fixed_abs, tag = 'smem constant byte address 0x4 - core index']
  #allocation1 [shape = 'u32[144,128]{1,0:T(1,128)}', space=vmem, size = 0x12000, scoped, tag = 'internal scratch']
  %s0 = inlined_call_operand.vmem [shape: bf16[1,16,384], index: 0, kind: input, shape index: {}]
  %s1 = inlined_call_operand.vmem [shape: bf16[384,128], index: 1, kind: input, shape index: {}]
  %s2 = inlined_call_operand.vmem [shape: f32[1,128], index: 2, kind: input, shape index: {}]
  %s3 = inlined_call_operand.vmem [shape: bf16[1,16,128], index: 3, kind: output, shape index: {0}]
  %s4 = inlined_call_operand.vmem [shape: f32[1,1,128], index: 4, kind: output, shape index: {1}]
  %s5 = inlined_call_operand.vmem [shape: f32[1,1,128], index: 5, kind: output, shape index: {2}]
  %6 = xla_tuple %s3, %s4, %s5
  %s7 = sld [smem:[#allocation0]]
  $region38: #{run_encoder.20} parent=0
    _
  %s9 = ssub.s32 1, %s7
  %s10 = scalar_select 0, %s9, %s7
  // Predicated region
  $region2: #{run_encoder.20} parent=0 // pred_check
    _
  $region3: #{run_encoder.20} parent=0 // pred_check_branch
    %12 = sbr.rel (0) target = $region5
  $region4: #{run_encoder.20} parent=0 // pred_region
    _
  $region5: #{run_encoder.20} parent=0 // pred_fallthru
    _
  // Predicated region
  $region6: #{run_encoder.20} parent=0 // pred_check
    _
  $region7: #{run_encoder.20} parent=0 // pred_check_branch
    %14 = sbr.rel (0) target = $region9
  $region8: #{run_encoder.20} parent=0 // pred_region
    _
  $region9: #{run_encoder.20} parent=0 // pred_fallthru
    _
  // Predicated region
  $region10: #{run_encoder.20} parent=0 // pred_check
    _
  $region11: #{run_encoder.20} parent=0 // pred_check_branch
    %16 = sbr.rel (0) target = $region13
  $region12: #{run_encoder.20} parent=0 // pred_region
    _
  $region13: #{run_encoder.20} parent=0 // pred_fallthru
    _
  %s17 = sadd.s32 0, 0
  %p18 = scmp.lt.s32.totalorder %s17, 0
  %s19 = scalar_select %p18, %s17, 0
  %s20 = scalar_lea.vmem %s4, %s19
  %s21 = sadd.s32 0, 0
  %p22 = scmp.lt.s32.totalorder %s21, 0
  %s23 = scalar_select %p22, %s21, 0
  %s24 = scalar_lea.vmem %s5, %s23
  %s25 = sadd.s32 0, 0
  %p26 = scmp.lt.s32.totalorder %s25, 0
  %s27 = scalar_select %p26, %s25, 0
  %s28 = scalar_lea.vmem %s4, %s27
  %s29 = sadd.s32 0, 0
  %s30 = sadd.s32 0, 0
  %p31 = scmp.lt.s32.totalorder %s30, 0
  %s32 = scalar_select %p31, %s30, 0
  %s33 = scalar_lea.vmem %s5, %s32
  %s34 = sadd.s32 0, 0
  %v36 = vld [vmem:[%s0] sm:$0xff]
  %v37 = vld [vmem:[%s0 + $0x8] sm:$0xf]
  %v38 = vld [vmem:[%s0 + $0xc] sm:$0xff]
  %v39 = vld [vmem:[%s0 + $0x14] sm:$0xf]
  %v40 = vld [vmem:[%s1] sm:$0xf]
  %v41 = vld [vmem:[%s1 + $0x4] sm:$0xf]
  %v42 = vld [vmem:[%s1 + $0x8] sm:$0xf]
  %v43 = vld [vmem:[%s1 + $0xc] sm:$0xf]
  %v44 = vld [vmem:[%s1 + $0x10] sm:$0xf]
  %v45 = vld [vmem:[%s1 + $0x14] sm:$0xf]
  %v46 = vld [vmem:[%s1 + $0x18] sm:$0xf]
  %v47 = vld [vmem:[%s1 + $0x1c] sm:$0xf]
  %v48 = vld [vmem:[%s1 + $0x20] sm:$0xf]
  %v49 = vld [vmem:[%s1 + $0x24] sm:$0xf]
  %v50 = vld [vmem:[%s1 + $0x28] sm:$0xf]
  %v51 = vld [vmem:[%s1 + $0x2c] sm:$0xf]
  %v52 = vld [vmem:[%s1 + $0x30] sm:$0xf]
  %v53 = vld [vmem:[%s1 + $0x34] sm:$0xf]
  %v54 = vld [vmem:[%s1 + $0x38] sm:$0xf]
  %v55 = vld [vmem:[%s1 + $0x3c] sm:$0xf]
  %v56 = vld [vmem:[%s1 + $0x40] sm:$0xf]
  %v57 = vld [vmem:[%s1 + $0x44] sm:$0xf]
  %v58 = vld [vmem:[%s1 + $0x48] sm:$0xf]
  %v59 = vld [vmem:[%s1 + $0x4c] sm:$0xf]
  %v60 = vld [vmem:[%s1 + $0x50] sm:$0xf]
  %v61 = vld [vmem:[%s1 + $0x54] sm:$0xf]
  %v62 = vld [vmem:[%s1 + $0x58] sm:$0xf]
  %v63 = vld [vmem:[%s1 + $0x5c] sm:$0xf]
  %v64 = vld [vmem:[%s1 + $0x60] sm:$0xf]
  %v65 = vld [vmem:[%s1 + $0x64] sm:$0xf]
  %v66 = vld [vmem:[%s1 + $0x68] sm:$0xf]
  %v67 = vld [vmem:[%s1 + $0x6c] sm:$0xf]
  %v68 = vld [vmem:[%s1 + $0x70] sm:$0xf]
  %v69 = vld [vmem:[%s1 + $0x74] sm:$0xf]
  %v70 = vld [vmem:[%s1 + $0x78] sm:$0xf]
  %v71 = vld [vmem:[%s1 + $0x7c] sm:$0xf]
  %v72 = vld [vmem:[%s1 + $0x80] sm:$0xf]
  %v73 = vld [vmem:[%s1 + $0x84] sm:$0xf]
  %v74 = vld [vmem:[%s1 + $0x88] sm:$0xf]
  %v75 = vld [vmem:[%s1 + $0x8c] sm:$0xf]
  %v76 = vld [vmem:[%s1 + $0x90] sm:$0xf]
  %v77 = vld [vmem:[%s1 + $0x94] sm:$0xf]
  %v78 = vld [vmem:[%s1 + $0x98] sm:$0xf]
  %v79 = vld [vmem:[%s1 + $0x9c] sm:$0xf]
  %v80 = vld [vmem:[%s1 + $0xa0] sm:$0xf]
  %v81 = vld [vmem:[%s1 + $0xa4] sm:$0xf]
  %v82 = vld [vmem:[%s1 + $0xa8] sm:$0xf]
  %v83 = vld [vmem:[%s1 + $0xac] sm:$0xf]
  %v84 = vld [vmem:[%s1 + $0xb0] sm:$0xf]
  %v85 = vld [vmem:[%s1 + $0xb4] sm:$0xf]
  %v86 = vld [vmem:[%s1 + $0xb8] sm:$0xf]
  %v87 = vld [vmem:[%s1 + $0xbc] sm:$0xf]
  %v88 = vld [vmem:[%s2] sm:$0x1]
  %v90 = vlaneseq
  %v91 = vshrl.u32 %v90, 7
  %v92 = vsub.s32 0, %v91
  %v93 = vrot.slane %v88, %v92
  %v99 = vunpack.c.l.b16 %v36
  %v100 = vunpack.c.h.b16 %v36
  %v101 = vunpack.c.l.b16 %v37
  %v102 = vunpack.c.l.b16 %v38
  %v103 = vunpack.c.h.b16 %v38
  %v104 = vunpack.c.l.b16 %v39
  %v105 = vpack.c.b16 %v102, %v99
  %v106 = vpack.c.b16 %v103, %v100
  %v107 = vpack.c.b16 %v104, %v101
  %v159 = vunpack.c.l.b16 %v40
  %v160 = vunpack.c.l.b16 %v41
  %v161 = vunpack.c.l.b16 %v42
  %v162 = vunpack.c.l.b16 %v43
  %v163 = vunpack.c.l.b16 %v44
  %v164 = vunpack.c.l.b16 %v45
  %v165 = vunpack.c.l.b16 %v46
  %v166 = vunpack.c.l.b16 %v47
  %v167 = vunpack.c.l.b16 %v48
  %v168 = vunpack.c.l.b16 %v49
  %v169 = vunpack.c.l.b16 %v50
  %v170 = vunpack.c.l.b16 %v51
  %v171 = vunpack.c.l.b16 %v52
  %v172 = vunpack.c.l.b16 %v53
  %v173 = vunpack.c.l.b16 %v54
  %v174 = vunpack.c.l.b16 %v55
  %v175 = vunpack.c.l.b16 %v56
  %v176 = vunpack.c.l.b16 %v57
  %v177 = vunpack.c.l.b16 %v58
  %v178 = vunpack.c.l.b16 %v59
  %v179 = vunpack.c.l.b16 %v60
  %v180 = vunpack.c.l.b16 %v61
  %v181 = vunpack.c.l.b16 %v62
  %v182 = vunpack.c.l.b16 %v63
  %v183 = vunpack.c.l.b16 %v64
  %v184 = vunpack.c.l.b16 %v65
  %v185 = vunpack.c.l.b16 %v66
  %v186 = vunpack.c.l.b16 %v67
  %v187 = vunpack.c.l.b16 %v68
  %v188 = vunpack.c.l.b16 %v69
  %v189 = vunpack.c.l.b16 %v70
  %v190 = vunpack.c.l.b16 %v71
  %v191 = vunpack.c.l.b16 %v72
  %v192 = vunpack.c.l.b16 %v73
  %v193 = vunpack.c.l.b16 %v74
  %v194 = vunpack.c.l.b16 %v75
  %v195 = vunpack.c.l.b16 %v76
  %v196 = vunpack.c.l.b16 %v77
  %v197 = vunpack.c.l.b16 %v78
  %v198 = vunpack.c.l.b16 %v79
  %v199 = vunpack.c.l.b16 %v80
  %v200 = vunpack.c.l.b16 %v81
  %v201 = vunpack.c.l.b16 %v82
  %v202 = vunpack.c.l.b16 %v83
  %v203 = vunpack.c.l.b16 %v84
  %v204 = vunpack.c.l.b16 %v85
  %v205 = vunpack.c.l.b16 %v86
  %v206 = vunpack.c.l.b16 %v87
  %v207 = vpack.c.b16 %v160, %v159
  %v208 = vpack.c.b16 %v162, %v161
  %v209 = vpack.c.b16 %v164, %v163
  %v210 = vpack.c.b16 %v166, %v165
  %v211 = vpack.c.b16 %v168, %v167
  %v212 = vpack.c.b16 %v170, %v169
  %v213 = vpack.c.b16 %v172, %v171
  %v214 = vpack.c.b16 %v174, %v173
  %v215 = vpack.c.b16 %v176, %v175
  %v216 = vpack.c.b16 %v178, %v177
  %v217 = vpack.c.b16 %v180, %v179
  %v218 = vpack.c.b16 %v182, %v181
  %v219 = vpack.c.b16 %v184, %v183
  %v220 = vpack.c.b16 %v186, %v185
  %v221 = vpack.c.b16 %v188, %v187
  %v222 = vpack.c.b16 %v190, %v189
  %v223 = vpack.c.b16 %v192, %v191
  %v224 = vpack.c.b16 %v194, %v193
  %v225 = vpack.c.b16 %v196, %v195
  %v226 = vpack.c.b16 %v198, %v197
  %v227 = vpack.c.b16 %v200, %v199
  %v228 = vpack.c.b16 %v202, %v201
  %v229 = vpack.c.b16 %v204, %v203
  %v230 = vpack.c.b16 %v206, %v205
  %255 = vmatprep.subr.bf16.mxu0 0
  %256 = vmatpush1.bf16.msra.mxu0 %v214
  %257 = vmatprep.subr.bf16.mxu0 0
  %258 = vmatpush1.bf16.msra.mxu0 %v213
  %259 = vmatprep.subr.bf16.mxu0 0
  %260 = vmatpush1.bf16.msra.mxu0 %v212
  %261 = vmatprep.subr.bf16.mxu0 0
  %262 = vmatpush1.bf16.msra.mxu0 %v211
  %263 = vmatprep.subr.bf16.mxu0 0
  %264 = vmatpush1.bf16.msra.mxu0 %v210
  %265 = vmatprep.subr.bf16.mxu0 0
  %266 = vmatpush1.bf16.msra.mxu0 %v209
  %267 = vmatprep.subr.bf16.mxu0 0
  %268 = vmatpush1.bf16.msra.mxu0 %v208
  %269 = vmatprep.subr.bf16.mxu0 0
  %270 = vmatpush1.bf16.msra.mxu0 %v207
  %271 = vmatprep.subr.bf16.mxu0 0
  %272 = vmatpush2.bf16.msra.mxu0 %v222
  %273 = vmatprep.subr.bf16.mxu0 0
  %274 = vmatpush2.bf16.msra.mxu0 %v221
  %275 = vmatprep.subr.bf16.mxu0 0
  %276 = vmatpush2.bf16.msra.mxu0 %v220
  %277 = vmatprep.subr.bf16.mxu0 0
  %278 = vmatpush2.bf16.msra.mxu0 %v219
  %279 = vmatprep.subr.bf16.mxu0 0
  %280 = vmatpush2.bf16.msra.mxu0 %v218
  %281 = vmatprep.subr.bf16.mxu0 0
  %282 = vmatpush2.bf16.msra.mxu0 %v217
  %283 = vmatprep.subr.bf16.mxu0 0
  %284 = vmatpush2.bf16.msra.mxu0 %v216
  %285 = vmatprep.subr.bf16.mxu0 0
  %286 = vmatpush2.bf16.msra.mxu0 %v215
  %287 = vmatprep.mubr.bf16.mxu0 %v106
  %288 = vmatmul.mubr.bf16.gmra.mxu0 %v105
  %v289 = vpop.f32.mrf.mxu0
  %v290 = vadd.f32 %v93, %v289
  %v291 = vpop.f32.mrf.mxu0
  %v292 = vpop.f32.mrf.mxu0
  %v293 = vadd.f32 %v93, %v292
  %v294 = vpop.f32.mrf.mxu0
  %295 = vdwg.mxu0
  %296 = vmatprep.subr.bf16.mxu0 0
  %297 = vmatpush1.bf16.msra.mxu0 %v230
  %298 = vmatprep.subr.bf16.mxu0 0
  %299 = vmatpush1.bf16.msra.mxu0 %v229
  %300 = vmatprep.subr.bf16.mxu0 0
  %301 = vmatpush1.bf16.msra.mxu0 %v228
  %302 = vmatprep.subr.bf16.mxu0 0
  %303 = vmatpush1.bf16.msra.mxu0 %v227
  %304 = vmatprep.subr.bf16.mxu0 0
  %305 = vmatpush1.bf16.msra.mxu0 %v226
  %306 = vmatprep.subr.bf16.mxu0 0
  %307 = vmatpush1.bf16.msra.mxu0 %v225
  %308 = vmatprep.subr.bf16.mxu0 0
  %309 = vmatpush1.bf16.msra.mxu0 %v224
  %310 = vmatprep.subr.bf16.mxu0 0
  %311 = vmatpush1.bf16.msra.mxu0 %v223
  %312 = vmatprep.subr.bf16.mxu0 0
  %313 = vmatpush2.bf16.msra.mxu0 0
  %314 = vmatprep.subr.bf16.mxu0 0
  %315 = vmatpush2.bf16.msra.mxu0 0
  %316 = vmatprep.subr.bf16.mxu0 0
  %317 = vmatpush2.bf16.msra.mxu0 0
  %318 = vmatprep.subr.bf16.mxu0 0
  %319 = vmatpush2.bf16.msra.mxu0 0
  %320 = vmatprep.subr.bf16.mxu0 0
  %321 = vmatpush2.bf16.msra.mxu0 0
  %322 = vmatprep.subr.bf16.mxu0 0
  %323 = vmatpush2.bf16.msra.mxu0 0
  %324 = vmatprep.subr.bf16.mxu0 0
  %325 = vmatpush2.bf16.msra.mxu0 0
  %326 = vmatprep.subr.bf16.mxu0 0
  %327 = vmatpush2.bf16.msra.mxu0 0
  %328 = vmatprep.mubr.bf16.mxu0 0
  %329 = vmatmul.mubr.bf16.gmra.mxu0 %v107
  %v330 = vpop.f32.mrf.mxu0
  %v331 = vadd.f32 %v290, %v330
  %v332 = vpop.f32.mrf.mxu0
  %v333 = vpop.f32.mrf.mxu0
  %v334 = vadd.f32 %v293, %v333
  %v335 = vpop.f32.mrf.mxu0
  %336 = vdwg.mxu0
  %v337 = vpack.c.bf16 %v334, %v331
  %v339 = vunpack.c.l.b16 %v337
  %v340 = vunpack.c.h.b16 %v337
  %v341 = vpack.c.b16 %v339, %v339
  %v342 = vpack.c.b16 %v340, %v340
  %345 = vst [vmem:[%s3] sm:$0xf] %v341
  %346 = vst [vmem:[%s3 + $0x4] sm:$0xf] %v342
  %v347 = vadd.f32 %v331, %v334
  %v348 = vrot.slane %v347, 4
  %v349 = vadd.f32 %v347, %v348
  %v350 = vrot.slane %v349, 2
  %v351 = vadd.f32 %v349, %v350
  %v352 = vrot.slane %v351, 1
  %v353 = vadd.f32 %v351, %v352
  %354 = vst [vmem:[%s28] sm:$0x1] %v353
  %v355 = vmul.f32 %v331, %v331
  %v356 = vmul.f32 %v334, %v334
  %v357 = vadd.f32 %v355, %v356
  %v358 = vrot.slane %v357, 4
  %v359 = vadd.f32 %v357, %v358
  %v360 = vrot.slane %v359, 2
  %v361 = vadd.f32 %v359, %v360
  %v362 = vrot.slane %v361, 1
  %v363 = vadd.f32 %v361, %v362
  %364 = vst [vmem:[%s33] sm:$0x1] %v363
  %s365 = sadd.s32 0, 0
  %p366 = scmp.lt.s32.totalorder %s365, 0
  %s367 = scalar_select %p366, %s365, 0
  %s368 = scalar_lea.vmem %s4, %s367
  %s369 = sadd.s32 0, 0
  %p370 = scmp.lt.s32.totalorder %s369, 0
  %s371 = scalar_select %p370, %s369, 0
  %s372 = scalar_lea.vmem %s5, %s371
  // Predicated region
  $region14: #{run_encoder.20} parent=0 // pred_check
    _
  $region15: #{run_encoder.20} parent=0 // pred_check_branch
    %374 = sbr.rel (0) target = $region17
  $region16: #{run_encoder.20} parent=0 // pred_region
    _
  $region17: #{run_encoder.20} parent=0 // pred_fallthru
    _
  // Predicated region
  $region18: #{run_encoder.20} parent=0 // pred_check
    _
  $region19: #{run_encoder.20} parent=0 // pred_check_branch
    %376 = sbr.rel (0) target = $region21
  $region20: #{run_encoder.20} parent=0 // pred_region
    %s377 = sadd.s32 0, 0
  $region21: #{run_encoder.20} parent=0 // pred_fallthru
    _
  // Predicated region
  $region22: #{run_encoder.20} parent=0 // pred_check
    _
  $region23: #{run_encoder.20} parent=0 // pred_check_branch
    %379 = sbr.rel (0) target = $region25
  $region24: #{run_encoder.20} parent=0 // pred_region
    %s380 = sadd.s32 0, 0
  $region25: #{run_encoder.20} parent=0 // pred_fallthru
    _
  // Predicated region
  $region26: #{run_encoder.20} parent=0 // pred_check
    _
  $region27: #{run_encoder.20} parent=0 // pred_check_branch
    %382 = sbr.rel (0) target = $region29
  $region28: #{run_encoder.20} parent=0 // pred_region
    _
  $region29: #{run_encoder.20} parent=0 // pred_fallthru
    _
  // Predicated region
  $region30: #{run_encoder.20} parent=0 // pred_check
    _
  $region31: #{run_encoder.20} parent=0 // pred_check_branch
    %384 = sbr.rel (0) target = $region33
  $region32: #{run_encoder.20} parent=0 // pred_region
    %s385 = sadd.s32 0, 0
    %p386 = scmp.lt.s32.totalorder %s385, 0
    %s387 = scalar_select %p386, %s385, 0
    %s388 = scalar_lea.vmem %s4, %s387
  $region33: #{run_encoder.20} parent=0 // pred_fallthru
    _
  // Predicated region
  $region34: #{run_encoder.20} parent=0 // pred_check
    _
  $region35: #{run_encoder.20} parent=0 // pred_check_branch
    %390 = sbr.rel (0) target = $region37
  $region36: #{run_encoder.20} parent=0 // pred_region
    %s391 = sadd.s32 0, 0
    %p392 = scmp.lt.s32.totalorder %s391, 0
    %s393 = scalar_select %p392, %s391, 0
    %s394 = scalar_lea.vmem %s5, %s393
  $region37: #{run_encoder.20} parent=0 // pred_fallthru
    _

</llo_original>
